<compile_context>
chip_gen: v7x
topology: tpu7x:2x2x1
jax: 0.10.0
libtpu: 0.0.40
codegen_flags: <defaults>
</compile_context>

<pallas_src>
import functools
import math

import jax
import jax.numpy as jnp
from jax.experimental import pallas as pl
from jax.experimental.pallas import tpu as pltpu


# ---------------------------------------------------------------------------
# helpers
# ---------------------------------------------------------------------------
def _lane_pad(n):
    """Round a feature dim up to a multiple of 128 (lane-dense layout)."""
    return max(128, ((n + 127) // 128) * 128)


def _sublane_pad(n):
    """Round a row/contraction dim up to a multiple of 8 (sublane tiling)."""
    return ((n + 7) // 8) * 8


def _choose_seq_block(batch, seq_len):
    """Sequences per grid step.

    Target >=256 rows per block (MXU fill, amortize per-step overhead), but
    keep >=2 grid steps whenever batch allows so both v7x TensorCores get work.
    """
    target = max(1, pl.cdiv(256, seq_len))
    sb = min(batch, target)
    while batch % sb:
        sb -= 1
    if batch >= 2 and batch // sb < 2:
        sb = max(1, batch // 2)
        while batch % sb:
            sb -= 1
    return sb


def sinusoidal_pe(max_len, d_model):
    pos = jnp.arange(max_len, dtype=jnp.float32)[:, None]
    div = jnp.exp(jnp.arange(0, d_model, 2, dtype=jnp.float32)
                  * (-math.log(10000.0) / d_model))
    pe = jnp.zeros((max_len, d_model), jnp.float32)
    pe = pe.at[:, 0::2].set(jnp.sin(pos * div))
    pe = pe.at[:, 1::2].set(jnp.cos(pos * div))
    return pe


# ---------------------------------------------------------------------------
# The fused whole-model kernel (one grid step = a block of whole sequences)
# ---------------------------------------------------------------------------
def fused_transformer_kernel(ids_ref, pe_ref, embed_ref,
                             ln_g_ref, ln_b_ref,
                             wqkv_ref, bqkv_ref, wo_ref, bo_ref,
                             w1_ref, b1_ref, w2_ref, b2_ref,
                             fc_w_ref, fc_b_ref, out_ref,
                             *, d_model, n_heads, n_layers, seq_len,
                             seq_block, hp, vocab_pad, emb_scale):
    d_head = d_model // n_heads
    rows = seq_block * seq_len
    dp = pe_ref.shape[-1]
    vp = fc_b_ref.shape[-1]

    # Column mask: LayerNorm statistics only see the real d_model lanes.
    # Residual-stream lanes >= d_model stay exactly zero end to end (all
    # weight columns / biases / gammas beyond d_model are zero-padded).
    col = jax.lax.broadcasted_iota(jnp.int32, (1, dp), 1)
    col_mask = (col < d_model).astype(jnp.float32)
    inv_d = 1.0 / d_model

    def layernorm(x, row, eps=1e-5):
        g = ln_g_ref[row:row + 1, :]
        b = ln_b_ref[row:row + 1, :]
        mean = jnp.sum(x * col_mask, axis=-1, keepdims=True) * inv_d
        cen = (x - mean) * col_mask
        var = jnp.sum(cen * cen, axis=-1, keepdims=True) * inv_d
        return cen * jax.lax.rsqrt(var + eps) * g + b

    # ---- src_embed: one-hot token gather on the MXU * sqrt(d_model) + PE ----
    ids = ids_ref[...]                                            # [rows, 1] i32
    vcol = jax.lax.broadcasted_iota(jnp.int32, (rows, vocab_pad), 1)
    onehot = jnp.where(vcol == ids, 1.0, 0.0).astype(jnp.bfloat16)
    x = (jnp.dot(onehot, embed_ref[...], preferred_element_type=jnp.float32)
         * emb_scale + pe_ref[...])                               # [rows, dp] f32

    # Causal ("subsequent") additive mask for one sequence.
    qi = jax.lax.broadcasted_iota(jnp.int32, (seq_len, seq_len), 0)
    kj = jax.lax.broadcasted_iota(jnp.int32, (seq_len, seq_len), 1)
    neg = jnp.where(kj <= qi, 0.0, -1e30)

    for l in range(n_layers):                                     # trace-time unroll
        # -------- attention sublayer (pre-norm, residual) --------
        y = layernorm(x, 2 * l).astype(jnp.bfloat16)
        # Fused Q/K/V projection over ALL rows of the block (one weight load,
        # wide N).  Softmax scale is folded into wq at init.
        qkv = (jnp.dot(y, wqkv_ref[l], preferred_element_type=jnp.float32)
               + bqkv_ref[l:l + 1, :])                            # [rows, 3*hp]

        seq_outs = []
        for j in range(seq_block):                                # per-sequence scores
            r0 = j * seq_len
            head_outs = []
            for h in range(n_heads):
                c0 = h * d_head
                qh = qkv[r0:r0 + seq_len, c0:c0 + d_head].astype(jnp.bfloat16)
                kh = qkv[r0:r0 + seq_len,
                         hp + c0:hp + c0 + d_head].astype(jnp.bfloat16)
                vh = qkv[r0:r0 + seq_len,
                         2 * hp + c0:2 * hp + c0 + d_head].astype(jnp.bfloat16)
                s = jax.lax.dot_general(qh, kh, (((1,), (1,)), ((), ())),
                                        preferred_element_type=jnp.float32) + neg
                m = jnp.max(s, axis=-1, keepdims=True)
                e = jnp.exp(s - m)                 # masked entries underflow to 0
                p = (e * pl.reciprocal(jnp.sum(e, axis=-1, keepdims=True),
                                       approx=True)).astype(jnp.bfloat16)
                head_outs.append(jnp.dot(p, vh,
                                         preferred_element_type=jnp.float32))
            seq_outs.append(jnp.concatenate(head_outs, axis=-1))  # [S, H*dh]
        a = jnp.concatenate(seq_outs, axis=0).astype(jnp.bfloat16)  # [rows, H*dh]

        # Output projection over all rows at once (fills MXU M dim) + residual.
        x = (x + jnp.dot(a, wo_ref[l], preferred_element_type=jnp.float32)
             + bo_ref[l:l + 1, :])

        # -------- feed-forward sublayer (pre-norm, residual) --------
        y = layernorm(x, 2 * l + 1).astype(jnp.bfloat16)
        h1 = (jnp.dot(y, w1_ref[l], preferred_element_type=jnp.float32)
              + b1_ref[l:l + 1, :])
        h1 = jnp.maximum(h1, 0.0).astype(jnp.bfloat16)
        x = (x + jnp.dot(h1, w2_ref[l], preferred_element_type=jnp.float32)
             + b2_ref[l:l + 1, :])

    # -------- final LayerNorm + fc logits --------
    y = layernorm(x, 2 * n_layers).astype(jnp.bfloat16)
    logits = (jnp.dot(y, fc_w_ref[...], preferred_element_type=jnp.float32)
              + fc_b_ref[...])                                    # [rows, vp] f32

    # Store sequence-major: out[s, b*vp:(b+1)*vp] = logits row (b, s), so the
    # host-side [S, B, vp] view is a pure reshape (no transpose pass).
    for j in range(seq_block):
        out_ref[:, j * vp:(j + 1) * vp] = logits[j * seq_len:(j + 1) * seq_len, :]


# ---------------------------------------------------------------------------
# pallas_call wrapper (the whole forward pass = one kernel dispatch)
# ---------------------------------------------------------------------------
def transformer_forward(src, params, *, d_model, n_heads, n_tokens, n_layers):
    seq_len, batch = src.shape
    dp = params["pe"].shape[-1]
    vp = params["fc_w"].shape[-1]
    hp = params["wqkv"].shape[-1] // 3
    vocab_pad = params["embed"].shape[0]

    sb = _choose_seq_block(batch, seq_len)
    nb = batch // sb
    rows_blk = sb * seq_len

    # Batch-major token-id rows and per-row positional encodings (tiny XLA ops).
    ids = src.T.reshape(batch * seq_len, 1).astype(jnp.int32)
    pe_tiled = jnp.tile(params["pe"][:seq_len], (batch, 1))

    kern = functools.partial(
        fused_transformer_kernel,
        d_model=d_model, n_heads=n_heads, n_layers=n_layers, seq_len=seq_len,
        seq_block=sb, hp=hp, vocab_pad=vocab_pad,
        emb_scale=math.sqrt(float(d_model)))

    # Full-extent, constant-index (VMEM-resident) blocks for the weights.
    # TODO(synk): at real d_model/d_ff mark these pipeline_mode=pl.Buffered(1)
    #             (single-buffered) and K/N-tile w1/w2/fc_w; irrelevant here.
    def full2(a):
        return pl.BlockSpec(a.shape, lambda i: (0, 0))

    def full3(a):
        return pl.BlockSpec(a.shape, lambda i: (0, 0, 0))

    out2 = pl.pallas_call(
        kern,
        out_shape=jax.ShapeDtypeStruct((seq_len, batch * vp), jnp.float32),
        grid=(nb,),
        in_specs=[
            pl.BlockSpec((rows_blk, 1), lambda i: (i, 0)),    # token ids
            pl.BlockSpec((rows_blk, dp), lambda i: (i, 0)),   # positional enc
            full2(params["embed"]),
            full2(params["ln_g"]), full2(params["ln_b"]),
            full3(params["wqkv"]), full2(params["bqkv"]),
            full3(params["wo"]), full2(params["bo"]),
            full3(params["w1"]), full2(params["b1"]),
            full3(params["w2"]), full2(params["b2"]),
            full2(params["fc_w"]), full2(params["fc_b"]),
        ],
        out_specs=pl.BlockSpec((seq_len, sb * vp), lambda i: (0, i)),
        compiler_params=pltpu.CompilerParams(
            dimension_semantics=("parallel",),
            vmem_limit_bytes=48 * 1024 * 1024,   # within v7x's 64 MiB physical
        ),
    )(ids, pe_tiled, params["embed"], params["ln_g"], params["ln_b"],
      params["wqkv"], params["bqkv"], params["wo"], params["bo"],
      params["w1"], params["b1"], params["w2"], params["b2"],
      params["fc_w"], params["fc_b"])

    # Pure reshape (rows were written sequence-major in-kernel) + de-pad vocab.
    out = out2.reshape(seq_len, batch, vp)[:, :, :n_tokens]
    return (out,)


# ---------------------------------------------------------------------------
# Parameters (deterministic, synthetic, padded + packed for the kernel layout)
# ---------------------------------------------------------------------------
def init_params(key, *, n_tokens, d_model, d_ff, n_heads, n_layers, max_len=64):
    d_head = d_model // n_heads
    dp, fp, vp = _lane_pad(d_model), _lane_pad(d_ff), _lane_pad(n_tokens)
    hp = _lane_pad(n_heads * d_head)     # q/k/v lane block (heads packed tight)
    hd = _sublane_pad(n_heads * d_head)  # wo contraction rows
    vr = _lane_pad(n_tokens)             # padded vocab rows (one-hot gather)
    attn_scale = 1.0 / math.sqrt(d_head)

    def dense(k, fi, fo):
        return jax.random.normal(k, (fi, fo), jnp.float32) * 0.02

    def pad2(a, r, c):
        return jnp.zeros((r, c), jnp.float32).at[:a.shape[0], :a.shape[1]].set(a)

    keys = iter(jax.random.split(key, 2 + 6 * n_layers))

    # LayerNorm params: rows 2l / 2l+1 = layer l ln1 / ln2, row 2L = final LN.
    # Gamma is zero beyond d_model so padded lanes stay exactly zero.
    ln_rows = 2 * n_layers + 1
    ln_g = jnp.zeros((ln_rows, dp), jnp.float32).at[:, :d_model].set(1.0)
    ln_b = jnp.zeros((ln_rows, dp), jnp.float32)

    wqkv, bqkv, wo, bo, w1, b1, w2, b2 = [], [], [], [], [], [], [], []
    for _ in range(n_layers):
        # Softmax scale folded into wq (bq is zero, so no bias scaling needed).
        wq = dense(next(keys), d_model, d_model) * attn_scale
        wk = dense(next(keys), d_model, d_model)
        wv = dense(next(keys), d_model, d_model)
        wqkv.append(jnp.concatenate(
            [pad2(wq, dp, hp), pad2(wk, dp, hp), pad2(wv, dp, hp)],
            axis=1).astype(jnp.bfloat16))                   # [dp, 3*hp]
        bqkv.append(jnp.zeros((3 * hp,), jnp.float32))
        wo.append(pad2(dense(next(keys), d_model, d_model), hd, dp)
                  .astype(jnp.bfloat16))                    # [hd, dp]
        bo.append(jnp.zeros((dp,), jnp.float32))
        w1.append(pad2(dense(next(keys), d_model, d_ff), dp, fp)
                  .astype(jnp.bfloat16))
        b1.append(jnp.zeros((fp,), jnp.float32))
        w2.append(pad2(dense(next(keys), d_ff, d_model), fp, dp)
                  .astype(jnp.bfloat16))
        b2.append(jnp.zeros((dp,), jnp.float32))

    params = {
        "embed": pad2(dense(next(keys), n_tokens, d_model), vr, dp)
                 .astype(jnp.bfloat16),
        "pe": pad2(sinusoidal_pe(max_len, d_model), max_len, dp),
        "ln_g": ln_g, "ln_b": ln_b,
        "wqkv": jnp.stack(wqkv), "bqkv": jnp.stack(bqkv),
        "wo": jnp.stack(wo), "bo": jnp.stack(bo),
        "w1": jnp.stack(w1), "b1": jnp.stack(b1),
        "w2": jnp.stack(w2), "b2": jnp.stack(b2),
        "fc_w": pad2(dense(next(keys), d_model, n_tokens), dp, vp)
                .astype(jnp.bfloat16),
        "fc_b": jnp.zeros((1, vp), jnp.float32),
    }
    return params


if __name__ == "__main__":
    n_tokens, d_model, n_heads, d_ff, n_layers = 50, 32, 4, 64, 2
    seq_len, batch = 8, 2

    key = jax.random.PRNGKey(0)
    k_params, k_tokens = jax.random.split(key)
    params = init_params(k_params, n_tokens=n_tokens, d_model=d_model,
                         d_ff=d_ff, n_heads=n_heads, n_layers=n_layers)
    src = jax.random.randint(k_tokens, (seq_len, batch), 0, n_tokens,
                             dtype=jnp.int32)

    fwd = jax.jit(functools.partial(transformer_forward, d_model=d_model,
                                    n_heads=n_heads, n_tokens=n_tokens,
                                    n_layers=n_layers))
    (out,) = fwd(src, params)
    jax.block_until_ready(out)

    assert out.shape == (seq_len, batch, n_tokens), out.shape
    assert out.dtype == jnp.float32
    print("KERNEL_OK")
</pallas_src>

<mosaic_0001>
module attributes {stable_mosaic.version = 11 : i64} {
  func.func @fused_transformer_kernel(%arg0: i32, %arg1: memref<8x1xi32, #tpu.memory_space<vmem>>, %arg2: memref<8x128xf32, #tpu.memory_space<vmem>>, %arg3: memref<128x128xbf16, #tpu.memory_space<vmem>>, %arg4: memref<5x128xf32, #tpu.memory_space<vmem>>, %arg5: memref<5x128xf32, #tpu.memory_space<vmem>>, %arg6: memref<2x128x384xbf16, #tpu.memory_space<vmem>>, %arg7: memref<2x384xf32, #tpu.memory_space<vmem>>, %arg8: memref<2x32x128xbf16, #tpu.memory_space<vmem>>, %arg9: memref<2x128xf32, #tpu.memory_space<vmem>>, %arg10: memref<2x128x128xbf16, #tpu.memory_space<vmem>>, %arg11: memref<2x128xf32, #tpu.memory_space<vmem>>, %arg12: memref<2x128x128xbf16, #tpu.memory_space<vmem>>, %arg13: memref<2x128xf32, #tpu.memory_space<vmem>>, %arg14: memref<128x128xbf16, #tpu.memory_space<vmem>>, %arg15: memref<1x128xf32, #tpu.memory_space<vmem>>, %arg16: memref<8x128xf32, #tpu.memory_space<vmem>>) attributes {dimension_semantics = [#tpu.dimension_semantics<parallel>], iteration_bounds = array<i64: 2>, scalar_prefetch = 0 : i64, scratch_operands = 0 : i64, tpu.core_type = #tpu.core_type<tc>, window_params = [{transform_indices = @transform_0, window_bounds = array<i64: 8, 1>}, {transform_indices = @transform_1, window_bounds = array<i64: 8, 128>}, {pipeline_mode = #tpu.pipeline_mode<synchronous>, transform_indices = @transform_2, window_bounds = array<i64: 128, 128>}, {pipeline_mode = #tpu.pipeline_mode<synchronous>, transform_indices = @transform_3, window_bounds = array<i64: 5, 128>}, {pipeline_mode = #tpu.pipeline_mode<synchronous>, transform_indices = @transform_4, window_bounds = array<i64: 5, 128>}, {pipeline_mode = #tpu.pipeline_mode<synchronous>, transform_indices = @transform_5, window_bounds = array<i64: 2, 128, 384>}, {pipeline_mode = #tpu.pipeline_mode<synchronous>, transform_indices = @transform_6, window_bounds = array<i64: 2, 384>}, {pipeline_mode = #tpu.pipeline_mode<synchronous>, transform_indices = @transform_7, window_bounds = array<i64: 2, 32, 128>}, {pipeline_mode = #tpu.pipeline_mode<synchronous>, transform_indices = @transform_8, window_bounds = array<i64: 2, 128>}, {pipeline_mode = #tpu.pipeline_mode<synchronous>, transform_indices = @transform_9, window_bounds = array<i64: 2, 128, 128>}, {pipeline_mode = #tpu.pipeline_mode<synchronous>, transform_indices = @transform_10, window_bounds = array<i64: 2, 128>}, {pipeline_mode = #tpu.pipeline_mode<synchronous>, transform_indices = @transform_11, window_bounds = array<i64: 2, 128, 128>}, {pipeline_mode = #tpu.pipeline_mode<synchronous>, transform_indices = @transform_12, window_bounds = array<i64: 2, 128>}, {pipeline_mode = #tpu.pipeline_mode<synchronous>, transform_indices = @transform_13, window_bounds = array<i64: 128, 128>}, {pipeline_mode = #tpu.pipeline_mode<synchronous>, transform_indices = @transform_14, window_bounds = array<i64: 1, 128>}, {transform_indices = @transform_15, window_bounds = array<i64: 8, 128>}]} {
    %0 = tpu.iota {dimensions = array<i32: 1>} : vector<1x128xi32>
    %c32_i32 = arith.constant 32 : i32
    %1 = vector.broadcast %c32_i32 : i32 to vector<1x128xi32>
    %2 = arith.cmpi slt, %0, %1 : vector<1x128xi32>
    %3 = arith.extui %2 : vector<1x128xi1> to vector<1x128xi32>
    %4 = arith.sitofp %3 : vector<1x128xi32> to vector<1x128xf32>
    %c0 = arith.constant 0 : index
    %c0_0 = arith.constant 0 : index
    %5 = vector.load %arg1[%c0, %c0_0] : memref<8x1xi32, #tpu.memory_space<vmem>>, vector<8x1xi32>
    %6 = tpu.iota {dimensions = array<i32: 1>} : vector<8x128xi32>
    %7 = vector.broadcast %5 : vector<8x1xi32> to vector<8x128xi32>
    %8 = arith.cmpi eq, %6, %7 : vector<8x128xi32>
    %cst = arith.constant 1.000000e+00 : f32
    %cst_1 = arith.constant 0.000000e+00 : f32
    %9 = vector.broadcast %cst : f32 to vector<8x128xf32>
    %10 = vector.broadcast %cst_1 : f32 to vector<8x128xf32>
    %11 = arith.select %8, %9, %10 : vector<8x128xi1>, vector<8x128xf32>
    %12 = arith.truncf %11 : vector<8x128xf32> to vector<8x128xbf16>
    %c0_2 = arith.constant 0 : index
    %c0_3 = arith.constant 0 : index
    %13 = vector.load %arg3[%c0_2, %c0_3] : memref<128x128xbf16, #tpu.memory_space<vmem>>, vector<128x128xbf16>
    %cst_4 = arith.constant dense<0.000000e+00> : vector<8x128xf32>
    %14 = tpu.matmul %12, %13, %cst_4 {dimension_numbers = #tpu.dot_dimension_numbers<[1], [0], [0], [1], [0, 0, 1, 1], [], []>} : vector<8x128xbf16>, vector<128x128xbf16>, vector<8x128xf32> -> vector<8x128xf32>
    %cst_5 = arith.constant 5.65685415 : f32
    %15 = vector.broadcast %cst_5 : f32 to vector<8x128xf32>
    %16 = arith.mulf %14, %15 : vector<8x128xf32>
    %c0_6 = arith.constant 0 : index
    %c0_7 = arith.constant 0 : index
    %17 = vector.load %arg2[%c0_6, %c0_7] : memref<8x128xf32, #tpu.memory_space<vmem>>, vector<8x128xf32>
    %18 = arith.addf %16, %17 : vector<8x128xf32>
    %19 = tpu.iota {dimensions = array<i32: 0>} : vector<8x8xi32>
    %20 = tpu.iota {dimensions = array<i32: 1>} : vector<8x8xi32>
    %21 = arith.cmpi sle, %20, %19 : vector<8x8xi32>
    %cst_8 = arith.constant 0.000000e+00 : f32
    %cst_9 = arith.constant -1.000000e+30 : f32
    %22 = vector.broadcast %cst_8 : f32 to vector<8x8xf32>
    %23 = vector.broadcast %cst_9 : f32 to vector<8x8xf32>
    %24 = arith.select %21, %22, %23 : vector<8x8xi1>, vector<8x8xf32>
    %c0_10 = arith.constant 0 : index
    %c0_11 = arith.constant 0 : index
    %25 = vector.load %arg4[%c0_10, %c0_11] : memref<5x128xf32, #tpu.memory_space<vmem>>, vector<1x128xf32>
    %c0_12 = arith.constant 0 : index
    %c0_13 = arith.constant 0 : index
    %26 = vector.load %arg5[%c0_12, %c0_13] : memref<5x128xf32, #tpu.memory_space<vmem>>, vector<1x128xf32>
    %27 = vector.broadcast %4 : vector<1x128xf32> to vector<8x128xf32>
    %28 = arith.mulf %18, %27 : vector<8x128xf32>
    %cst_14 = arith.constant dense<0.000000e+00> : vector<8xf32>
    %29 = vector.multi_reduction <add>, %28, %cst_14 [1] : vector<8x128xf32> to vector<8xf32>
    %30 = vector.shape_cast %29 : vector<8xf32> to vector<8x1xf32>
    %cst_15 = arith.constant 3.125000e-02 : f32
    %31 = vector.broadcast %cst_15 : f32 to vector<8x1xf32>
    %32 = arith.mulf %30, %31 : vector<8x1xf32>
    %33 = vector.broadcast %32 : vector<8x1xf32> to vector<8x128xf32>
    %34 = arith.subf %18, %33 : vector<8x128xf32>
    %35 = vector.broadcast %4 : vector<1x128xf32> to vector<8x128xf32>
    %36 = arith.mulf %34, %35 : vector<8x128xf32>
    %37 = arith.mulf %36, %36 : vector<8x128xf32>
    %cst_16 = arith.constant dense<0.000000e+00> : vector<8xf32>
    %38 = vector.multi_reduction <add>, %37, %cst_16 [1] : vector<8x128xf32> to vector<8xf32>
    %39 = vector.shape_cast %38 : vector<8xf32> to vector<8x1xf32>
    %cst_17 = arith.constant 3.125000e-02 : f32
    %40 = vector.broadcast %cst_17 : f32 to vector<8x1xf32>
    %41 = arith.mulf %39, %40 : vector<8x1xf32>
    %cst_18 = arith.constant 9.99999974E-6 : f32
    %42 = vector.broadcast %cst_18 : f32 to vector<8x1xf32>
    %43 = arith.addf %41, %42 : vector<8x1xf32>
    %44 = math.rsqrt %43 : vector<8x1xf32>
    %45 = vector.broadcast %44 : vector<8x1xf32> to vector<8x128xf32>
    %46 = arith.mulf %36, %45 : vector<8x128xf32>
    %47 = vector.broadcast %25 : vector<1x128xf32> to vector<8x128xf32>
    %48 = arith.mulf %46, %47 : vector<8x128xf32>
    %49 = vector.broadcast %26 : vector<1x128xf32> to vector<8x128xf32>
    %50 = arith.addf %48, %49 : vector<8x128xf32>
    %51 = arith.truncf %50 : vector<8x128xf32> to vector<8x128xbf16>
    %c0_19 = arith.constant 0 : index
    %c0_20 = arith.constant 0 : index
    %c0_21 = arith.constant 0 : index
    %52 = vector.load %arg6[%c0_19, %c0_20, %c0_21] : memref<2x128x384xbf16, #tpu.memory_space<vmem>>, vector<1x128x384xbf16>
    %53 = vector.shape_cast %52 : vector<1x128x384xbf16> to vector<128x384xbf16>
    %cst_22 = arith.constant dense<0.000000e+00> : vector<8x384xf32>
    %54 = tpu.matmul %51, %53, %cst_22 {dimension_numbers = #tpu.dot_dimension_numbers<[1], [0], [0], [1], [0, 0, 1, 1], [], []>} : vector<8x128xbf16>, vector<128x384xbf16>, vector<8x384xf32> -> vector<8x384xf32>
    %c0_23 = arith.constant 0 : index
    %c0_24 = arith.constant 0 : index
    %55 = vector.load %arg7[%c0_23, %c0_24] : memref<2x384xf32, #tpu.memory_space<vmem>>, vector<1x384xf32>
    %56 = vector.broadcast %55 : vector<1x384xf32> to vector<8x384xf32>
    %57 = arith.addf %54, %56 : vector<8x384xf32>
    %58 = vector.extract_strided_slice %57 {offsets = [0, 0], sizes = [8, 8], strides = [1, 1]} : vector<8x384xf32> to vector<8x8xf32>
    %59 = arith.truncf %58 : vector<8x8xf32> to vector<8x8xbf16>
    %60 = vector.extract_strided_slice %57 {offsets = [0, 128], sizes = [8, 8], strides = [1, 1]} : vector<8x384xf32> to vector<8x8xf32>
    %61 = arith.truncf %60 : vector<8x8xf32> to vector<8x8xbf16>
    %62 = vector.extract_strided_slice %57 {offsets = [0, 256], sizes = [8, 8], strides = [1, 1]} : vector<8x384xf32> to vector<8x8xf32>
    %63 = arith.truncf %62 : vector<8x8xf32> to vector<8x8xbf16>
    %cst_25 = arith.constant dense<0.000000e+00> : vector<8x8xf32>
    %64 = tpu.matmul %59, %61, %cst_25 {dimension_numbers = #tpu.dot_dimension_numbers<[1], [1], [0], [0], [0, 0, 1, 0], [], []>} : vector<8x8xbf16>, vector<8x8xbf16>, vector<8x8xf32> -> vector<8x8xf32>
    %65 = arith.addf %64, %24 : vector<8x8xf32>
    %cst_26 = arith.constant dense<0xFF800000> : vector<8xf32>
    %66 = vector.multi_reduction <maximumf>, %65, %cst_26 [1] : vector<8x8xf32> to vector<8xf32>
    %67 = vector.shape_cast %66 : vector<8xf32> to vector<8x1xf32>
    %68 = vector.broadcast %67 : vector<8x1xf32> to vector<8x8xf32>
    %69 = arith.subf %65, %68 : vector<8x8xf32>
    %70 = math.exp %69 : vector<8x8xf32>
    %cst_27 = arith.constant dense<0.000000e+00> : vector<8xf32>
    %71 = vector.multi_reduction <add>, %70, %cst_27 [1] : vector<8x8xf32> to vector<8xf32>
    %72 = vector.shape_cast %71 : vector<8xf32> to vector<8x1xf32>
    %73 = tpu.reciprocal %72 {approx = true} : vector<8x1xf32> -> vector<8x1xf32>
    %74 = vector.broadcast %73 : vector<8x1xf32> to vector<8x8xf32>
    %75 = arith.mulf %70, %74 : vector<8x8xf32>
    %76 = arith.truncf %75 : vector<8x8xf32> to vector<8x8xbf16>
    %cst_28 = arith.constant dense<0.000000e+00> : vector<8x8xf32>
    %77 = tpu.matmul %76, %63, %cst_28 {dimension_numbers = #tpu.dot_dimension_numbers<[1], [0], [0], [1], [0, 0, 1, 1], [], []>} : vector<8x8xbf16>, vector<8x8xbf16>, vector<8x8xf32> -> vector<8x8xf32>
    %78 = vector.extract_strided_slice %57 {offsets = [0, 8], sizes = [8, 8], strides = [1, 1]} : vector<8x384xf32> to vector<8x8xf32>
    %79 = arith.truncf %78 : vector<8x8xf32> to vector<8x8xbf16>
    %80 = vector.extract_strided_slice %57 {offsets = [0, 136], sizes = [8, 8], strides = [1, 1]} : vector<8x384xf32> to vector<8x8xf32>
    %81 = arith.truncf %80 : vector<8x8xf32> to vector<8x8xbf16>
    %82 = vector.extract_strided_slice %57 {offsets = [0, 264], sizes = [8, 8], strides = [1, 1]} : vector<8x384xf32> to vector<8x8xf32>
    %83 = arith.truncf %82 : vector<8x8xf32> to vector<8x8xbf16>
    %cst_29 = arith.constant dense<0.000000e+00> : vector<8x8xf32>
    %84 = tpu.matmul %79, %81, %cst_29 {dimension_numbers = #tpu.dot_dimension_numbers<[1], [1], [0], [0], [0, 0, 1, 0], [], []>} : vector<8x8xbf16>, vector<8x8xbf16>, vector<8x8xf32> -> vector<8x8xf32>
    %85 = arith.addf %84, %24 : vector<8x8xf32>
    %cst_30 = arith.constant dense<0xFF800000> : vector<8xf32>
    %86 = vector.multi_reduction <maximumf>, %85, %cst_30 [1] : vector<8x8xf32> to vector<8xf32>
    %87 = vector.shape_cast %86 : vector<8xf32> to vector<8x1xf32>
    %88 = vector.broadcast %87 : vector<8x1xf32> to vector<8x8xf32>
    %89 = arith.subf %85, %88 : vector<8x8xf32>
    %90 = math.exp %89 : vector<8x8xf32>
    %cst_31 = arith.constant dense<0.000000e+00> : vector<8xf32>
    %91 = vector.multi_reduction <add>, %90, %cst_31 [1] : vector<8x8xf32> to vector<8xf32>
    %92 = vector.shape_cast %91 : vector<8xf32> to vector<8x1xf32>
    %93 = tpu.reciprocal %92 {approx = true} : vector<8x1xf32> -> vector<8x1xf32>
    %94 = vector.broadcast %93 : vector<8x1xf32> to vector<8x8xf32>
    %95 = arith.mulf %90, %94 : vector<8x8xf32>
    %96 = arith.truncf %95 : vector<8x8xf32> to vector<8x8xbf16>
    %cst_32 = arith.constant dense<0.000000e+00> : vector<8x8xf32>
    %97 = tpu.matmul %96, %83, %cst_32 {dimension_numbers = #tpu.dot_dimension_numbers<[1], [0], [0], [1], [0, 0, 1, 1], [], []>} : vector<8x8xbf16>, vector<8x8xbf16>, vector<8x8xf32> -> vector<8x8xf32>
    %98 = vector.extract_strided_slice %57 {offsets = [0, 16], sizes = [8, 8], strides = [1, 1]} : vector<8x384xf32> to vector<8x8xf32>
    %99 = arith.truncf %98 : vector<8x8xf32> to vector<8x8xbf16>
    %100 = vector.extract_strided_slice %57 {offsets = [0, 144], sizes = [8, 8], strides = [1, 1]} : vector<8x384xf32> to vector<8x8xf32>
    %101 = arith.truncf %100 : vector<8x8xf32> to vector<8x8xbf16>
    %102 = vector.extract_strided_slice %57 {offsets = [0, 272], sizes = [8, 8], strides = [1, 1]} : vector<8x384xf32> to vector<8x8xf32>
    %103 = arith.truncf %102 : vector<8x8xf32> to vector<8x8xbf16>
    %cst_33 = arith.constant dense<0.000000e+00> : vector<8x8xf32>
    %104 = tpu.matmul %99, %101, %cst_33 {dimension_numbers = #tpu.dot_dimension_numbers<[1], [1], [0], [0], [0, 0, 1, 0], [], []>} : vector<8x8xbf16>, vector<8x8xbf16>, vector<8x8xf32> -> vector<8x8xf32>
    %105 = arith.addf %104, %24 : vector<8x8xf32>
    %cst_34 = arith.constant dense<0xFF800000> : vector<8xf32>
    %106 = vector.multi_reduction <maximumf>, %105, %cst_34 [1] : vector<8x8xf32> to vector<8xf32>
    %107 = vector.shape_cast %106 : vector<8xf32> to vector<8x1xf32>
    %108 = vector.broadcast %107 : vector<8x1xf32> to vector<8x8xf32>
    %109 = arith.subf %105, %108 : vector<8x8xf32>
    %110 = math.exp %109 : vector<8x8xf32>
    %cst_35 = arith.constant dense<0.000000e+00> : vector<8xf32>
    %111 = vector.multi_reduction <add>, %110, %cst_35 [1] : vector<8x8xf32> to vector<8xf32>
    %112 = vector.shape_cast %111 : vector<8xf32> to vector<8x1xf32>
    %113 = tpu.reciprocal %112 {approx = true} : vector<8x1xf32> -> vector<8x1xf32>
    %114 = vector.broadcast %113 : vector<8x1xf32> to vector<8x8xf32>
    %115 = arith.mulf %110, %114 : vector<8x8xf32>
    %116 = arith.truncf %115 : vector<8x8xf32> to vector<8x8xbf16>
    %cst_36 = arith.constant dense<0.000000e+00> : vector<8x8xf32>
    %117 = tpu.matmul %116, %103, %cst_36 {dimension_numbers = #tpu.dot_dimension_numbers<[1], [0], [0], [1], [0, 0, 1, 1], [], []>} : vector<8x8xbf16>, vector<8x8xbf16>, vector<8x8xf32> -> vector<8x8xf32>
    %118 = vector.extract_strided_slice %57 {offsets = [0, 24], sizes = [8, 8], strides = [1, 1]} : vector<8x384xf32> to vector<8x8xf32>
    %119 = arith.truncf %118 : vector<8x8xf32> to vector<8x8xbf16>
    %120 = vector.extract_strided_slice %57 {offsets = [0, 152], sizes = [8, 8], strides = [1, 1]} : vector<8x384xf32> to vector<8x8xf32>
    %121 = arith.truncf %120 : vector<8x8xf32> to vector<8x8xbf16>
    %122 = vector.extract_strided_slice %57 {offsets = [0, 280], sizes = [8, 8], strides = [1, 1]} : vector<8x384xf32> to vector<8x8xf32>
    %123 = arith.truncf %122 : vector<8x8xf32> to vector<8x8xbf16>
    %cst_37 = arith.constant dense<0.000000e+00> : vector<8x8xf32>
    %124 = tpu.matmul %119, %121, %cst_37 {dimension_numbers = #tpu.dot_dimension_numbers<[1], [1], [0], [0], [0, 0, 1, 0], [], []>} : vector<8x8xbf16>, vector<8x8xbf16>, vector<8x8xf32> -> vector<8x8xf32>
    %125 = arith.addf %124, %24 : vector<8x8xf32>
    %cst_38 = arith.constant dense<0xFF800000> : vector<8xf32>
    %126 = vector.multi_reduction <maximumf>, %125, %cst_38 [1] : vector<8x8xf32> to vector<8xf32>
    %127 = vector.shape_cast %126 : vector<8xf32> to vector<8x1xf32>
    %128 = vector.broadcast %127 : vector<8x1xf32> to vector<8x8xf32>
    %129 = arith.subf %125, %128 : vector<8x8xf32>
    %130 = math.exp %129 : vector<8x8xf32>
    %cst_39 = arith.constant dense<0.000000e+00> : vector<8xf32>
    %131 = vector.multi_reduction <add>, %130, %cst_39 [1] : vector<8x8xf32> to vector<8xf32>
    %132 = vector.shape_cast %131 : vector<8xf32> to vector<8x1xf32>
    %133 = tpu.reciprocal %132 {approx = true} : vector<8x1xf32> -> vector<8x1xf32>
    %134 = vector.broadcast %133 : vector<8x1xf32> to vector<8x8xf32>
    %135 = arith.mulf %130, %134 : vector<8x8xf32>
    %136 = arith.truncf %135 : vector<8x8xf32> to vector<8x8xbf16>
    %cst_40 = arith.constant dense<0.000000e+00> : vector<8x8xf32>
    %137 = tpu.matmul %136, %123, %cst_40 {dimension_numbers = #tpu.dot_dimension_numbers<[1], [0], [0], [1], [0, 0, 1, 1], [], []>} : vector<8x8xbf16>, vector<8x8xbf16>, vector<8x8xf32> -> vector<8x8xf32>
    %138 = tpu.concatenate %77, %97, %117, %137 in 1 : vector<8x8xf32>, vector<8x8xf32>, vector<8x8xf32>, vector<8x8xf32> -> vector<8x32xf32>
    %139 = arith.truncf %138 : vector<8x32xf32> to vector<8x32xbf16>
    %c0_41 = arith.constant 0 : index
    %c0_42 = arith.constant 0 : index
    %c0_43 = arith.constant 0 : index
    %140 = vector.load %arg8[%c0_41, %c0_42, %c0_43] : memref<2x32x128xbf16, #tpu.memory_space<vmem>>, vector<1x32x128xbf16>
    %141 = vector.shape_cast %140 : vector<1x32x128xbf16> to vector<32x128xbf16>
    %cst_44 = arith.constant dense<0.000000e+00> : vector<8x128xf32>
    %142 = tpu.matmul %139, %141, %cst_44 {dimension_numbers = #tpu.dot_dimension_numbers<[1], [0], [0], [1], [0, 0, 1, 1], [], []>} : vector<8x32xbf16>, vector<32x128xbf16>, vector<8x128xf32> -> vector<8x128xf32>
    %143 = arith.addf %18, %142 : vector<8x128xf32>
    %c0_45 = arith.constant 0 : index
    %c0_46 = arith.constant 0 : index
    %144 = vector.load %arg9[%c0_45, %c0_46] : memref<2x128xf32, #tpu.memory_space<vmem>>, vector<1x128xf32>
    %145 = vector.broadcast %144 : vector<1x128xf32> to vector<8x128xf32>
    %146 = arith.addf %143, %145 : vector<8x128xf32>
    %c1 = arith.constant 1 : index
    %c0_47 = arith.constant 0 : index
    %147 = vector.load %arg4[%c1, %c0_47] : memref<5x128xf32, #tpu.memory_space<vmem>>, vector<1x128xf32>
    %c1_48 = arith.constant 1 : index
    %c0_49 = arith.constant 0 : index
    %148 = vector.load %arg5[%c1_48, %c0_49] : memref<5x128xf32, #tpu.memory_space<vmem>>, vector<1x128xf32>
    %149 = vector.broadcast %4 : vector<1x128xf32> to vector<8x128xf32>
    %150 = arith.mulf %146, %149 : vector<8x128xf32>
    %cst_50 = arith.constant dense<0.000000e+00> : vector<8xf32>
    %151 = vector.multi_reduction <add>, %150, %cst_50 [1] : vector<8x128xf32> to vector<8xf32>
    %152 = vector.shape_cast %151 : vector<8xf32> to vector<8x1xf32>
    %cst_51 = arith.constant 3.125000e-02 : f32
    %153 = vector.broadcast %cst_51 : f32 to vector<8x1xf32>
    %154 = arith.mulf %152, %153 : vector<8x1xf32>
    %155 = vector.broadcast %154 : vector<8x1xf32> to vector<8x128xf32>
    %156 = arith.subf %146, %155 : vector<8x128xf32>
    %157 = vector.broadcast %4 : vector<1x128xf32> to vector<8x128xf32>
    %158 = arith.mulf %156, %157 : vector<8x128xf32>
    %159 = arith.mulf %158, %158 : vector<8x128xf32>
    %cst_52 = arith.constant dense<0.000000e+00> : vector<8xf32>
    %160 = vector.multi_reduction <add>, %159, %cst_52 [1] : vector<8x128xf32> to vector<8xf32>
    %161 = vector.shape_cast %160 : vector<8xf32> to vector<8x1xf32>
    %cst_53 = arith.constant 3.125000e-02 : f32
    %162 = vector.broadcast %cst_53 : f32 to vector<8x1xf32>
    %163 = arith.mulf %161, %162 : vector<8x1xf32>
    %cst_54 = arith.constant 9.99999974E-6 : f32
    %164 = vector.broadcast %cst_54 : f32 to vector<8x1xf32>
    %165 = arith.addf %163, %164 : vector<8x1xf32>
    %166 = math.rsqrt %165 : vector<8x1xf32>
    %167 = vector.broadcast %166 : vector<8x1xf32> to vector<8x128xf32>
    %168 = arith.mulf %158, %167 : vector<8x128xf32>
    %169 = vector.broadcast %147 : vector<1x128xf32> to vector<8x128xf32>
    %170 = arith.mulf %168, %169 : vector<8x128xf32>
    %171 = vector.broadcast %148 : vector<1x128xf32> to vector<8x128xf32>
    %172 = arith.addf %170, %171 : vector<8x128xf32>
    %173 = arith.truncf %172 : vector<8x128xf32> to vector<8x128xbf16>
    %c0_55 = arith.constant 0 : index
    %c0_56 = arith.constant 0 : index
    %c0_57 = arith.constant 0 : index
    %174 = vector.load %arg10[%c0_55, %c0_56, %c0_57] : memref<2x128x128xbf16, #tpu.memory_space<vmem>>, vector<1x128x128xbf16>
    %175 = vector.shape_cast %174 : vector<1x128x128xbf16> to vector<128x128xbf16>
    %cst_58 = arith.constant dense<0.000000e+00> : vector<8x128xf32>
    %176 = tpu.matmul %173, %175, %cst_58 {dimension_numbers = #tpu.dot_dimension_numbers<[1], [0], [0], [1], [0, 0, 1, 1], [], []>} : vector<8x128xbf16>, vector<128x128xbf16>, vector<8x128xf32> -> vector<8x128xf32>
    %c0_59 = arith.constant 0 : index
    %c0_60 = arith.constant 0 : index
    %177 = vector.load %arg11[%c0_59, %c0_60] : memref<2x128xf32, #tpu.memory_space<vmem>>, vector<1x128xf32>
    %178 = vector.broadcast %177 : vector<1x128xf32> to vector<8x128xf32>
    %179 = arith.addf %176, %178 : vector<8x128xf32>
    %cst_61 = arith.constant 0.000000e+00 : f32
    %180 = vector.broadcast %cst_61 : f32 to vector<8x128xf32>
    %181 = arith.maximumf %179, %180 : vector<8x128xf32>
    %182 = arith.truncf %181 : vector<8x128xf32> to vector<8x128xbf16>
    %c0_62 = arith.constant 0 : index
    %c0_63 = arith.constant 0 : index
    %c0_64 = arith.constant 0 : index
    %183 = vector.load %arg12[%c0_62, %c0_63, %c0_64] : memref<2x128x128xbf16, #tpu.memory_space<vmem>>, vector<1x128x128xbf16>
    %184 = vector.shape_cast %183 : vector<1x128x128xbf16> to vector<128x128xbf16>
    %cst_65 = arith.constant dense<0.000000e+00> : vector<8x128xf32>
    %185 = tpu.matmul %182, %184, %cst_65 {dimension_numbers = #tpu.dot_dimension_numbers<[1], [0], [0], [1], [0, 0, 1, 1], [], []>} : vector<8x128xbf16>, vector<128x128xbf16>, vector<8x128xf32> -> vector<8x128xf32>
    %186 = arith.addf %146, %185 : vector<8x128xf32>
    %c0_66 = arith.constant 0 : index
    %c0_67 = arith.constant 0 : index
    %187 = vector.load %arg13[%c0_66, %c0_67] : memref<2x128xf32, #tpu.memory_space<vmem>>, vector<1x128xf32>
    %188 = vector.broadcast %187 : vector<1x128xf32> to vector<8x128xf32>
    %189 = arith.addf %186, %188 : vector<8x128xf32>
    %c2 = arith.constant 2 : index
    %c0_68 = arith.constant 0 : index
    %190 = vector.load %arg4[%c2, %c0_68] : memref<5x128xf32, #tpu.memory_space<vmem>>, vector<1x128xf32>
    %c2_69 = arith.constant 2 : index
    %c0_70 = arith.constant 0 : index
    %191 = vector.load %arg5[%c2_69, %c0_70] : memref<5x128xf32, #tpu.memory_space<vmem>>, vector<1x128xf32>
    %192 = vector.broadcast %4 : vector<1x128xf32> to vector<8x128xf32>
    %193 = arith.mulf %189, %192 : vector<8x128xf32>
    %cst_71 = arith.constant dense<0.000000e+00> : vector<8xf32>
    %194 = vector.multi_reduction <add>, %193, %cst_71 [1] : vector<8x128xf32> to vector<8xf32>
    %195 = vector.shape_cast %194 : vector<8xf32> to vector<8x1xf32>
    %cst_72 = arith.constant 3.125000e-02 : f32
    %196 = vector.broadcast %cst_72 : f32 to vector<8x1xf32>
    %197 = arith.mulf %195, %196 : vector<8x1xf32>
    %198 = vector.broadcast %197 : vector<8x1xf32> to vector<8x128xf32>
    %199 = arith.subf %189, %198 : vector<8x128xf32>
    %200 = vector.broadcast %4 : vector<1x128xf32> to vector<8x128xf32>
    %201 = arith.mulf %199, %200 : vector<8x128xf32>
    %202 = arith.mulf %201, %201 : vector<8x128xf32>
    %cst_73 = arith.constant dense<0.000000e+00> : vector<8xf32>
    %203 = vector.multi_reduction <add>, %202, %cst_73 [1] : vector<8x128xf32> to vector<8xf32>
    %204 = vector.shape_cast %203 : vector<8xf32> to vector<8x1xf32>
    %cst_74 = arith.constant 3.125000e-02 : f32
    %205 = vector.broadcast %cst_74 : f32 to vector<8x1xf32>
    %206 = arith.mulf %204, %205 : vector<8x1xf32>
    %cst_75 = arith.constant 9.99999974E-6 : f32
    %207 = vector.broadcast %cst_75 : f32 to vector<8x1xf32>
    %208 = arith.addf %206, %207 : vector<8x1xf32>
    %209 = math.rsqrt %208 : vector<8x1xf32>
    %210 = vector.broadcast %209 : vector<8x1xf32> to vector<8x128xf32>
    %211 = arith.mulf %201, %210 : vector<8x128xf32>
    %212 = vector.broadcast %190 : vector<1x128xf32> to vector<8x128xf32>
    %213 = arith.mulf %211, %212 : vector<8x128xf32>
    %214 = vector.broadcast %191 : vector<1x128xf32> to vector<8x128xf32>
    %215 = arith.addf %213, %214 : vector<8x128xf32>
    %216 = arith.truncf %215 : vector<8x128xf32> to vector<8x128xbf16>
    %c1_76 = arith.constant 1 : index
    %c0_77 = arith.constant 0 : index
    %c0_78 = arith.constant 0 : index
    %217 = vector.load %arg6[%c1_76, %c0_77, %c0_78] : memref<2x128x384xbf16, #tpu.memory_space<vmem>>, vector<1x128x384xbf16>
    %218 = vector.shape_cast %217 : vector<1x128x384xbf16> to vector<128x384xbf16>
    %cst_79 = arith.constant dense<0.000000e+00> : vector<8x384xf32>
    %219 = tpu.matmul %216, %218, %cst_79 {dimension_numbers = #tpu.dot_dimension_numbers<[1], [0], [0], [1], [0, 0, 1, 1], [], []>} : vector<8x128xbf16>, vector<128x384xbf16>, vector<8x384xf32> -> vector<8x384xf32>
    %c1_80 = arith.constant 1 : index
    %c0_81 = arith.constant 0 : index
    %220 = vector.load %arg7[%c1_80, %c0_81] : memref<2x384xf32, #tpu.memory_space<vmem>>, vector<1x384xf32>
    %221 = vector.broadcast %220 : vector<1x384xf32> to vector<8x384xf32>
    %222 = arith.addf %219, %221 : vector<8x384xf32>
    %223 = vector.extract_strided_slice %222 {offsets = [0, 0], sizes = [8, 8], strides = [1, 1]} : vector<8x384xf32> to vector<8x8xf32>
    %224 = arith.truncf %223 : vector<8x8xf32> to vector<8x8xbf16>
    %225 = vector.extract_strided_slice %222 {offsets = [0, 128], sizes = [8, 8], strides = [1, 1]} : vector<8x384xf32> to vector<8x8xf32>
    %226 = arith.truncf %225 : vector<8x8xf32> to vector<8x8xbf16>
    %227 = vector.extract_strided_slice %222 {offsets = [0, 256], sizes = [8, 8], strides = [1, 1]} : vector<8x384xf32> to vector<8x8xf32>
    %228 = arith.truncf %227 : vector<8x8xf32> to vector<8x8xbf16>
    %cst_82 = arith.constant dense<0.000000e+00> : vector<8x8xf32>
    %229 = tpu.matmul %224, %226, %cst_82 {dimension_numbers = #tpu.dot_dimension_numbers<[1], [1], [0], [0], [0, 0, 1, 0], [], []>} : vector<8x8xbf16>, vector<8x8xbf16>, vector<8x8xf32> -> vector<8x8xf32>
    %230 = arith.addf %229, %24 : vector<8x8xf32>
    %cst_83 = arith.constant dense<0xFF800000> : vector<8xf32>
    %231 = vector.multi_reduction <maximumf>, %230, %cst_83 [1] : vector<8x8xf32> to vector<8xf32>
    %232 = vector.shape_cast %231 : vector<8xf32> to vector<8x1xf32>
    %233 = vector.broadcast %232 : vector<8x1xf32> to vector<8x8xf32>
    %234 = arith.subf %230, %233 : vector<8x8xf32>
    %235 = math.exp %234 : vector<8x8xf32>
    %cst_84 = arith.constant dense<0.000000e+00> : vector<8xf32>
    %236 = vector.multi_reduction <add>, %235, %cst_84 [1] : vector<8x8xf32> to vector<8xf32>
    %237 = vector.shape_cast %236 : vector<8xf32> to vector<8x1xf32>
    %238 = tpu.reciprocal %237 {approx = true} : vector<8x1xf32> -> vector<8x1xf32>
    %239 = vector.broadcast %238 : vector<8x1xf32> to vector<8x8xf32>
    %240 = arith.mulf %235, %239 : vector<8x8xf32>
    %241 = arith.truncf %240 : vector<8x8xf32> to vector<8x8xbf16>
    %cst_85 = arith.constant dense<0.000000e+00> : vector<8x8xf32>
    %242 = tpu.matmul %241, %228, %cst_85 {dimension_numbers = #tpu.dot_dimension_numbers<[1], [0], [0], [1], [0, 0, 1, 1], [], []>} : vector<8x8xbf16>, vector<8x8xbf16>, vector<8x8xf32> -> vector<8x8xf32>
    %243 = vector.extract_strided_slice %222 {offsets = [0, 8], sizes = [8, 8], strides = [1, 1]} : vector<8x384xf32> to vector<8x8xf32>
    %244 = arith.truncf %243 : vector<8x8xf32> to vector<8x8xbf16>
    %245 = vector.extract_strided_slice %222 {offsets = [0, 136], sizes = [8, 8], strides = [1, 1]} : vector<8x384xf32> to vector<8x8xf32>
    %246 = arith.truncf %245 : vector<8x8xf32> to vector<8x8xbf16>
    %247 = vector.extract_strided_slice %222 {offsets = [0, 264], sizes = [8, 8], strides = [1, 1]} : vector<8x384xf32> to vector<8x8xf32>
    %248 = arith.truncf %247 : vector<8x8xf32> to vector<8x8xbf16>
    %cst_86 = arith.constant dense<0.000000e+00> : vector<8x8xf32>
    %249 = tpu.matmul %244, %246, %cst_86 {dimension_numbers = #tpu.dot_dimension_numbers<[1], [1], [0], [0], [0, 0, 1, 0], [], []>} : vector<8x8xbf16>, vector<8x8xbf16>, vector<8x8xf32> -> vector<8x8xf32>
    %250 = arith.addf %249, %24 : vector<8x8xf32>
    %cst_87 = arith.constant dense<0xFF800000> : vector<8xf32>
    %251 = vector.multi_reduction <maximumf>, %250, %cst_87 [1] : vector<8x8xf32> to vector<8xf32>
    %252 = vector.shape_cast %251 : vector<8xf32> to vector<8x1xf32>
    %253 = vector.broadcast %252 : vector<8x1xf32> to vector<8x8xf32>
    %254 = arith.subf %250, %253 : vector<8x8xf32>
    %255 = math.exp %254 : vector<8x8xf32>
    %cst_88 = arith.constant dense<0.000000e+00> : vector<8xf32>
    %256 = vector.multi_reduction <add>, %255, %cst_88 [1] : vector<8x8xf32> to vector<8xf32>
    %257 = vector.shape_cast %256 : vector<8xf32> to vector<8x1xf32>
    %258 = tpu.reciprocal %257 {approx = true} : vector<8x1xf32> -> vector<8x1xf32>
    %259 = vector.broadcast %258 : vector<8x1xf32> to vector<8x8xf32>
    %260 = arith.mulf %255, %259 : vector<8x8xf32>
    %261 = arith.truncf %260 : vector<8x8xf32> to vector<8x8xbf16>
    %cst_89 = arith.constant dense<0.000000e+00> : vector<8x8xf32>
    %262 = tpu.matmul %261, %248, %cst_89 {dimension_numbers = #tpu.dot_dimension_numbers<[1], [0], [0], [1], [0, 0, 1, 1], [], []>} : vector<8x8xbf16>, vector<8x8xbf16>, vector<8x8xf32> -> vector<8x8xf32>
    %263 = vector.extract_strided_slice %222 {offsets = [0, 16], sizes = [8, 8], strides = [1, 1]} : vector<8x384xf32> to vector<8x8xf32>
    %264 = arith.truncf %263 : vector<8x8xf32> to vector<8x8xbf16>
    %265 = vector.extract_strided_slice %222 {offsets = [0, 144], sizes = [8, 8], strides = [1, 1]} : vector<8x384xf32> to vector<8x8xf32>
    %266 = arith.truncf %265 : vector<8x8xf32> to vector<8x8xbf16>
    %267 = vector.extract_strided_slice %222 {offsets = [0, 272], sizes = [8, 8], strides = [1, 1]} : vector<8x384xf32> to vector<8x8xf32>
    %268 = arith.truncf %267 : vector<8x8xf32> to vector<8x8xbf16>
    %cst_90 = arith.constant dense<0.000000e+00> : vector<8x8xf32>
    %269 = tpu.matmul %264, %266, %cst_90 {dimension_numbers = #tpu.dot_dimension_numbers<[1], [1], [0], [0], [0, 0, 1, 0], [], []>} : vector<8x8xbf16>, vector<8x8xbf16>, vector<8x8xf32> -> vector<8x8xf32>
    %270 = arith.addf %269, %24 : vector<8x8xf32>
    %cst_91 = arith.constant dense<0xFF800000> : vector<8xf32>
    %271 = vector.multi_reduction <maximumf>, %270, %cst_91 [1] : vector<8x8xf32> to vector<8xf32>
    %272 = vector.shape_cast %271 : vector<8xf32> to vector<8x1xf32>
    %273 = vector.broadcast %272 : vector<8x1xf32> to vector<8x8xf32>
    %274 = arith.subf %270, %273 : vector<8x8xf32>
    %275 = math.exp %274 : vector<8x8xf32>
    %cst_92 = arith.constant dense<0.000000e+00> : vector<8xf32>
    %276 = vector.multi_reduction <add>, %275, %cst_92 [1] : vector<8x8xf32> to vector<8xf32>
    %277 = vector.shape_cast %276 : vector<8xf32> to vector<8x1xf32>
    %278 = tpu.reciprocal %277 {approx = true} : vector<8x1xf32> -> vector<8x1xf32>
    %279 = vector.broadcast %278 : vector<8x1xf32> to vector<8x8xf32>
    %280 = arith.mulf %275, %279 : vector<8x8xf32>
    %281 = arith.truncf %280 : vector<8x8xf32> to vector<8x8xbf16>
    %cst_93 = arith.constant dense<0.000000e+00> : vector<8x8xf32>
    %282 = tpu.matmul %281, %268, %cst_93 {dimension_numbers = #tpu.dot_dimension_numbers<[1], [0], [0], [1], [0, 0, 1, 1], [], []>} : vector<8x8xbf16>, vector<8x8xbf16>, vector<8x8xf32> -> vector<8x8xf32>
    %283 = vector.extract_strided_slice %222 {offsets = [0, 24], sizes = [8, 8], strides = [1, 1]} : vector<8x384xf32> to vector<8x8xf32>
    %284 = arith.truncf %283 : vector<8x8xf32> to vector<8x8xbf16>
    %285 = vector.extract_strided_slice %222 {offsets = [0, 152], sizes = [8, 8], strides = [1, 1]} : vector<8x384xf32> to vector<8x8xf32>
    %286 = arith.truncf %285 : vector<8x8xf32> to vector<8x8xbf16>
    %287 = vector.extract_strided_slice %222 {offsets = [0, 280], sizes = [8, 8], strides = [1, 1]} : vector<8x384xf32> to vector<8x8xf32>
    %288 = arith.truncf %287 : vector<8x8xf32> to vector<8x8xbf16>
    %cst_94 = arith.constant dense<0.000000e+00> : vector<8x8xf32>
    %289 = tpu.matmul %284, %286, %cst_94 {dimension_numbers = #tpu.dot_dimension_numbers<[1], [1], [0], [0], [0, 0, 1, 0], [], []>} : vector<8x8xbf16>, vector<8x8xbf16>, vector<8x8xf32> -> vector<8x8xf32>
    %290 = arith.addf %289, %24 : vector<8x8xf32>
    %cst_95 = arith.constant dense<0xFF800000> : vector<8xf32>
    %291 = vector.multi_reduction <maximumf>, %290, %cst_95 [1] : vector<8x8xf32> to vector<8xf32>
    %292 = vector.shape_cast %291 : vector<8xf32> to vector<8x1xf32>
    %293 = vector.broadcast %292 : vector<8x1xf32> to vector<8x8xf32>
    %294 = arith.subf %290, %293 : vector<8x8xf32>
    %295 = math.exp %294 : vector<8x8xf32>
    %cst_96 = arith.constant dense<0.000000e+00> : vector<8xf32>
    %296 = vector.multi_reduction <add>, %295, %cst_96 [1] : vector<8x8xf32> to vector<8xf32>
    %297 = vector.shape_cast %296 : vector<8xf32> to vector<8x1xf32>
    %298 = tpu.reciprocal %297 {approx = true} : vector<8x1xf32> -> vector<8x1xf32>
    %299 = vector.broadcast %298 : vector<8x1xf32> to vector<8x8xf32>
    %300 = arith.mulf %295, %299 : vector<8x8xf32>
    %301 = arith.truncf %300 : vector<8x8xf32> to vector<8x8xbf16>
    %cst_97 = arith.constant dense<0.000000e+00> : vector<8x8xf32>
    %302 = tpu.matmul %301, %288, %cst_97 {dimension_numbers = #tpu.dot_dimension_numbers<[1], [0], [0], [1], [0, 0, 1, 1], [], []>} : vector<8x8xbf16>, vector<8x8xbf16>, vector<8x8xf32> -> vector<8x8xf32>
    %303 = tpu.concatenate %242, %262, %282, %302 in 1 : vector<8x8xf32>, vector<8x8xf32>, vector<8x8xf32>, vector<8x8xf32> -> vector<8x32xf32>
    %304 = arith.truncf %303 : vector<8x32xf32> to vector<8x32xbf16>
    %c1_98 = arith.constant 1 : index
    %c0_99 = arith.constant 0 : index
    %c0_100 = arith.constant 0 : index
    %305 = vector.load %arg8[%c1_98, %c0_99, %c0_100] : memref<2x32x128xbf16, #tpu.memory_space<vmem>>, vector<1x32x128xbf16>
    %306 = vector.shape_cast %305 : vector<1x32x128xbf16> to vector<32x128xbf16>
    %cst_101 = arith.constant dense<0.000000e+00> : vector<8x128xf32>
    %307 = tpu.matmul %304, %306, %cst_101 {dimension_numbers = #tpu.dot_dimension_numbers<[1], [0], [0], [1], [0, 0, 1, 1], [], []>} : vector<8x32xbf16>, vector<32x128xbf16>, vector<8x128xf32> -> vector<8x128xf32>
    %308 = arith.addf %189, %307 : vector<8x128xf32>
    %c1_102 = arith.constant 1 : index
    %c0_103 = arith.constant 0 : index
    %309 = vector.load %arg9[%c1_102, %c0_103] : memref<2x128xf32, #tpu.memory_space<vmem>>, vector<1x128xf32>
    %310 = vector.broadcast %309 : vector<1x128xf32> to vector<8x128xf32>
    %311 = arith.addf %308, %310 : vector<8x128xf32>
    %c3 = arith.constant 3 : index
    %c0_104 = arith.constant 0 : index
    %312 = vector.load %arg4[%c3, %c0_104] : memref<5x128xf32, #tpu.memory_space<vmem>>, vector<1x128xf32>
    %c3_105 = arith.constant 3 : index
    %c0_106 = arith.constant 0 : index
    %313 = vector.load %arg5[%c3_105, %c0_106] : memref<5x128xf32, #tpu.memory_space<vmem>>, vector<1x128xf32>
    %314 = vector.broadcast %4 : vector<1x128xf32> to vector<8x128xf32>
    %315 = arith.mulf %311, %314 : vector<8x128xf32>
    %cst_107 = arith.constant dense<0.000000e+00> : vector<8xf32>
    %316 = vector.multi_reduction <add>, %315, %cst_107 [1] : vector<8x128xf32> to vector<8xf32>
    %317 = vector.shape_cast %316 : vector<8xf32> to vector<8x1xf32>
    %cst_108 = arith.constant 3.125000e-02 : f32
    %318 = vector.broadcast %cst_108 : f32 to vector<8x1xf32>
    %319 = arith.mulf %317, %318 : vector<8x1xf32>
    %320 = vector.broadcast %319 : vector<8x1xf32> to vector<8x128xf32>
    %321 = arith.subf %311, %320 : vector<8x128xf32>
    %322 = vector.broadcast %4 : vector<1x128xf32> to vector<8x128xf32>
    %323 = arith.mulf %321, %322 : vector<8x128xf32>
    %324 = arith.mulf %323, %323 : vector<8x128xf32>
    %cst_109 = arith.constant dense<0.000000e+00> : vector<8xf32>
    %325 = vector.multi_reduction <add>, %324, %cst_109 [1] : vector<8x128xf32> to vector<8xf32>
    %326 = vector.shape_cast %325 : vector<8xf32> to vector<8x1xf32>
    %cst_110 = arith.constant 3.125000e-02 : f32
    %327 = vector.broadcast %cst_110 : f32 to vector<8x1xf32>
    %328 = arith.mulf %326, %327 : vector<8x1xf32>
    %cst_111 = arith.constant 9.99999974E-6 : f32
    %329 = vector.broadcast %cst_111 : f32 to vector<8x1xf32>
    %330 = arith.addf %328, %329 : vector<8x1xf32>
    %331 = math.rsqrt %330 : vector<8x1xf32>
    %332 = vector.broadcast %331 : vector<8x1xf32> to vector<8x128xf32>
    %333 = arith.mulf %323, %332 : vector<8x128xf32>
    %334 = vector.broadcast %312 : vector<1x128xf32> to vector<8x128xf32>
    %335 = arith.mulf %333, %334 : vector<8x128xf32>
    %336 = vector.broadcast %313 : vector<1x128xf32> to vector<8x128xf32>
    %337 = arith.addf %335, %336 : vector<8x128xf32>
    %338 = arith.truncf %337 : vector<8x128xf32> to vector<8x128xbf16>
    %c1_112 = arith.constant 1 : index
    %c0_113 = arith.constant 0 : index
    %c0_114 = arith.constant 0 : index
    %339 = vector.load %arg10[%c1_112, %c0_113, %c0_114] : memref<2x128x128xbf16, #tpu.memory_space<vmem>>, vector<1x128x128xbf16>
    %340 = vector.shape_cast %339 : vector<1x128x128xbf16> to vector<128x128xbf16>
    %cst_115 = arith.constant dense<0.000000e+00> : vector<8x128xf32>
    %341 = tpu.matmul %338, %340, %cst_115 {dimension_numbers = #tpu.dot_dimension_numbers<[1], [0], [0], [1], [0, 0, 1, 1], [], []>} : vector<8x128xbf16>, vector<128x128xbf16>, vector<8x128xf32> -> vector<8x128xf32>
    %c1_116 = arith.constant 1 : index
    %c0_117 = arith.constant 0 : index
    %342 = vector.load %arg11[%c1_116, %c0_117] : memref<2x128xf32, #tpu.memory_space<vmem>>, vector<1x128xf32>
    %343 = vector.broadcast %342 : vector<1x128xf32> to vector<8x128xf32>
    %344 = arith.addf %341, %343 : vector<8x128xf32>
    %cst_118 = arith.constant 0.000000e+00 : f32
    %345 = vector.broadcast %cst_118 : f32 to vector<8x128xf32>
    %346 = arith.maximumf %344, %345 : vector<8x128xf32>
    %347 = arith.truncf %346 : vector<8x128xf32> to vector<8x128xbf16>
    %c1_119 = arith.constant 1 : index
    %c0_120 = arith.constant 0 : index
    %c0_121 = arith.constant 0 : index
    %348 = vector.load %arg12[%c1_119, %c0_120, %c0_121] : memref<2x128x128xbf16, #tpu.memory_space<vmem>>, vector<1x128x128xbf16>
    %349 = vector.shape_cast %348 : vector<1x128x128xbf16> to vector<128x128xbf16>
    %cst_122 = arith.constant dense<0.000000e+00> : vector<8x128xf32>
    %350 = tpu.matmul %347, %349, %cst_122 {dimension_numbers = #tpu.dot_dimension_numbers<[1], [0], [0], [1], [0, 0, 1, 1], [], []>} : vector<8x128xbf16>, vector<128x128xbf16>, vector<8x128xf32> -> vector<8x128xf32>
    %351 = arith.addf %311, %350 : vector<8x128xf32>
    %c1_123 = arith.constant 1 : index
    %c0_124 = arith.constant 0 : index
    %352 = vector.load %arg13[%c1_123, %c0_124] : memref<2x128xf32, #tpu.memory_space<vmem>>, vector<1x128xf32>
    %353 = vector.broadcast %352 : vector<1x128xf32> to vector<8x128xf32>
    %354 = arith.addf %351, %353 : vector<8x128xf32>
    %c4 = arith.constant 4 : index
    %c0_125 = arith.constant 0 : index
    %355 = vector.load %arg4[%c4, %c0_125] : memref<5x128xf32, #tpu.memory_space<vmem>>, vector<1x128xf32>
    %c4_126 = arith.constant 4 : index
    %c0_127 = arith.constant 0 : index
    %356 = vector.load %arg5[%c4_126, %c0_127] : memref<5x128xf32, #tpu.memory_space<vmem>>, vector<1x128xf32>
    %357 = vector.broadcast %4 : vector<1x128xf32> to vector<8x128xf32>
    %358 = arith.mulf %354, %357 : vector<8x128xf32>
    %cst_128 = arith.constant dense<0.000000e+00> : vector<8xf32>
    %359 = vector.multi_reduction <add>, %358, %cst_128 [1] : vector<8x128xf32> to vector<8xf32>
    %360 = vector.shape_cast %359 : vector<8xf32> to vector<8x1xf32>
    %cst_129 = arith.constant 3.125000e-02 : f32
    %361 = vector.broadcast %cst_129 : f32 to vector<8x1xf32>
    %362 = arith.mulf %360, %361 : vector<8x1xf32>
    %363 = vector.broadcast %362 : vector<8x1xf32> to vector<8x128xf32>
    %364 = arith.subf %354, %363 : vector<8x128xf32>
    %365 = vector.broadcast %4 : vector<1x128xf32> to vector<8x128xf32>
    %366 = arith.mulf %364, %365 : vector<8x128xf32>
    %367 = arith.mulf %366, %366 : vector<8x128xf32>
    %cst_130 = arith.constant dense<0.000000e+00> : vector<8xf32>
    %368 = vector.multi_reduction <add>, %367, %cst_130 [1] : vector<8x128xf32> to vector<8xf32>
    %369 = vector.shape_cast %368 : vector<8xf32> to vector<8x1xf32>
    %cst_131 = arith.constant 3.125000e-02 : f32
    %370 = vector.broadcast %cst_131 : f32 to vector<8x1xf32>
    %371 = arith.mulf %369, %370 : vector<8x1xf32>
    %cst_132 = arith.constant 9.99999974E-6 : f32
    %372 = vector.broadcast %cst_132 : f32 to vector<8x1xf32>
    %373 = arith.addf %371, %372 : vector<8x1xf32>
    %374 = math.rsqrt %373 : vector<8x1xf32>
    %375 = vector.broadcast %374 : vector<8x1xf32> to vector<8x128xf32>
    %376 = arith.mulf %366, %375 : vector<8x128xf32>
    %377 = vector.broadcast %355 : vector<1x128xf32> to vector<8x128xf32>
    %378 = arith.mulf %376, %377 : vector<8x128xf32>
    %379 = vector.broadcast %356 : vector<1x128xf32> to vector<8x128xf32>
    %380 = arith.addf %378, %379 : vector<8x128xf32>
    %381 = arith.truncf %380 : vector<8x128xf32> to vector<8x128xbf16>
    %c0_133 = arith.constant 0 : index
    %c0_134 = arith.constant 0 : index
    %382 = vector.load %arg14[%c0_133, %c0_134] : memref<128x128xbf16, #tpu.memory_space<vmem>>, vector<128x128xbf16>
    %cst_135 = arith.constant dense<0.000000e+00> : vector<8x128xf32>
    %383 = tpu.matmul %381, %382, %cst_135 {dimension_numbers = #tpu.dot_dimension_numbers<[1], [0], [0], [1], [0, 0, 1, 1], [], []>} : vector<8x128xbf16>, vector<128x128xbf16>, vector<8x128xf32> -> vector<8x128xf32>
    %c0_136 = arith.constant 0 : index
    %c0_137 = arith.constant 0 : index
    %384 = vector.load %arg15[%c0_136, %c0_137] : memref<1x128xf32, #tpu.memory_space<vmem>>, vector<1x128xf32>
    %385 = vector.broadcast %384 : vector<1x128xf32> to vector<8x128xf32>
    %386 = arith.addf %383, %385 : vector<8x128xf32>
    %c0_138 = arith.constant 0 : index
    %c0_139 = arith.constant 0 : index
    %387 = vector.load %arg16[%c0_138, %c0_139] : memref<8x128xf32, #tpu.memory_space<vmem>>, vector<8x128xf32>
    tpu.vector_store %arg16[%c0_138, %c0_139], %386 {strides = array<i32>} : memref<8x128xf32, #tpu.memory_space<vmem>>, vector<8x128xf32>,
    return
  }
  func.func @transform_0(%arg0: i32) -> (i32, i32) {
    %c0_i32 = arith.constant 0 : i32
    %c0_i32_0 = arith.constant 0 : i32
    return %arg0, %c0_i32 : i32, i32
  }
  func.func @transform_1(%arg0: i32) -> (i32, i32) {
    %c0_i32 = arith.constant 0 : i32
    %c0_i32_0 = arith.constant 0 : i32
    return %arg0, %c0_i32 : i32, i32
  }
  func.func @transform_2(%arg0: i32) -> (i32, i32) {
    %c0_i32 = arith.constant 0 : i32
    %c0_i32_0 = arith.constant 0 : i32
    %c0_i32_1 = arith.constant 0 : i32
    return %c0_i32, %c0_i32_0 : i32, i32
  }
  func.func @transform_3(%arg0: i32) -> (i32, i32) {
    %c0_i32 = arith.constant 0 : i32
    %c0_i32_0 = arith.constant 0 : i32
    %c0_i32_1 = arith.constant 0 : i32
    return %c0_i32, %c0_i32_0 : i32, i32
  }
  func.func @transform_4(%arg0: i32) -> (i32, i32) {
    %c0_i32 = arith.constant 0 : i32
    %c0_i32_0 = arith.constant 0 : i32
    %c0_i32_1 = arith.constant 0 : i32
    return %c0_i32, %c0_i32_0 : i32, i32
  }
  func.func @transform_5(%arg0: i32) -> (i32, i32, i32) {
    %c0_i32 = arith.constant 0 : i32
    %c0_i32_0 = arith.constant 0 : i32
    %c0_i32_1 = arith.constant 0 : i32
    %c0_i32_2 = arith.constant 0 : i32
    return %c0_i32, %c0_i32_0, %c0_i32_1 : i32, i32, i32
  }
  func.func @transform_6(%arg0: i32) -> (i32, i32) {
    %c0_i32 = arith.constant 0 : i32
    %c0_i32_0 = arith.constant 0 : i32
    %c0_i32_1 = arith.constant 0 : i32
    return %c0_i32, %c0_i32_0 : i32, i32
  }
  func.func @transform_7(%arg0: i32) -> (i32, i32, i32) {
    %c0_i32 = arith.constant 0 : i32
    %c0_i32_0 = arith.constant 0 : i32
    %c0_i32_1 = arith.constant 0 : i32
    %c0_i32_2 = arith.constant 0 : i32
    return %c0_i32, %c0_i32_0, %c0_i32_1 : i32, i32, i32
  }
  func.func @transform_8(%arg0: i32) -> (i32, i32) {
    %c0_i32 = arith.constant 0 : i32
    %c0_i32_0 = arith.constant 0 : i32
    %c0_i32_1 = arith.constant 0 : i32
    return %c0_i32, %c0_i32_0 : i32, i32
  }
  func.func @transform_9(%arg0: i32) -> (i32, i32, i32) {
    %c0_i32 = arith.constant 0 : i32
    %c0_i32_0 = arith.constant 0 : i32
    %c0_i32_1 = arith.constant 0 : i32
    %c0_i32_2 = arith.constant 0 : i32
    return %c0_i32, %c0_i32_0, %c0_i32_1 : i32, i32, i32
  }
  func.func @transform_10(%arg0: i32) -> (i32, i32) {
    %c0_i32 = arith.constant 0 : i32
    %c0_i32_0 = arith.constant 0 : i32
    %c0_i32_1 = arith.constant 0 : i32
    return %c0_i32, %c0_i32_0 : i32, i32
  }
  func.func @transform_11(%arg0: i32) -> (i32, i32, i32) {
    %c0_i32 = arith.constant 0 : i32
    %c0_i32_0 = arith.constant 0 : i32
    %c0_i32_1 = arith.constant 0 : i32
    %c0_i32_2 = arith.constant 0 : i32
    return %c0_i32, %c0_i32_0, %c0_i32_1 : i32, i32, i32
  }
  func.func @transform_12(%arg0: i32) -> (i32, i32) {
    %c0_i32 = arith.constant 0 : i32
    %c0_i32_0 = arith.constant 0 : i32
    %c0_i32_1 = arith.constant 0 : i32
    return %c0_i32, %c0_i32_0 : i32, i32
  }
  func.func @transform_13(%arg0: i32) -> (i32, i32) {
    %c0_i32 = arith.constant 0 : i32
    %c0_i32_0 = arith.constant 0 : i32
    %c0_i32_1 = arith.constant 0 : i32
    return %c0_i32, %c0_i32_0 : i32, i32
  }
  func.func @transform_14(%arg0: i32) -> (i32, i32) {
    %c0_i32 = arith.constant 0 : i32
    %c0_i32_0 = arith.constant 0 : i32
    %c0_i32_1 = arith.constant 0 : i32
    return %c0_i32, %c0_i32_0 : i32, i32
  }
  func.func @transform_15(%arg0: i32) -> (i32, i32) {
    %c0_i32 = arith.constant 0 : i32
    %c0_i32_0 = arith.constant 0 : i32
    return %c0_i32, %arg0 : i32, i32
  }
}

</mosaic_0001>

<llo_original>
// kernel: transformer_forward.1
$region0: #{transformer_forward.1}
  #allocation0 [shape = 'u32[]', space=smem, size = 0x4, offset = 0x4, fixed_abs, tag = 'smem constant byte address 0x4 - core index']
  #allocation1 [shape = 'u32[144,128]{1,0:T(1,128)}', space=vmem, size = 0x12000, scoped, tag = 'internal scratch']
  %s0 = inlined_call_operand.vmem [shape: s32[16,1], index: 0, kind: input, shape index: {}]
  %s1 = inlined_call_operand.vmem [shape: f32[16,128], index: 1, kind: input, shape index: {}]
  %s2 = inlined_call_operand.vmem [shape: bf16[128,128], index: 2, kind: input, shape index: {}]
  %s3 = inlined_call_operand.hbm [shape: f32[5,128], index: 3, kind: input, shape index: {}]
  %s4 = inlined_call_operand.hbm [shape: f32[5,128], index: 4, kind: input, shape index: {}]
  %s5 = inlined_call_operand.hbm [shape: bf16[2,128,384], index: 5, kind: input, shape index: {}]
  %s6 = inlined_call_operand.hbm [shape: f32[2,384], index: 6, kind: input, shape index: {}]
  %s7 = inlined_call_operand.vmem [shape: bf16[2,32,128], index: 7, kind: input, shape index: {}]
  %s8 = inlined_call_operand.vmem [shape: f32[2,128], index: 8, kind: input, shape index: {}]
  %s9 = inlined_call_operand.hbm [shape: bf16[2,128,128], index: 9, kind: input, shape index: {}]
  %s10 = inlined_call_operand.hbm [shape: f32[2,128], index: 10, kind: input, shape index: {}]
  %s11 = inlined_call_operand.hbm [shape: bf16[2,128,128], index: 11, kind: input, shape index: {}]
  %s12 = inlined_call_operand.hbm [shape: f32[2,128], index: 12, kind: input, shape index: {}]
  %s13 = inlined_call_operand.hbm [shape: bf16[128,128], index: 13, kind: input, shape index: {}]
  %s14 = inlined_call_operand.vmem [shape: f32[1,128], index: 14, kind: input, shape index: {}]
  %s15 = inlined_call_operand.vmem [shape: f32[8,256], index: 15, kind: output, shape index: {}]
  %s16 = sld [smem:[#allocation0]]
  $region129: #{transformer_forward.1} parent=0
    _
  %s18 = ssub.s32 1, %s16
  %s19 = scalar_select 0, %s18, %s16
  $region1: #{transformer_forward.1} parent=0
    #allocation2 [shape = 'u8[4096]{0}', space=vmem, size = 0x1000, scoped, tag = 'input window, operand 3, single buffered']
    #allocation3 [shape = 's32[2]{0}', space=sflag, size = 0x8, scoped, tag = 'scoped memory for transformer_forward.1']
    #allocation4 [shape = 'u8[4096]{0}', space=vmem, size = 0x1000, scoped, tag = 'input window, operand 4, single buffered']
    #allocation5 [shape = 's32[1]{0}', space=sflag, size = 0x4, scoped, tag = 'scoped memory for transformer_forward.1']
    #allocation6 [shape = 'u8[196608]{0}', space=vmem, size = 0x30000, scoped, tag = 'input window, operand 5, single buffered']
    #allocation7 [shape = 'u8[3072]{0}', space=vmem, size = 0xc00, scoped, tag = 'input window, operand 6, single buffered']
    #allocation8 [shape = 's32[1]{0}', space=sflag, size = 0x4, scoped, tag = 'scoped memory for transformer_forward.1']
    #allocation9 [shape = 'u8[65536]{0}', space=vmem, size = 0x10000, scoped, tag = 'input window, operand 9, single buffered']
    #allocation10 [shape = 'u8[1024]{0}', space=vmem, size = 0x400, scoped, tag = 'input window, operand 10, single buffered']
    #allocation11 [shape = 's32[1]{0}', space=sflag, size = 0x4, scoped, tag = 'scoped memory for transformer_forward.1']
    #allocation12 [shape = 'u8[65536]{0}', space=vmem, size = 0x10000, scoped, tag = 'input window, operand 11, single buffered']
    #allocation13 [shape = 'u8[1024]{0}', space=vmem, size = 0x400, scoped, tag = 'input window, operand 12, single buffered']
    #allocation14 [shape = 's32[1]{0}', space=sflag, size = 0x4, scoped, tag = 'scoped memory for transformer_forward.1']
    #allocation15 [shape = 'u8[32768]{0}', space=vmem, size = 0x8000, scoped, tag = 'input window, operand 13, single buffered']
    %20 = vsyncpa [#allocation3], 0
    %21 = vsyncpa [#allocation5], 0
    %22 = vsyncpa [#allocation8], 0
    %23 = vsyncpa [#allocation11], 0
    %24 = vsyncpa [#allocation14], 0
    loop: start=0, step=1, limit=4
    $region2: #{transformer_forward.1} parent=1 // loop_pre_header
      _
    $region3: #{transformer_forward.1} parent=1 // loop_header
      %s26 = sphi 0, %s30
      %p27 = scmp.ge.s32.totalorder %s26, 4
      %s36 = sphi 0, %s38
      %s39 = sphi 0, %s36
      %s40 = sphi 0, %s39
      %s56 = sphi 0, %s40
      %s62 = sphi 0, %s64
      %s65 = sphi 0, %s62
      %s66 = sphi 0, %s65
      %s82 = sphi 0, %s66
      %s86 = sphi 0, %s86
      %s88 = sphi 0, %s86
      %s89 = sphi 0, %s88
      %s103 = sphi 0, %s89
      %s107 = sphi 0, %s107
      %s109 = sphi 0, %s107
      %s110 = sphi 0, %s109
      %s124 = sphi 0, %s110
      %s128 = sphi 0, %s128
      %s130 = sphi 0, %s128
      %s131 = sphi 0, %s130
      %s145 = sphi 0, %s131
      %s149 = sphi 0, %s149
      %s151 = sphi 0, %s149
      %s152 = sphi 0, %s151
      %s166 = sphi 0, %s152
      %s170 = sphi 0, %s170
      %s172 = sphi 0, %s170
      %s173 = sphi 0, %s172
      %s187 = sphi 0, %s173
      %s191 = sphi 0, %s191
      %s193 = sphi 0, %s191
      %s194 = sphi 0, %s193
      %s208 = sphi 0, %s194
      %s212 = sphi 0, %s212
      %s214 = sphi 0, %s212
      %s215 = sphi 0, %s214
      %s229 = sphi 0, %s215
      %s233 = sphi 0, %s233
      %s235 = sphi 0, %s233
      %s236 = sphi 0, %s235
      %s250 = sphi 0, %s236
      %s254 = sphi 0, %s254
      %s256 = sphi 0, %s254
      %s257 = sphi 0, %s256
      %s271 = sphi 0, %s257
      %s275 = sphi 0, %s275
      %s277 = sphi 0, %s275
      %s278 = sphi 0, %s277
      %s292 = sphi 0, %s278
      %s296 = sphi 0, %s296
      %s298 = sphi 0, %s296
      %s299 = sphi 0, %s298
      %s313 = sphi 0, %s299
      %s317 = sphi 0, %s317
      %s319 = sphi 0, %s317
      %s320 = sphi 0, %s319
      %s334 = sphi 0, %s320
      %s338 = sphi 0, %s338
      %s340 = sphi 0, %s338
      %s341 = sphi 0, %s340
      %s355 = sphi 0, %s341
      %s361 = sphi 0, %s363
      %s364 = sphi 0, %s361
      %s365 = sphi 0, %s364
      %s381 = sphi 0, %s365
    $region4: #{transformer_forward.1} parent=1 // loop_header_branch
      %29 = sbr.rel (%p27) target = $region8
    $region5: #{transformer_forward.1} parent=1 // loop_body
      %s31 = ssub.s32 %s26, 1
      %s32 = ssub.s32 %s26, 2
      %s33 = sadd.s32 %s26, 1
      %s34 = ssub.s32 %s26, %s33
      %p35 = scmp.eq.s32.totalorder %s34, 0
      %s37 = sadd.s32 %s36, 1
      %s38 = scalar_select %p35, %s36, %s37
      %p41 = pneg %p35
      %p42 = scmp.eq.s32.totalorder %s26, 1
      %p43 = por %p41, %p42
      %p44 = scmp.ne.s32.totalorder %s36, %s39
      %p45 = scmp.eq.s32.totalorder %s26, 0
      %p46 = por %p44, %p45
      %p47 = scmp.ne.s32.totalorder %s36, %s39
      %p48 = scmp.eq.s32.totalorder %s31, 1
      %p49 = por %p47, %p48
      %p50 = scmp.ne.s32.totalorder %s39, %s40
      %p51 = scmp.eq.s32.totalorder %s31, 0
      %p52 = por %p50, %p51
      %p53 = scmp.ne.s32.totalorder %s39, %s40
      %p54 = scmp.eq.s32.totalorder %s32, 1
      %p55 = por %p53, %p54
      %p57 = scmp.ne.s32.totalorder %s40, %s56
      %p58 = scmp.eq.s32.totalorder %s32, 0
      %p59 = por %p57, %p58
      %s60 = ssub.s32 %s26, %s33
      %p61 = scmp.eq.s32.totalorder %s60, 0
      %s63 = sadd.s32 %s62, 1
      %s64 = scalar_select %p61, %s62, %s63
      %p67 = pneg %p61
      %p68 = scmp.eq.s32.totalorder %s26, 1
      %p69 = por %p67, %p68
      %p70 = scmp.ne.s32.totalorder %s62, %s65
      %p71 = scmp.eq.s32.totalorder %s26, 0
      %p72 = por %p70, %p71
      %p73 = scmp.ne.s32.totalorder %s62, %s65
      %p74 = scmp.eq.s32.totalorder %s31, 1
      %p75 = por %p73, %p74
      %p76 = scmp.ne.s32.totalorder %s65, %s66
      %p77 = scmp.eq.s32.totalorder %s31, 0
      %p78 = por %p76, %p77
      %p79 = scmp.ne.s32.totalorder %s65, %s66
      %p80 = scmp.eq.s32.totalorder %s32, 1
      %p81 = por %p79, %p80
      %p83 = scmp.ne.s32.totalorder %s66, %s82
      %p84 = scmp.eq.s32.totalorder %s32, 0
      %p85 = por %p83, %p84
      %s87 = sadd.s32 %s86, 1
      %p90 = scmp.eq.s32.totalorder %s26, 1
      %p91 = scmp.ne.s32.totalorder %s86, %s88
      %p92 = scmp.eq.s32.totalorder %s26, 0
      %p93 = por %p91, %p92
      %p94 = scmp.ne.s32.totalorder %s86, %s88
      %p95 = scmp.eq.s32.totalorder %s31, 1
      %p96 = por %p94, %p95
      %p97 = scmp.ne.s32.totalorder %s88, %s89
      %p98 = scmp.eq.s32.totalorder %s31, 0
      %p99 = por %p97, %p98
      %p100 = scmp.ne.s32.totalorder %s88, %s89
      %p101 = scmp.eq.s32.totalorder %s32, 1
      %p102 = por %p100, %p101
      %p104 = scmp.ne.s32.totalorder %s89, %s103
      %p105 = scmp.eq.s32.totalorder %s32, 0
      %p106 = por %p104, %p105
      %s108 = sadd.s32 %s107, 1
      %p111 = scmp.eq.s32.totalorder %s26, 1
      %p112 = scmp.ne.s32.totalorder %s107, %s109
      %p113 = scmp.eq.s32.totalorder %s26, 0
      %p114 = por %p112, %p113
      %p115 = scmp.ne.s32.totalorder %s107, %s109
      %p116 = scmp.eq.s32.totalorder %s31, 1
      %p117 = por %p115, %p116
      %p118 = scmp.ne.s32.totalorder %s109, %s110
      %p119 = scmp.eq.s32.totalorder %s31, 0
      %p120 = por %p118, %p119
      %p121 = scmp.ne.s32.totalorder %s109, %s110
      %p122 = scmp.eq.s32.totalorder %s32, 1
      %p123 = por %p121, %p122
      %p125 = scmp.ne.s32.totalorder %s110, %s124
      %p126 = scmp.eq.s32.totalorder %s32, 0
      %p127 = por %p125, %p126
      %s129 = sadd.s32 %s128, 1
      %p132 = scmp.eq.s32.totalorder %s26, 1
      %p133 = scmp.ne.s32.totalorder %s128, %s130
      %p134 = scmp.eq.s32.totalorder %s26, 0
      %p135 = por %p133, %p134
      %p136 = scmp.ne.s32.totalorder %s128, %s130
      %p137 = scmp.eq.s32.totalorder %s31, 1
      %p138 = por %p136, %p137
      %p139 = scmp.ne.s32.totalorder %s130, %s131
      %p140 = scmp.eq.s32.totalorder %s31, 0
      %p141 = por %p139, %p140
      %p142 = scmp.ne.s32.totalorder %s130, %s131
      %p143 = scmp.eq.s32.totalorder %s32, 1
      %p144 = por %p142, %p143
      %p146 = scmp.ne.s32.totalorder %s131, %s145
      %p147 = scmp.eq.s32.totalorder %s32, 0
      %p148 = por %p146, %p147
      %s150 = sadd.s32 %s149, 1
      %p153 = scmp.eq.s32.totalorder %s26, 1
      %p154 = scmp.ne.s32.totalorder %s149, %s151
      %p155 = scmp.eq.s32.totalorder %s26, 0
      %p156 = por %p154, %p155
      %p157 = scmp.ne.s32.totalorder %s149, %s151
      %p158 = scmp.eq.s32.totalorder %s31, 1
      %p159 = por %p157, %p158
      %p160 = scmp.ne.s32.totalorder %s151, %s152
      %p161 = scmp.eq.s32.totalorder %s31, 0
      %p162 = por %p160, %p161
      %p163 = scmp.ne.s32.totalorder %s151, %s152
      %p164 = scmp.eq.s32.totalorder %s32, 1
      %p165 = por %p163, %p164
      %p167 = scmp.ne.s32.totalorder %s152, %s166
      %p168 = scmp.eq.s32.totalorder %s32, 0
      %p169 = por %p167, %p168
      %s171 = sadd.s32 %s170, 1
      %p174 = scmp.eq.s32.totalorder %s26, 1
      %p175 = scmp.ne.s32.totalorder %s170, %s172
      %p176 = scmp.eq.s32.totalorder %s26, 0
      %p177 = por %p175, %p176
      %p178 = scmp.ne.s32.totalorder %s170, %s172
      %p179 = scmp.eq.s32.totalorder %s31, 1
      %p180 = por %p178, %p179
      %p181 = scmp.ne.s32.totalorder %s172, %s173
      %p182 = scmp.eq.s32.totalorder %s31, 0
      %p183 = por %p181, %p182
      %p184 = scmp.ne.s32.totalorder %s172, %s173
      %p185 = scmp.eq.s32.totalorder %s32, 1
      %p186 = por %p184, %p185
      %p188 = scmp.ne.s32.totalorder %s173, %s187
      %p189 = scmp.eq.s32.totalorder %s32, 0
      %p190 = por %p188, %p189
      %s192 = sadd.s32 %s191, 1
      %p195 = scmp.eq.s32.totalorder %s26, 1
      %p196 = scmp.ne.s32.totalorder %s191, %s193
      %p197 = scmp.eq.s32.totalorder %s26, 0
      %p198 = por %p196, %p197
      %p199 = scmp.ne.s32.totalorder %s191, %s193
      %p200 = scmp.eq.s32.totalorder %s31, 1
      %p201 = por %p199, %p200
      %p202 = scmp.ne.s32.totalorder %s193, %s194
      %p203 = scmp.eq.s32.totalorder %s31, 0
      %p204 = por %p202, %p203
      %p205 = scmp.ne.s32.totalorder %s193, %s194
      %p206 = scmp.eq.s32.totalorder %s32, 1
      %p207 = por %p205, %p206
      %p209 = scmp.ne.s32.totalorder %s194, %s208
      %p210 = scmp.eq.s32.totalorder %s32, 0
      %p211 = por %p209, %p210
      %s213 = sadd.s32 %s212, 1
      %p216 = scmp.eq.s32.totalorder %s26, 1
      %p217 = scmp.ne.s32.totalorder %s212, %s214
      %p218 = scmp.eq.s32.totalorder %s26, 0
      %p219 = por %p217, %p218
      %p220 = scmp.ne.s32.totalorder %s212, %s214
      %p221 = scmp.eq.s32.totalorder %s31, 1
      %p222 = por %p220, %p221
      %p223 = scmp.ne.s32.totalorder %s214, %s215
      %p224 = scmp.eq.s32.totalorder %s31, 0
      %p225 = por %p223, %p224
      %p226 = scmp.ne.s32.totalorder %s214, %s215
      %p227 = scmp.eq.s32.totalorder %s32, 1
      %p228 = por %p226, %p227
      %p230 = scmp.ne.s32.totalorder %s215, %s229
      %p231 = scmp.eq.s32.totalorder %s32, 0
      %p232 = por %p230, %p231
      %s234 = sadd.s32 %s233, 1
      %p237 = scmp.eq.s32.totalorder %s26, 1
      %p238 = scmp.ne.s32.totalorder %s233, %s235
      %p239 = scmp.eq.s32.totalorder %s26, 0
      %p240 = por %p238, %p239
      %p241 = scmp.ne.s32.totalorder %s233, %s235
      %p242 = scmp.eq.s32.totalorder %s31, 1
      %p243 = por %p241, %p242
      %p244 = scmp.ne.s32.totalorder %s235, %s236
      %p245 = scmp.eq.s32.totalorder %s31, 0
      %p246 = por %p244, %p245
      %p247 = scmp.ne.s32.totalorder %s235, %s236
      %p248 = scmp.eq.s32.totalorder %s32, 1
      %p249 = por %p247, %p248
      %p251 = scmp.ne.s32.totalorder %s236, %s250
      %p252 = scmp.eq.s32.totalorder %s32, 0
      %p253 = por %p251, %p252
      %s255 = sadd.s32 %s254, 1
      %p258 = scmp.eq.s32.totalorder %s26, 1
      %p259 = scmp.ne.s32.totalorder %s254, %s256
      %p260 = scmp.eq.s32.totalorder %s26, 0
      %p261 = por %p259, %p260
      %p262 = scmp.ne.s32.totalorder %s254, %s256
      %p263 = scmp.eq.s32.totalorder %s31, 1
      %p264 = por %p262, %p263
      %p265 = scmp.ne.s32.totalorder %s256, %s257
      %p266 = scmp.eq.s32.totalorder %s31, 0
      %p267 = por %p265, %p266
      %p268 = scmp.ne.s32.totalorder %s256, %s257
      %p269 = scmp.eq.s32.totalorder %s32, 1
      %p270 = por %p268, %p269
      %p272 = scmp.ne.s32.totalorder %s257, %s271
      %p273 = scmp.eq.s32.totalorder %s32, 0
      %p274 = por %p272, %p273
      %s276 = sadd.s32 %s275, 1
      %p279 = scmp.eq.s32.totalorder %s26, 1
      %p280 = scmp.ne.s32.totalorder %s275, %s277
      %p281 = scmp.eq.s32.totalorder %s26, 0
      %p282 = por %p280, %p281
      %p283 = scmp.ne.s32.totalorder %s275, %s277
      %p284 = scmp.eq.s32.totalorder %s31, 1
      %p285 = por %p283, %p284
      %p286 = scmp.ne.s32.totalorder %s277, %s278
      %p287 = scmp.eq.s32.totalorder %s31, 0
      %p288 = por %p286, %p287
      %p289 = scmp.ne.s32.totalorder %s277, %s278
      %p290 = scmp.eq.s32.totalorder %s32, 1
      %p291 = por %p289, %p290
      %p293 = scmp.ne.s32.totalorder %s278, %s292
      %p294 = scmp.eq.s32.totalorder %s32, 0
      %p295 = por %p293, %p294
      %s297 = sadd.s32 %s296, 1
      %p300 = scmp.eq.s32.totalorder %s26, 1
      %p301 = scmp.ne.s32.totalorder %s296, %s298
      %p302 = scmp.eq.s32.totalorder %s26, 0
      %p303 = por %p301, %p302
      %p304 = scmp.ne.s32.totalorder %s296, %s298
      %p305 = scmp.eq.s32.totalorder %s31, 1
      %p306 = por %p304, %p305
      %p307 = scmp.ne.s32.totalorder %s298, %s299
      %p308 = scmp.eq.s32.totalorder %s31, 0
      %p309 = por %p307, %p308
      %p310 = scmp.ne.s32.totalorder %s298, %s299
      %p311 = scmp.eq.s32.totalorder %s32, 1
      %p312 = por %p310, %p311
      %p314 = scmp.ne.s32.totalorder %s299, %s313
      %p315 = scmp.eq.s32.totalorder %s32, 0
      %p316 = por %p314, %p315
      %s318 = sadd.s32 %s317, 1
      %p321 = scmp.eq.s32.totalorder %s26, 1
      %p322 = scmp.ne.s32.totalorder %s317, %s319
      %p323 = scmp.eq.s32.totalorder %s26, 0
      %p324 = por %p322, %p323
      %p325 = scmp.ne.s32.totalorder %s317, %s319
      %p326 = scmp.eq.s32.totalorder %s31, 1
      %p327 = por %p325, %p326
      %p328 = scmp.ne.s32.totalorder %s319, %s320
      %p329 = scmp.eq.s32.totalorder %s31, 0
      %p330 = por %p328, %p329
      %p331 = scmp.ne.s32.totalorder %s319, %s320
      %p332 = scmp.eq.s32.totalorder %s32, 1
      %p333 = por %p331, %p332
      %p335 = scmp.ne.s32.totalorder %s320, %s334
      %p336 = scmp.eq.s32.totalorder %s32, 0
      %p337 = por %p335, %p336
      %s339 = sadd.s32 %s338, 1
      %p342 = scmp.eq.s32.totalorder %s26, 1
      %p343 = scmp.ne.s32.totalorder %s338, %s340
      %p344 = scmp.eq.s32.totalorder %s26, 0
      %p345 = por %p343, %p344
      %p346 = scmp.ne.s32.totalorder %s338, %s340
      %p347 = scmp.eq.s32.totalorder %s31, 1
      %p348 = por %p346, %p347
      %p349 = scmp.ne.s32.totalorder %s340, %s341
      %p350 = scmp.eq.s32.totalorder %s31, 0
      %p351 = por %p349, %p350
      %p352 = scmp.ne.s32.totalorder %s340, %s341
      %p353 = scmp.eq.s32.totalorder %s32, 1
      %p354 = por %p352, %p353
      %p356 = scmp.ne.s32.totalorder %s341, %s355
      %p357 = scmp.eq.s32.totalorder %s32, 0
      %p358 = por %p356, %p357
      %s359 = ssub.s32 %s26, %s33
      %p360 = scmp.eq.s32.totalorder %s359, 0
      %s362 = sadd.s32 %s361, 1
      %s363 = scalar_select %p360, %s361, %s362
      %p366 = pneg %p360
      %p367 = scmp.eq.s32.totalorder %s26, 1
      %p368 = por %p366, %p367
      %p369 = scmp.ne.s32.totalorder %s361, %s364
      %p370 = scmp.eq.s32.totalorder %s26, 0
      %p371 = por %p369, %p370
      %p372 = scmp.ne.s32.totalorder %s361, %s364
      %p373 = scmp.eq.s32.totalorder %s31, 1
      %p374 = por %p372, %p373
      %p375 = scmp.ne.s32.totalorder %s364, %s365
      %p376 = scmp.eq.s32.totalorder %s31, 0
      %p377 = por %p375, %p376
      %p378 = scmp.ne.s32.totalorder %s364, %s365
      %p379 = scmp.eq.s32.totalorder %s32, 1
      %p380 = por %p378, %p379
      %p382 = scmp.ne.s32.totalorder %s365, %s381
      %p383 = scmp.eq.s32.totalorder %s32, 0
      %p384 = por %p382, %p383
      %p385 = scmp.le.s32.totalorder 1, %s26
      %p386 = scmp.lt.s32.totalorder %s26, 3
      %p387 = pnand %p385, %p386
      %p388 = pneg %p387
      // Predicated region
      $region9: #{transformer_forward.1} parent=5 // pred_check
        _
      $region10: #{transformer_forward.1} parent=5 // pred_check_branch
        %390 = sbr.rel (%p387) target = $region12
      $region11: #{transformer_forward.1} parent=5 // pred_region
        %s391 = ssub.s32 %s26, 1
        // Predicated region
        $region13: #{transformer_forward.1} parent=11 // pred_check
          %p392 = pneg %p99
        $region14: #{transformer_forward.1} parent=11 // pred_check_branch
          %394 = sbr.rel (%p392) target = $region16
        $region15: #{transformer_forward.1} parent=11 // pred_region
          _
        $region16: #{transformer_forward.1} parent=11 // pred_fallthru
          _
        // Predicated region
        $region17: #{transformer_forward.1} parent=11 // pred_check
          %p395 = pneg %p120
        $region18: #{transformer_forward.1} parent=11 // pred_check_branch
          %397 = sbr.rel (%p395) target = $region20
        $region19: #{transformer_forward.1} parent=11 // pred_region
          %s399 = ssub.s32 128, 128
          %400 = vsyncadd [#allocation3], %s399
          %s402 = sshll.u32 [#allocation2], 4
          %s403 = int_to_ptr.vmem [resolvable:$true] %s402
          %405 = dma.hbm_to_vmem [thread:$0]  %s3, 128, %s403, [#allocation3]
        $region20: #{transformer_forward.1} parent=11 // pred_fallthru
          _
        // Predicated region
        $region21: #{transformer_forward.1} parent=11 // pred_check
          %p406 = pneg %p141
        $region22: #{transformer_forward.1} parent=11 // pred_check_branch
          %408 = sbr.rel (%p406) target = $region24
        $region23: #{transformer_forward.1} parent=11 // pred_region
          %s410 = ssub.s32 128, 128
          %411 = vsyncadd [#allocation5], %s410
          %s413 = sshll.u32 [#allocation4], 4
          %s414 = int_to_ptr.vmem [resolvable:$true] %s413
          %416 = dma.hbm_to_vmem [thread:$0]  %s4, 128, %s414, [#allocation5]
        $region24: #{transformer_forward.1} parent=11 // pred_fallthru
          _
        // Predicated region
        $region25: #{transformer_forward.1} parent=11 // pred_check
          %p417 = pneg %p162
        $region26: #{transformer_forward.1} parent=11 // pred_check_branch
          %419 = sbr.rel (%p417) target = $region28
        $region27: #{transformer_forward.1} parent=11 // pred_region
          %s421 = ssub.s32 6144, 6144
          %422 = vsyncadd [#allocation5], %s421
          %s423 = sshll.u32 [#allocation6], 4
          %s424 = int_to_ptr.vmem [resolvable:$true] %s423
          %429 = dma.hbm_to_vmem [thread:$0]  %s5, 6144, %s424, [#allocation5], 192, 192, 12
        $region28: #{transformer_forward.1} parent=11 // pred_fallthru
          _
        // Predicated region
        $region29: #{transformer_forward.1} parent=11 // pred_check
          %p430 = pneg %p183
        $region30: #{transformer_forward.1} parent=11 // pred_check_branch
          %432 = sbr.rel (%p430) target = $region32
        $region31: #{transformer_forward.1} parent=11 // pred_region
          %s434 = ssub.s32 96, 96
          %435 = vsyncadd [#allocation8], %s434
          %s437 = sshll.u32 [#allocation7], 4
          %s438 = int_to_ptr.vmem [resolvable:$true] %s437
          %440 = dma.hbm_to_vmem [thread:$0]  %s6, 96, %s438, [#allocation8]
        $region32: #{transformer_forward.1} parent=11 // pred_fallthru
          _
        // Predicated region
        $region33: #{transformer_forward.1} parent=11 // pred_check
          %p441 = pneg %p204
        $region34: #{transformer_forward.1} parent=11 // pred_check_branch
          %443 = sbr.rel (%p441) target = $region36
        $region35: #{transformer_forward.1} parent=11 // pred_region
          _
        $region36: #{transformer_forward.1} parent=11 // pred_fallthru
          _
        // Predicated region
        $region37: #{transformer_forward.1} parent=11 // pred_check
          %p444 = pneg %p225
        $region38: #{transformer_forward.1} parent=11 // pred_check_branch
          %446 = sbr.rel (%p444) target = $region40
        $region39: #{transformer_forward.1} parent=11 // pred_region
          _
        $region40: #{transformer_forward.1} parent=11 // pred_fallthru
          _
        // Predicated region
        $region41: #{transformer_forward.1} parent=11 // pred_check
          %p447 = pneg %p246
        $region42: #{transformer_forward.1} parent=11 // pred_check_branch
          %449 = sbr.rel (%p447) target = $region44
        $region43: #{transformer_forward.1} parent=11 // pred_region
          %s451 = ssub.s32 2048, 2048
          %452 = vsyncadd [#allocation8], %s451
          %s453 = sshll.u32 [#allocation9], 4
          %s454 = int_to_ptr.vmem [resolvable:$true] %s453
          %459 = dma.hbm_to_vmem [thread:$0]  %s9, 2048, %s454, [#allocation8], 64, 64, 4
        $region44: #{transformer_forward.1} parent=11 // pred_fallthru
          _
        // Predicated region
        $region45: #{transformer_forward.1} parent=11 // pred_check
          %p460 = pneg %p267
        $region46: #{transformer_forward.1} parent=11 // pred_check_branch
          %462 = sbr.rel (%p460) target = $region48
        $region47: #{transformer_forward.1} parent=11 // pred_region
          %s464 = ssub.s32 32, 32
          %465 = vsyncadd [#allocation11], %s464
          %s467 = sshll.u32 [#allocation10], 4
          %s468 = int_to_ptr.vmem [resolvable:$true] %s467
          %470 = dma.hbm_to_vmem [thread:$0]  %s10, 32, %s468, [#allocation11]
        $region48: #{transformer_forward.1} parent=11 // pred_fallthru
          _
        // Predicated region
        $region49: #{transformer_forward.1} parent=11 // pred_check
          %p471 = pneg %p288
        $region50: #{transformer_forward.1} parent=11 // pred_check_branch
          %473 = sbr.rel (%p471) target = $region52
        $region51: #{transformer_forward.1} parent=11 // pred_region
          %s475 = ssub.s32 2048, 2048
          %476 = vsyncadd [#allocation11], %s475
          %s477 = sshll.u32 [#allocation12], 4
          %s478 = int_to_ptr.vmem [resolvable:$true] %s477
          %483 = dma.hbm_to_vmem [thread:$0]  %s11, 2048, %s478, [#allocation11], 64, 64, 4
        $region52: #{transformer_forward.1} parent=11 // pred_fallthru
          _
        // Predicated region
        $region53: #{transformer_forward.1} parent=11 // pred_check
          %p484 = pneg %p309
        $region54: #{transformer_forward.1} parent=11 // pred_check_branch
          %486 = sbr.rel (%p484) target = $region56
        $region55: #{transformer_forward.1} parent=11 // pred_region
          %s488 = ssub.s32 32, 32
          %489 = vsyncadd [#allocation14], %s488
          %s491 = sshll.u32 [#allocation13], 4
          %s492 = int_to_ptr.vmem [resolvable:$true] %s491
          %494 = dma.hbm_to_vmem [thread:$0]  %s12, 32, %s492, [#allocation14]
        $region56: #{transformer_forward.1} parent=11 // pred_fallthru
          _
        // Predicated region
        $region57: #{transformer_forward.1} parent=11 // pred_check
          %p495 = pneg %p330
        $region58: #{transformer_forward.1} parent=11 // pred_check_branch
          %497 = sbr.rel (%p495) target = $region60
        $region59: #{transformer_forward.1} parent=11 // pred_region
          %s499 = ssub.s32 1024, 1024
          %500 = vsyncadd [#allocation14], %s499
          %s501 = sshll.u32 [#allocation15], 4
          %s502 = int_to_ptr.vmem [resolvable:$true] %s501
          %507 = dma.hbm_to_vmem [thread:$0]  %s13, 1024, %s502, [#allocation14], 64, 64, 4
        $region60: #{transformer_forward.1} parent=11 // pred_fallthru
          _
        // Predicated region
        $region61: #{transformer_forward.1} parent=11 // pred_check
          %p508 = pneg %p351
        $region62: #{transformer_forward.1} parent=11 // pred_check_branch
          %510 = sbr.rel (%p508) target = $region64
        $region63: #{transformer_forward.1} parent=11 // pred_region
          _
        $region64: #{transformer_forward.1} parent=11 // pred_fallthru
          _
      $region12: #{transformer_forward.1} parent=5 // pred_fallthru
        _
      %p511 = scmp.lt.s32.totalorder %s26, 2
      // Predicated region
      $region65: #{transformer_forward.1} parent=5 // pred_check
        %p512 = pneg %p511
      $region66: #{transformer_forward.1} parent=5 // pred_check_branch
        %514 = sbr.rel (%p512) target = $region68
      $region67: #{transformer_forward.1} parent=5 // pred_region
        // Predicated region
        $region69: #{transformer_forward.1} parent=67 // pred_check
          %p515 = pneg %p46
        $region70: #{transformer_forward.1} parent=67 // pred_check_branch
          %517 = sbr.rel (%p515) target = $region72
        $region71: #{transformer_forward.1} parent=67 // pred_region
          %p518 = scmp.lt.s32.totalorder %s26, 1
          %s519 = scalar_select %p518, %s26, 1
          %s520 = smul.addr %s519, 8
          %s521 = scalar_lea.vmem %s0, %s520
        $region72: #{transformer_forward.1} parent=67 // pred_fallthru
          _
        // Predicated region
        $region73: #{transformer_forward.1} parent=67 // pred_check
          %p522 = pneg %p72
        $region74: #{transformer_forward.1} parent=67 // pred_check_branch
          %524 = sbr.rel (%p522) target = $region76
        $region75: #{transformer_forward.1} parent=67 // pred_region
          %p525 = scmp.lt.s32.totalorder %s26, 1
          %s526 = scalar_select %p525, %s26, 1
          %s527 = smul.addr %s526, 8
          %s528 = scalar_lea.vmem %s1, %s527
        $region76: #{transformer_forward.1} parent=67 // pred_fallthru
          _
      $region68: #{transformer_forward.1} parent=5 // pred_fallthru
        _
      %p529 = scmp.le.s32.totalorder 1, %s26
      %p530 = scmp.lt.s32.totalorder %s26, 3
      %p531 = pnand %p529, %p530
      %p532 = pneg %p531
      // Predicated region
      $region77: #{transformer_forward.1} parent=5 // pred_check
        _
      $region78: #{transformer_forward.1} parent=5 // pred_check_branch
        %534 = sbr.rel (%p531) target = $region80
      $region79: #{transformer_forward.1} parent=5 // pred_region
        %s535 = ssub.s32 %s26, 1
        // Predicated region
        $region81: #{transformer_forward.1} parent=79 // pred_check
          %p536 = pneg %p120
        $region82: #{transformer_forward.1} parent=79 // pred_check_branch
          %538 = sbr.rel (%p536) target = $region84
        $region83: #{transformer_forward.1} parent=79 // pred_region
          %539 = dma.done [#allocation3], 128
        $region84: #{transformer_forward.1} parent=79 // pred_fallthru
          _
        // Predicated region
        $region85: #{transformer_forward.1} parent=79 // pred_check
          %p540 = pneg %p141
        $region86: #{transformer_forward.1} parent=79 // pred_check_branch
          %542 = sbr.rel (%p540) target = $region88
        $region87: #{transformer_forward.1} parent=79 // pred_region
          %543 = dma.done [#allocation5], 128
        $region88: #{transformer_forward.1} parent=79 // pred_fallthru
          _
        // Predicated region
        $region89: #{transformer_forward.1} parent=79 // pred_check
          %p544 = pneg %p162
        $region90: #{transformer_forward.1} parent=79 // pred_check_branch
          %546 = sbr.rel (%p544) target = $region92
        $region91: #{transformer_forward.1} parent=79 // pred_region
          %547 = dma.done [#allocation5], 6144
        $region92: #{transformer_forward.1} parent=79 // pred_fallthru
          _
        // Predicated region
        $region93: #{transformer_forward.1} parent=79 // pred_check
          %p548 = pneg %p183
        $region94: #{transformer_forward.1} parent=79 // pred_check_branch
          %550 = sbr.rel (%p548) target = $region96
        $region95: #{transformer_forward.1} parent=79 // pred_region
          %551 = dma.done [#allocation8], 96
        $region96: #{transformer_forward.1} parent=79 // pred_fallthru
          _
        // Predicated region
        $region97: #{transformer_forward.1} parent=79 // pred_check
          %p552 = pneg %p246
        $region98: #{transformer_forward.1} parent=79 // pred_check_branch
          %554 = sbr.rel (%p552) target = $region100
        $region99: #{transformer_forward.1} parent=79 // pred_region
          %555 = dma.done [#allocation8], 2048
        $region100: #{transformer_forward.1} parent=79 // pred_fallthru
          _
        // Predicated region
        $region101: #{transformer_forward.1} parent=79 // pred_check
          %p556 = pneg %p267
        $region102: #{transformer_forward.1} parent=79 // pred_check_branch
          %558 = sbr.rel (%p556) target = $region104
        $region103: #{transformer_forward.1} parent=79 // pred_region
          %559 = dma.done [#allocation11], 32
        $region104: #{transformer_forward.1} parent=79 // pred_fallthru
          _
        // Predicated region
        $region105: #{transformer_forward.1} parent=79 // pred_check
          %p560 = pneg %p288
        $region106: #{transformer_forward.1} parent=79 // pred_check_branch
          %562 = sbr.rel (%p560) target = $region108
        $region107: #{transformer_forward.1} parent=79 // pred_region
          %563 = dma.done [#allocation11], 2048
        $region108: #{transformer_forward.1} parent=79 // pred_fallthru
          _
        // Predicated region
        $region109: #{transformer_forward.1} parent=79 // pred_check
          %p564 = pneg %p309
        $region110: #{transformer_forward.1} parent=79 // pred_check_branch
          %566 = sbr.rel (%p564) target = $region112
        $region111: #{transformer_forward.1} parent=79 // pred_region
          %567 = dma.done [#allocation14], 32
        $region112: #{transformer_forward.1} parent=79 // pred_fallthru
          _
        // Predicated region
        $region113: #{transformer_forward.1} parent=79 // pred_check
          %p568 = pneg %p330
        $region114: #{transformer_forward.1} parent=79 // pred_check_branch
          %570 = sbr.rel (%p568) target = $region116
        $region115: #{transformer_forward.1} parent=79 // pred_region
          %571 = dma.done [#allocation14], 1024
        $region116: #{transformer_forward.1} parent=79 // pred_fallthru
          _
        %p572 = scmp.lt.s32.totalorder %s31, 1
        %s573 = scalar_select %p572, %s31, 1
        %s574 = smul.addr %s573, 8
        %s575 = scalar_lea.vmem %s0, %s574
        %p576 = pneg %p52
        %p577 = pneg %p49
        %p578 = scmp.lt.s32.totalorder %s31, 1
        %s579 = scalar_select %p578, %s31, 1
        %s580 = smul.addr %s579, 8
        %s581 = scalar_lea.vmem %s1, %s580
        %p582 = pneg %p78
        %p583 = pneg %p75
        %p584 = pneg %p99
        %p585 = pneg %p96
        %p586 = pneg %p120
        %p587 = pneg %p117
        %p588 = pneg %p141
        %p589 = pneg %p138
        %p590 = pneg %p162
        %p591 = pneg %p159
        %p592 = pneg %p183
        %p593 = pneg %p180
        %p594 = pneg %p204
        %p595 = pneg %p201
        %p596 = pneg %p225
        %p597 = pneg %p222
        %p598 = pneg %p246
        %p599 = pneg %p243
        %p600 = pneg %p267
        %p601 = pneg %p264
        %p602 = pneg %p288
        %p603 = pneg %p285
        %p604 = pneg %p309
        %p605 = pneg %p306
        %p606 = pneg %p330
        %p607 = pneg %p327
        %p608 = pneg %p351
        %p609 = pneg %p348
        %p610 = pneg %p377
        %p611 = pneg %p374
        %p612 = scmp.lt.s32.totalorder %s31, 1
        %s613 = scalar_select %p612, %s31, 1
        %s614 = smul.addr %s613, 8
        %s615 = scalar_lea.vmem %s15, %s614
        %p616 = scmp.lt.s32.totalorder %s31, 1
        %s617 = scalar_select %p616, %s31, 1
        %s618 = smul.addr %s617, 8
        %s619 = scalar_lea.vmem %s0, %s618
        %p620 = scmp.lt.s32.totalorder %s31, 1
        %s621 = scalar_select %p620, %s31, 1
        %s622 = smul.addr %s621, 8
        %s623 = scalar_lea.vmem %s1, %s622
        %p624 = scmp.lt.s32.totalorder %s31, 1
        %s625 = scalar_select %p624, %s31, 1
        %s626 = smul.addr %s625, 8
        %s627 = scalar_lea.vmem %s15, %s626
        %v629 = vlaneseq
        %v630 = vand.u32 %v629, 127
        %vm631 = vcmp.lt.s32.totalorder %v630, 32
        %v632 = vsel %vm631, 1, 0
        %v633 = vcvt.s32.f32 %v632
        %v634 = vld [vmem:[%s619] sm:$0xff]
        %635 = vset.pattern.permute.xlu0 0
        %636 = vperm.xlu0 %635, %v634
        %v637 = vpop.permute.xlu0 %636
        %vm638 = vcmp.eq.s32.totalorder %v630, %v637
        %v639 = vsel %vm638, 1.0, 0.0
        %v640 = vpack.c.bf16 %v639, %v639
        %v641 = vld [vmem:[%s2] sm:$0xf]
        %v642 = vld [vmem:[%s2 + $0x4] sm:$0xf]
        %v643 = vld [vmem:[%s2 + $0x8] sm:$0xf]
        %v644 = vld [vmem:[%s2 + $0xc] sm:$0xf]
        %v645 = vld [vmem:[%s2 + $0x10] sm:$0xf]
        %v646 = vld [vmem:[%s2 + $0x14] sm:$0xf]
        %v647 = vld [vmem:[%s2 + $0x18] sm:$0xf]
        %v648 = vld [vmem:[%s2 + $0x1c] sm:$0xf]
        %v649 = vld [vmem:[%s2 + $0x20] sm:$0xf]
        %v650 = vld [vmem:[%s2 + $0x24] sm:$0xf]
        %v651 = vld [vmem:[%s2 + $0x28] sm:$0xf]
        %v652 = vld [vmem:[%s2 + $0x2c] sm:$0xf]
        %v653 = vld [vmem:[%s2 + $0x30] sm:$0xf]
        %v654 = vld [vmem:[%s2 + $0x34] sm:$0xf]
        %v655 = vld [vmem:[%s2 + $0x38] sm:$0xf]
        %v656 = vld [vmem:[%s2 + $0x3c] sm:$0xf]
        %v673 = vunpack.c.l.b16 %v641
        %v674 = vunpack.c.l.b16 %v642
        %v675 = vunpack.c.l.b16 %v643
        %v676 = vunpack.c.l.b16 %v644
        %v677 = vunpack.c.l.b16 %v645
        %v678 = vunpack.c.l.b16 %v646
        %v679 = vunpack.c.l.b16 %v647
        %v680 = vunpack.c.l.b16 %v648
        %v681 = vunpack.c.l.b16 %v649
        %v682 = vunpack.c.l.b16 %v650
        %v683 = vunpack.c.l.b16 %v651
        %v684 = vunpack.c.l.b16 %v652
        %v685 = vunpack.c.l.b16 %v653
        %v686 = vunpack.c.l.b16 %v654
        %v687 = vunpack.c.l.b16 %v655
        %v688 = vunpack.c.l.b16 %v656
        %v689 = vpack.c.b16 %v674, %v673
        %v690 = vpack.c.b16 %v676, %v675
        %v691 = vpack.c.b16 %v678, %v677
        %v692 = vpack.c.b16 %v680, %v679
        %v693 = vpack.c.b16 %v682, %v681
        %v694 = vpack.c.b16 %v684, %v683
        %v695 = vpack.c.b16 %v686, %v685
        %v696 = vpack.c.b16 %v688, %v687
        %705 = vmatprep.subr.bf16.mxu0 0
        %706 = vmatpush1.bf16.msra.mxu0 %v689
        %707 = vmatprep.subr.bf16.mxu0 0
        %708 = vmatpush1.bf16.msra.mxu0 %v690
        %709 = vmatprep.subr.bf16.mxu0 0
        %710 = vmatpush1.bf16.msra.mxu0 %v691
        %711 = vmatprep.subr.bf16.mxu0 0
        %712 = vmatpush1.bf16.msra.mxu0 %v692
        %713 = vmatprep.subr.bf16.mxu0 0
        %714 = vmatpush1.bf16.msra.mxu0 %v693
        %715 = vmatprep.subr.bf16.mxu0 0
        %716 = vmatpush1.bf16.msra.mxu0 %v694
        %717 = vmatprep.subr.bf16.mxu0 0
        %718 = vmatpush1.bf16.msra.mxu0 %v695
        %719 = vmatprep.subr.bf16.mxu0 0
        %720 = vmatpush1.bf16.msra.mxu0 %v696
        %721 = vmatprep.subr.bf16.mxu0 0
        %722 = vmatpush1.bf16.msra.mxu0 0
        %723 = vmatprep.subr.bf16.mxu0 0
        %724 = vmatpush1.bf16.msra.mxu0 0
        %725 = vmatprep.subr.bf16.mxu0 0
        %726 = vmatpush1.bf16.msra.mxu0 0
        %727 = vmatprep.subr.bf16.mxu0 0
        %728 = vmatpush1.bf16.msra.mxu0 0
        %729 = vmatprep.subr.bf16.mxu0 0
        %730 = vmatpush1.bf16.msra.mxu0 0
        %731 = vmatprep.subr.bf16.mxu0 0
        %732 = vmatpush1.bf16.msra.mxu0 0
        %733 = vmatprep.subr.bf16.mxu0 0
        %734 = vmatpush1.bf16.msra.mxu0 0
        %735 = vmatprep.subr.bf16.mxu0 0
        %736 = vmatpush1.bf16.msra.mxu0 0
        %737 = vmatprep.mubr.bf16.mxu0 0
        %738 = vmatmul.mubr.bf16.gmra.mrb[0].mxu0 %v640
        %v739 = vpop.f32.mrb[0].mxu0
        %v740 = vadd.f32 0.0, %v739
        %v741 = vpop.f32.mrb[0].mxu0
        %v742 = vpop.f32.mrb[0].mxu0
        %v743 = vpop.f32.mrb[0].mxu0
        %744 = vdwg.mxu0
        %v745 = vmul.f32 %v740, 5.656854
        %v746 = vld [vmem:[%s623] sm:$0xff]
        %v747 = vadd.f32 %v745, %v746
        %v748 = vlaneseq
        %v749 = vshrl.u32 %v748, 7
        %vm750 = vcmp.le.s32.totalorder %v630, %v749
        %v751 = vsel %vm750, 0.0, -1e+30
        %v752 = vld [vmem:[#allocation2] sm:$0x1]
        %v753 = vld [vmem:[#allocation4] sm:$0x1]
        %v754 = vmul.f32 %v747, %v633
        %755 = vadd.xlane.f32.xlu0 %v754
        %v756 = vpop.xlane.xlu0 %755
        %v757 = vmul.f32 %v756, 0.03125
        %v758 = vsub.f32 %v747, %v757
        %v759 = vmul.f32 %v758, %v633
        %v760 = vmul.f32 %v759, %v759
        %761 = vadd.xlane.f32.xlu0 %v760
        %v762 = vpop.xlane.xlu0 %761
        %v763 = vmul.f32 %v762, 0.03125
        %v764 = vadd.f32 %v763, 1e-05
        %v765 = vrsqrt.pop %v764
        %v766 = vmul.f32 %v759, %v765
        %v767 = vlaneseq
        %v768 = vshrl.u32 %v767, 7
        %v769 = vsub.s32 0, %v768
        %v770 = vrot.slane %v752, %v769
        %v771 = vmul.f32 %v766, %v770
        %v772 = vlaneseq
        %v773 = vshrl.u32 %v772, 7
        %v774 = vsub.s32 0, %v773
        %v775 = vrot.slane %v753, %v774
        %v776 = vadd.f32 %v771, %v775
        %v777 = vpack.c.bf16 %v776, %v776
        %v778 = vld [vmem:[#allocation6] sm:$0xff]
        %v779 = vld [vmem:[#allocation6 + $0x8] sm:$0xf]
        %v780 = vld [vmem:[#allocation6 + $0xc] sm:$0xff]
        %v781 = vld [vmem:[#allocation6 + $0x14] sm:$0xf]
        %v782 = vld [vmem:[#allocation6 + $0x18] sm:$0xff]
        %v783 = vld [vmem:[#allocation6 + $0x20] sm:$0xf]
        %v784 = vld [vmem:[#allocation6 + $0x24] sm:$0xff]
        %v785 = vld [vmem:[#allocation6 + $0x2c] sm:$0xf]
        %v786 = vld [vmem:[#allocation6 + $0x30] sm:$0xff]
        %v787 = vld [vmem:[#allocation6 + $0x38] sm:$0xf]
        %v788 = vld [vmem:[#allocation6 + $0x3c] sm:$0xff]
        %v789 = vld [vmem:[#allocation6 + $0x44] sm:$0xf]
        %v790 = vld [vmem:[#allocation6 + $0x48] sm:$0xff]
        %v791 = vld [vmem:[#allocation6 + $0x50] sm:$0xf]
        %v792 = vld [vmem:[#allocation6 + $0x54] sm:$0xff]
        %v793 = vld [vmem:[#allocation6 + $0x5c] sm:$0xf]
        %v794 = vld [vmem:[#allocation6 + $0x60] sm:$0xff]
        %v795 = vld [vmem:[#allocation6 + $0x68] sm:$0xf]
        %v796 = vld [vmem:[#allocation6 + $0x6c] sm:$0xff]
        %v797 = vld [vmem:[#allocation6 + $0x74] sm:$0xf]
        %v798 = vld [vmem:[#allocation6 + $0x78] sm:$0xff]
        %v799 = vld [vmem:[#allocation6 + $0x80] sm:$0xf]
        %v800 = vld [vmem:[#allocation6 + $0x84] sm:$0xff]
        %v801 = vld [vmem:[#allocation6 + $0x8c] sm:$0xf]
        %v802 = vld [vmem:[#allocation6 + $0x90] sm:$0xff]
        %v803 = vld [vmem:[#allocation6 + $0x98] sm:$0xf]
        %v804 = vld [vmem:[#allocation6 + $0x9c] sm:$0xff]
        %v805 = vld [vmem:[#allocation6 + $0xa4] sm:$0xf]
        %v806 = vld [vmem:[#allocation6 + $0xa8] sm:$0xff]
        %v807 = vld [vmem:[#allocation6 + $0xb0] sm:$0xf]
        %v808 = vld [vmem:[#allocation6 + $0xb4] sm:$0xff]
        %v809 = vld [vmem:[#allocation6 + $0xbc] sm:$0xf]
        %v810 = vld [vmem:[#allocation7] ss:$2 sm:$0x7]
        %v812 = vlaneseq
        %v813 = vshrl.u32 %v812, 7
        %v814 = vsub.s32 0, %v813
        %v815 = vrot.slane %v810, %v814
        %v816 = vlaneseq
        %v817 = vshrl.u32 %v816, 7
        %v818 = vsub.s32 1, %v817
        %v819 = vrot.slane %v810, %v818
        %v820 = vlaneseq
        %v821 = vshrl.u32 %v820, 7
        %v822 = vsub.s32 2, %v821
        %v823 = vrot.slane %v810, %v822
        %v859 = vunpack.c.l.b16 %v778
        %v860 = vunpack.c.h.b16 %v778
        %v861 = vunpack.c.l.b16 %v779
        %v862 = vunpack.c.l.b16 %v780
        %v863 = vunpack.c.h.b16 %v780
        %v864 = vunpack.c.l.b16 %v781
        %v865 = vunpack.c.l.b16 %v782
        %v866 = vunpack.c.h.b16 %v782
        %v867 = vunpack.c.l.b16 %v783
        %v868 = vunpack.c.l.b16 %v784
        %v869 = vunpack.c.h.b16 %v784
        %v870 = vunpack.c.l.b16 %v785
        %v871 = vunpack.c.l.b16 %v786
        %v872 = vunpack.c.h.b16 %v786
        %v873 = vunpack.c.l.b16 %v787
        %v874 = vunpack.c.l.b16 %v788
        %v875 = vunpack.c.h.b16 %v788
        %v876 = vunpack.c.l.b16 %v789
        %v877 = vunpack.c.l.b16 %v790
        %v878 = vunpack.c.h.b16 %v790
        %v879 = vunpack.c.l.b16 %v791
        %v880 = vunpack.c.l.b16 %v792
        %v881 = vunpack.c.h.b16 %v792
        %v882 = vunpack.c.l.b16 %v793
        %v883 = vunpack.c.l.b16 %v794
        %v884 = vunpack.c.h.b16 %v794
        %v885 = vunpack.c.l.b16 %v795
        %v886 = vunpack.c.l.b16 %v796
        %v887 = vunpack.c.h.b16 %v796
        %v888 = vunpack.c.l.b16 %v797
        %v889 = vunpack.c.l.b16 %v798
        %v890 = vunpack.c.h.b16 %v798
        %v891 = vunpack.c.l.b16 %v799
        %v892 = vunpack.c.l.b16 %v800
        %v893 = vunpack.c.h.b16 %v800
        %v894 = vunpack.c.l.b16 %v801
        %v895 = vunpack.c.l.b16 %v802
        %v896 = vunpack.c.h.b16 %v802
        %v897 = vunpack.c.l.b16 %v803
        %v898 = vunpack.c.l.b16 %v804
        %v899 = vunpack.c.h.b16 %v804
        %v900 = vunpack.c.l.b16 %v805
        %v901 = vunpack.c.l.b16 %v806
        %v902 = vunpack.c.h.b16 %v806
        %v903 = vunpack.c.l.b16 %v807
        %v904 = vunpack.c.l.b16 %v808
        %v905 = vunpack.c.h.b16 %v808
        %v906 = vunpack.c.l.b16 %v809
        %v907 = vpack.c.b16 %v862, %v859
        %v908 = vpack.c.b16 %v863, %v860
        %v909 = vpack.c.b16 %v864, %v861
        %v910 = vpack.c.b16 %v868, %v865
        %v911 = vpack.c.b16 %v869, %v866
        %v912 = vpack.c.b16 %v870, %v867
        %v913 = vpack.c.b16 %v874, %v871
        %v914 = vpack.c.b16 %v875, %v872
        %v915 = vpack.c.b16 %v876, %v873
        %v916 = vpack.c.b16 %v880, %v877
        %v917 = vpack.c.b16 %v881, %v878
        %v918 = vpack.c.b16 %v882, %v879
        %v919 = vpack.c.b16 %v886, %v883
        %v920 = vpack.c.b16 %v887, %v884
        %v921 = vpack.c.b16 %v888, %v885
        %v922 = vpack.c.b16 %v892, %v889
        %v923 = vpack.c.b16 %v893, %v890
        %v924 = vpack.c.b16 %v894, %v891
        %v925 = vpack.c.b16 %v898, %v895
        %v926 = vpack.c.b16 %v899, %v896
        %v927 = vpack.c.b16 %v900, %v897
        %v928 = vpack.c.b16 %v904, %v901
        %v929 = vpack.c.b16 %v905, %v902
        %v930 = vpack.c.b16 %v906, %v903
        %955 = vmatprep.subr.bf16.mxu0 %v908
        %956 = vmatpush1.bf16.msra.mxu0 %v907
        %957 = vmatprep.subr.bf16.mxu0 %v911
        %958 = vmatpush1.bf16.msra.mxu0 %v910
        %959 = vmatprep.subr.bf16.mxu0 %v914
        %960 = vmatpush1.bf16.msra.mxu0 %v913
        %961 = vmatprep.subr.bf16.mxu0 %v917
        %962 = vmatpush1.bf16.msra.mxu0 %v916
        %963 = vmatprep.subr.bf16.mxu0 %v920
        %964 = vmatpush1.bf16.msra.mxu0 %v919
        %965 = vmatprep.subr.bf16.mxu0 %v923
        %966 = vmatpush1.bf16.msra.mxu0 %v922
        %967 = vmatprep.subr.bf16.mxu0 %v926
        %968 = vmatpush1.bf16.msra.mxu0 %v925
        %969 = vmatprep.subr.bf16.mxu0 %v929
        %970 = vmatpush1.bf16.msra.mxu0 %v928
        %971 = vmatprep.subr.bf16.mxu0 0
        %972 = vmatpush1.bf16.msra.mxu0 0
        %973 = vmatprep.subr.bf16.mxu0 0
        %974 = vmatpush1.bf16.msra.mxu0 0
        %975 = vmatprep.subr.bf16.mxu0 0
        %976 = vmatpush1.bf16.msra.mxu0 0
        %977 = vmatprep.subr.bf16.mxu0 0
        %978 = vmatpush1.bf16.msra.mxu0 0
        %979 = vmatprep.subr.bf16.mxu0 0
        %980 = vmatpush1.bf16.msra.mxu0 0
        %981 = vmatprep.subr.bf16.mxu0 0
        %982 = vmatpush1.bf16.msra.mxu0 0
        %983 = vmatprep.subr.bf16.mxu0 0
        %984 = vmatpush1.bf16.msra.mxu0 0
        %985 = vmatprep.subr.bf16.mxu0 0
        %986 = vmatpush1.bf16.msra.mxu0 0
        %987 = vmatprep.mubr.bf16.mxu0 0
        %988 = vmatmul.mubr.bf16.gmra.mrb[0].mxu0 %v777
        %v989 = vpop.f32.mrb[0].mxu0
        %v990 = vadd.f32 %v815, %v989
        %v991 = vpop.f32.mrb[0].mxu0
        %v992 = vadd.f32 %v819, %v991
        %v993 = vpop.f32.mrb[0].mxu0
        %v994 = vpop.f32.mrb[0].mxu0
        %995 = vdwg.mxu0
        %996 = vmatprep.subr.bf16.mxu0 0
        %997 = vmatpush1.bf16.msra.mxu0 %v909
        %998 = vmatprep.subr.bf16.mxu0 0
        %999 = vmatpush1.bf16.msra.mxu0 %v912
        %1000 = vmatprep.subr.bf16.mxu0 0
        %1001 = vmatpush1.bf16.msra.mxu0 %v915
        %1002 = vmatprep.subr.bf16.mxu0 0
        %1003 = vmatpush1.bf16.msra.mxu0 %v918
        %1004 = vmatprep.subr.bf16.mxu0 0
        %1005 = vmatpush1.bf16.msra.mxu0 %v921
        %1006 = vmatprep.subr.bf16.mxu0 0
        %1007 = vmatpush1.bf16.msra.mxu0 %v924
        %1008 = vmatprep.subr.bf16.mxu0 0
        %1009 = vmatpush1.bf16.msra.mxu0 %v927
        %1010 = vmatprep.subr.bf16.mxu0 0
        %1011 = vmatpush1.bf16.msra.mxu0 %v930
        %1012 = vmatprep.subr.bf16.mxu0 0
        %1013 = vmatpush1.bf16.msra.mxu0 0
        %1014 = vmatprep.subr.bf16.mxu0 0
        %1015 = vmatpush1.bf16.msra.mxu0 0
        %1016 = vmatprep.subr.bf16.mxu0 0
        %1017 = vmatpush1.bf16.msra.mxu0 0
        %1018 = vmatprep.subr.bf16.mxu0 0
        %1019 = vmatpush1.bf16.msra.mxu0 0
        %1020 = vmatprep.subr.bf16.mxu0 0
        %1021 = vmatpush1.bf16.msra.mxu0 0
        %1022 = vmatprep.subr.bf16.mxu0 0
        %1023 = vmatpush1.bf16.msra.mxu0 0
        %1024 = vmatprep.subr.bf16.mxu0 0
        %1025 = vmatpush1.bf16.msra.mxu0 0
        %1026 = vmatprep.subr.bf16.mxu0 0
        %1027 = vmatpush1.bf16.msra.mxu0 0
        %1028 = vmatprep.mubr.bf16.mxu0 0
        %1029 = vmatmul.mubr.bf16.gmra.mrb[0].mxu0 %v777
        %v1030 = vpop.f32.mrb[0].mxu0
        %v1031 = vadd.f32 %v823, %v1030
        %v1032 = vpop.f32.mrb[0].mxu0
        %v1033 = vpop.f32.mrb[0].mxu0
        %v1034 = vpop.f32.mrb[0].mxu0
        %1035 = vdwg.mxu0
        %v1036 = vpack.c.bf16 %v990, %v990
        %v1037 = vpack.c.bf16 %v992, %v992
        %v1038 = vpack.c.bf16 %v1031, %v1031
        %vm1039 = vcmask 64512
        %v1041 = vsel %vm1039, %v1036, 0
        %v1044 = vsel %vm1039, %v1037, 0
        %1046 = vmatprep.subr.bf16.mxu0 0
        %1047 = vmatpush1.bf16.xpose.msra.mxu0 %v1044
        %1048 = vmatprep.subr.bf16.mxu0 0
        %1049 = vmatpush1.bf16.xpose.msra.mxu0 0
        %1050 = vmatprep.subr.bf16.mxu0 0
        %1051 = vmatpush1.bf16.xpose.msra.mxu0 0
        %1052 = vmatprep.subr.bf16.mxu0 0
        %1053 = vmatpush1.bf16.xpose.msra.mxu0 0
        %1054 = vmatprep.subr.bf16.mxu0 0
        %1055 = vmatpush1.bf16.xpose.msra.mxu0 0
        %1056 = vmatprep.subr.bf16.mxu0 0
        %1057 = vmatpush1.bf16.xpose.msra.mxu0 0
        %1058 = vmatprep.subr.bf16.mxu0 0
        %1059 = vmatpush1.bf16.xpose.msra.mxu0 0
        %1060 = vmatprep.subr.bf16.mxu0 0
        %1061 = vmatpush1.bf16.xpose.msra.mxu0 0
        %1062 = vmatprep.subr.bf16.mxu0 0
        %1063 = vmatpush1.bf16.xpose.msra.mxu0 0
        %1064 = vmatprep.subr.bf16.mxu0 0
        %1065 = vmatpush1.bf16.xpose.msra.mxu0 0
        %1066 = vmatprep.subr.bf16.mxu0 0
        %1067 = vmatpush1.bf16.xpose.msra.mxu0 0
        %1068 = vmatprep.subr.bf16.mxu0 0
        %1069 = vmatpush1.bf16.xpose.msra.mxu0 0
        %1070 = vmatprep.subr.bf16.mxu0 0
        %1071 = vmatpush1.bf16.xpose.msra.mxu0 0
        %1072 = vmatprep.subr.bf16.mxu0 0
        %1073 = vmatpush1.bf16.xpose.msra.mxu0 0
        %1074 = vmatprep.subr.bf16.mxu0 0
        %1075 = vmatpush1.bf16.xpose.msra.mxu0 0
        %1076 = vmatprep.subr.bf16.mxu0 0
        %1077 = vmatpush1.bf16.xpose.msra.mxu0 0
        %1078 = vmatprep.mubr.bf16.mxu0 0
        %1079 = vmatmul.mubr.bf16.gmra.mrb[0].mxu0 %v1041
        %v1080 = vpop.f32.mrb[0].mxu0
        %v1081 = vadd.f32 %v751, %v1080
        %v1082 = vpop.f32.mrb[0].mxu0
        %v1083 = vpop.f32.mrb[0].mxu0
        %v1084 = vpop.f32.mrb[0].mxu0
        %1085 = vdwg.mxu0
        %v1086 = vsel %vm1039, %v1081, -inf
        %1087 = vmax.xlane.f32.xlu0 %v1086
        %v1088 = vpop.xlane.xlu0 %1087
        %v1089 = vsub.f32 %v1081, %v1088
        %v1090 = vmul.f32 %v1089, 1.442695
        %v1091 = vpow.pop %v1090
        %v1092 = vsel %vm1039, %v1091, 0.0
        %1093 = vadd.xlane.f32.xlu0 %v1092
        %v1094 = vpop.xlane.xlu0 %1093
        %v1095 = vrcp.pop %v1094
        %v1096 = vmul.f32 %v1091, %v1095
        %v1097 = vpack.c.bf16 %v1096, %v1096
        %v1099 = vsel %vm1039, %v1097, 0
        %vm1101 = vcmask 1043456
        %v1103 = vsel %vm1101, %v1038, 0
        %1105 = vmatprep.subr.bf16.mxu0 0
        %1106 = vmatpush1.bf16.msra.mxu0 %v1103
        %1107 = vmatprep.subr.bf16.mxu0 0
        %1108 = vmatpush1.bf16.msra.mxu0 0
        %1109 = vmatprep.subr.bf16.mxu0 0
        %1110 = vmatpush1.bf16.msra.mxu0 0
        %1111 = vmatprep.subr.bf16.mxu0 0
        %1112 = vmatpush1.bf16.msra.mxu0 0
        %1113 = vmatprep.subr.bf16.mxu0 0
        %1114 = vmatpush1.bf16.msra.mxu0 0
        %1115 = vmatprep.subr.bf16.mxu0 0
        %1116 = vmatpush1.bf16.msra.mxu0 0
        %1117 = vmatprep.subr.bf16.mxu0 0
        %1118 = vmatpush1.bf16.msra.mxu0 0
        %1119 = vmatprep.subr.bf16.mxu0 0
        %1120 = vmatpush1.bf16.msra.mxu0 0
        %1121 = vmatprep.subr.bf16.mxu0 0
        %1122 = vmatpush1.bf16.msra.mxu0 0
        %1123 = vmatprep.subr.bf16.mxu0 0
        %1124 = vmatpush1.bf16.msra.mxu0 0
        %1125 = vmatprep.subr.bf16.mxu0 0
        %1126 = vmatpush1.bf16.msra.mxu0 0
        %1127 = vmatprep.subr.bf16.mxu0 0
        %1128 = vmatpush1.bf16.msra.mxu0 0
        %1129 = vmatprep.subr.bf16.mxu0 0
        %1130 = vmatpush1.bf16.msra.mxu0 0
        %1131 = vmatprep.subr.bf16.mxu0 0
        %1132 = vmatpush1.bf16.msra.mxu0 0
        %1133 = vmatprep.subr.bf16.mxu0 0
        %1134 = vmatpush1.bf16.msra.mxu0 0
        %1135 = vmatprep.subr.bf16.mxu0 0
        %1136 = vmatpush1.bf16.msra.mxu0 0
        %1137 = vmatprep.mubr.bf16.mxu0 0
        %1138 = vmatmul.mubr.bf16.gmra.mrb[0].mxu0 %v1099
        %v1139 = vpop.f32.mrb[0].mxu0
        %v1140 = vadd.f32 0.0, %v1139
        %v1141 = vpop.f32.mrb[0].mxu0
        %v1142 = vpop.f32.mrb[0].mxu0
        %v1143 = vpop.f32.mrb[0].mxu0
        %1144 = vdwg.mxu0
        %1146 = vrot.lane.b32.xlu0 %v1036, 120
        %v1147 = vpop.permute.xlu0 %1146
        %1149 = vrot.lane.b32.xlu0 %v1037, 120
        %v1150 = vpop.permute.xlu0 %1149
        %v1152 = vsel %vm1039, %v1147, 0
        %v1155 = vsel %vm1039, %v1150, 0
        %1157 = vmatprep.subr.bf16.mxu0 0
        %1158 = vmatpush1.bf16.xpose.msra.mxu0 %v1155
        %1159 = vmatprep.subr.bf16.mxu0 0
        %1160 = vmatpush1.bf16.xpose.msra.mxu0 0
        %1161 = vmatprep.subr.bf16.mxu0 0
        %1162 = vmatpush1.bf16.xpose.msra.mxu0 0
        %1163 = vmatprep.subr.bf16.mxu0 0
        %1164 = vmatpush1.bf16.xpose.msra.mxu0 0
        %1165 = vmatprep.subr.bf16.mxu0 0
        %1166 = vmatpush1.bf16.xpose.msra.mxu0 0
        %1167 = vmatprep.subr.bf16.mxu0 0
        %1168 = vmatpush1.bf16.xpose.msra.mxu0 0
        %1169 = vmatprep.subr.bf16.mxu0 0
        %1170 = vmatpush1.bf16.xpose.msra.mxu0 0
        %1171 = vmatprep.subr.bf16.mxu0 0
        %1172 = vmatpush1.bf16.xpose.msra.mxu0 0
        %1173 = vmatprep.subr.bf16.mxu0 0
        %1174 = vmatpush1.bf16.xpose.msra.mxu0 0
        %1175 = vmatprep.subr.bf16.mxu0 0
        %1176 = vmatpush1.bf16.xpose.msra.mxu0 0
        %1177 = vmatprep.subr.bf16.mxu0 0
        %1178 = vmatpush1.bf16.xpose.msra.mxu0 0
        %1179 = vmatprep.subr.bf16.mxu0 0
        %1180 = vmatpush1.bf16.xpose.msra.mxu0 0
        %1181 = vmatprep.subr.bf16.mxu0 0
        %1182 = vmatpush1.bf16.xpose.msra.mxu0 0
        %1183 = vmatprep.subr.bf16.mxu0 0
        %1184 = vmatpush1.bf16.xpose.msra.mxu0 0
        %1185 = vmatprep.subr.bf16.mxu0 0
        %1186 = vmatpush1.bf16.xpose.msra.mxu0 0
        %1187 = vmatprep.subr.bf16.mxu0 0
        %1188 = vmatpush1.bf16.xpose.msra.mxu0 0
        %1189 = vmatprep.mubr.bf16.mxu0 0
        %1190 = vmatmul.mubr.bf16.gmra.mrb[0].mxu0 %v1152
        %v1191 = vpop.f32.mrb[0].mxu0
        %v1192 = vadd.f32 %v751, %v1191
        %v1193 = vpop.f32.mrb[0].mxu0
        %v1194 = vpop.f32.mrb[0].mxu0
        %v1195 = vpop.f32.mrb[0].mxu0
        %1196 = vdwg.mxu0
        %v1197 = vsel %vm1039, %v1192, -inf
        %1198 = vmax.xlane.f32.xlu0 %v1197
        %v1199 = vpop.xlane.xlu0 %1198
        %v1200 = vsub.f32 %v1192, %v1199
        %v1201 = vmul.f32 %v1200, 1.442695
        %v1202 = vpow.pop %v1201
        %v1203 = vsel %vm1039, %v1202, 0.0
        %1204 = vadd.xlane.f32.xlu0 %v1203
        %v1205 = vpop.xlane.xlu0 %1204
        %v1206 = vrcp.pop %v1205
        %v1207 = vmul.f32 %v1202, %v1206
        %v1208 = vpack.c.bf16 %v1207, %v1207
        %1210 = vrot.lane.b32.xlu0 %v1038, 120
        %v1211 = vpop.permute.xlu0 %1210
        %v1213 = vsel %vm1039, %v1208, 0
        %v1216 = vsel %vm1101, %v1211, 0
        %1218 = vmatprep.subr.bf16.mxu0 0
        %1219 = vmatpush1.bf16.msra.mxu0 %v1216
        %1220 = vmatprep.subr.bf16.mxu0 0
        %1221 = vmatpush1.bf16.msra.mxu0 0
        %1222 = vmatprep.subr.bf16.mxu0 0
        %1223 = vmatpush1.bf16.msra.mxu0 0
        %1224 = vmatprep.subr.bf16.mxu0 0
        %1225 = vmatpush1.bf16.msra.mxu0 0
        %1226 = vmatprep.subr.bf16.mxu0 0
        %1227 = vmatpush1.bf16.msra.mxu0 0
        %1228 = vmatprep.subr.bf16.mxu0 0
        %1229 = vmatpush1.bf16.msra.mxu0 0
        %1230 = vmatprep.subr.bf16.mxu0 0
        %1231 = vmatpush1.bf16.msra.mxu0 0
        %1232 = vmatprep.subr.bf16.mxu0 0
        %1233 = vmatpush1.bf16.msra.mxu0 0
        %1234 = vmatprep.subr.bf16.mxu0 0
        %1235 = vmatpush1.bf16.msra.mxu0 0
        %1236 = vmatprep.subr.bf16.mxu0 0
        %1237 = vmatpush1.bf16.msra.mxu0 0
        %1238 = vmatprep.subr.bf16.mxu0 0
        %1239 = vmatpush1.bf16.msra.mxu0 0
        %1240 = vmatprep.subr.bf16.mxu0 0
        %1241 = vmatpush1.bf16.msra.mxu0 0
        %1242 = vmatprep.subr.bf16.mxu0 0
        %1243 = vmatpush1.bf16.msra.mxu0 0
        %1244 = vmatprep.subr.bf16.mxu0 0
        %1245 = vmatpush1.bf16.msra.mxu0 0
        %1246 = vmatprep.subr.bf16.mxu0 0
        %1247 = vmatpush1.bf16.msra.mxu0 0
        %1248 = vmatprep.subr.bf16.mxu0 0
        %1249 = vmatpush1.bf16.msra.mxu0 0
        %1250 = vmatprep.mubr.bf16.mxu0 0
        %1251 = vmatmul.mubr.bf16.gmra.mrb[0].mxu0 %v1213
        %v1252 = vpop.f32.mrb[0].mxu0
        %v1253 = vadd.f32 0.0, %v1252
        %v1254 = vpop.f32.mrb[0].mxu0
        %v1255 = vpop.f32.mrb[0].mxu0
        %v1256 = vpop.f32.mrb[0].mxu0
        %1257 = vdwg.mxu0
        %1258 = vrot.lane.b32.xlu0 %v1036, 112
        %v1259 = vpop.permute.xlu0 %1258
        %1260 = vrot.lane.b32.xlu0 %v1037, 112
        %v1261 = vpop.permute.xlu0 %1260
        %v1263 = vsel %vm1039, %v1259, 0
        %v1266 = vsel %vm1039, %v1261, 0
        %1268 = vmatprep.subr.bf16.mxu0 0
        %1269 = vmatpush1.bf16.xpose.msra.mxu0 %v1266
        %1270 = vmatprep.subr.bf16.mxu0 0
        %1271 = vmatpush1.bf16.xpose.msra.mxu0 0
        %1272 = vmatprep.subr.bf16.mxu0 0
        %1273 = vmatpush1.bf16.xpose.msra.mxu0 0
        %1274 = vmatprep.subr.bf16.mxu0 0
        %1275 = vmatpush1.bf16.xpose.msra.mxu0 0
        %1276 = vmatprep.subr.bf16.mxu0 0
        %1277 = vmatpush1.bf16.xpose.msra.mxu0 0
        %1278 = vmatprep.subr.bf16.mxu0 0
        %1279 = vmatpush1.bf16.xpose.msra.mxu0 0
        %1280 = vmatprep.subr.bf16.mxu0 0
        %1281 = vmatpush1.bf16.xpose.msra.mxu0 0
        %1282 = vmatprep.subr.bf16.mxu0 0
        %1283 = vmatpush1.bf16.xpose.msra.mxu0 0
        %1284 = vmatprep.subr.bf16.mxu0 0
        %1285 = vmatpush1.bf16.xpose.msra.mxu0 0
        %1286 = vmatprep.subr.bf16.mxu0 0
        %1287 = vmatpush1.bf16.xpose.msra.mxu0 0
        %1288 = vmatprep.subr.bf16.mxu0 0
        %1289 = vmatpush1.bf16.xpose.msra.mxu0 0
        %1290 = vmatprep.subr.bf16.mxu0 0
        %1291 = vmatpush1.bf16.xpose.msra.mxu0 0
        %1292 = vmatprep.subr.bf16.mxu0 0
        %1293 = vmatpush1.bf16.xpose.msra.mxu0 0
        %1294 = vmatprep.subr.bf16.mxu0 0
        %1295 = vmatpush1.bf16.xpose.msra.mxu0 0
        %1296 = vmatprep.subr.bf16.mxu0 0
        %1297 = vmatpush1.bf16.xpose.msra.mxu0 0
        %1298 = vmatprep.subr.bf16.mxu0 0
        %1299 = vmatpush1.bf16.xpose.msra.mxu0 0
        %1300 = vmatprep.mubr.bf16.mxu0 0
        %1301 = vmatmul.mubr.bf16.gmra.mrb[0].mxu0 %v1263
        %v1302 = vpop.f32.mrb[0].mxu0
        %v1303 = vadd.f32 %v751, %v1302
        %v1304 = vpop.f32.mrb[0].mxu0
        %v1305 = vpop.f32.mrb[0].mxu0
        %v1306 = vpop.f32.mrb[0].mxu0
        %1307 = vdwg.mxu0
        %v1308 = vsel %vm1039, %v1303, -inf
        %1309 = vmax.xlane.f32.xlu0 %v1308
        %v1310 = vpop.xlane.xlu0 %1309
        %v1311 = vsub.f32 %v1303, %v1310
        %v1312 = vmul.f32 %v1311, 1.442695
        %v1313 = vpow.pop %v1312
        %v1314 = vsel %vm1039, %v1313, 0.0
        %1315 = vadd.xlane.f32.xlu0 %v1314
        %v1316 = vpop.xlane.xlu0 %1315
        %v1317 = vrcp.pop %v1316
        %v1318 = vmul.f32 %v1313, %v1317
        %v1319 = vpack.c.bf16 %v1318, %v1318
        %1320 = vrot.lane.b32.xlu0 %v1038, 112
        %v1321 = vpop.permute.xlu0 %1320
        %v1323 = vsel %vm1039, %v1319, 0
        %v1326 = vsel %vm1101, %v1321, 0
        %1328 = vmatprep.subr.bf16.mxu0 0
        %1329 = vmatpush1.bf16.msra.mxu0 %v1326
        %1330 = vmatprep.subr.bf16.mxu0 0
        %1331 = vmatpush1.bf16.msra.mxu0 0
        %1332 = vmatprep.subr.bf16.mxu0 0
        %1333 = vmatpush1.bf16.msra.mxu0 0
        %1334 = vmatprep.subr.bf16.mxu0 0
        %1335 = vmatpush1.bf16.msra.mxu0 0
        %1336 = vmatprep.subr.bf16.mxu0 0
        %1337 = vmatpush1.bf16.msra.mxu0 0
        %1338 = vmatprep.subr.bf16.mxu0 0
        %1339 = vmatpush1.bf16.msra.mxu0 0
        %1340 = vmatprep.subr.bf16.mxu0 0
        %1341 = vmatpush1.bf16.msra.mxu0 0
        %1342 = vmatprep.subr.bf16.mxu0 0
        %1343 = vmatpush1.bf16.msra.mxu0 0
        %1344 = vmatprep.subr.bf16.mxu0 0
        %1345 = vmatpush1.bf16.msra.mxu0 0
        %1346 = vmatprep.subr.bf16.mxu0 0
        %1347 = vmatpush1.bf16.msra.mxu0 0
        %1348 = vmatprep.subr.bf16.mxu0 0
        %1349 = vmatpush1.bf16.msra.mxu0 0
        %1350 = vmatprep.subr.bf16.mxu0 0
        %1351 = vmatpush1.bf16.msra.mxu0 0
        %1352 = vmatprep.subr.bf16.mxu0 0
        %1353 = vmatpush1.bf16.msra.mxu0 0
        %1354 = vmatprep.subr.bf16.mxu0 0
        %1355 = vmatpush1.bf16.msra.mxu0 0
        %1356 = vmatprep.subr.bf16.mxu0 0
        %1357 = vmatpush1.bf16.msra.mxu0 0
        %1358 = vmatprep.subr.bf16.mxu0 0
        %1359 = vmatpush1.bf16.msra.mxu0 0
        %1360 = vmatprep.mubr.bf16.mxu0 0
        %1361 = vmatmul.mubr.bf16.gmra.mrb[0].mxu0 %v1323
        %v1362 = vpop.f32.mrb[0].mxu0
        %v1363 = vadd.f32 0.0, %v1362
        %v1364 = vpop.f32.mrb[0].mxu0
        %v1365 = vpop.f32.mrb[0].mxu0
        %v1366 = vpop.f32.mrb[0].mxu0
        %1367 = vdwg.mxu0
        %1368 = vrot.lane.b32.xlu0 %v1036, 104
        %v1369 = vpop.permute.xlu0 %1368
        %1370 = vrot.lane.b32.xlu0 %v1037, 104
        %v1371 = vpop.permute.xlu0 %1370
        %v1373 = vsel %vm1039, %v1369, 0
        %v1376 = vsel %vm1039, %v1371, 0
        %1378 = vmatprep.subr.bf16.mxu0 0
        %1379 = vmatpush1.bf16.xpose.msra.mxu0 %v1376
        %1380 = vmatprep.subr.bf16.mxu0 0
        %1381 = vmatpush1.bf16.xpose.msra.mxu0 0
        %1382 = vmatprep.subr.bf16.mxu0 0
        %1383 = vmatpush1.bf16.xpose.msra.mxu0 0
        %1384 = vmatprep.subr.bf16.mxu0 0
        %1385 = vmatpush1.bf16.xpose.msra.mxu0 0
        %1386 = vmatprep.subr.bf16.mxu0 0
        %1387 = vmatpush1.bf16.xpose.msra.mxu0 0
        %1388 = vmatprep.subr.bf16.mxu0 0
        %1389 = vmatpush1.bf16.xpose.msra.mxu0 0
        %1390 = vmatprep.subr.bf16.mxu0 0
        %1391 = vmatpush1.bf16.xpose.msra.mxu0 0
        %1392 = vmatprep.subr.bf16.mxu0 0
        %1393 = vmatpush1.bf16.xpose.msra.mxu0 0
        %1394 = vmatprep.subr.bf16.mxu0 0
        %1395 = vmatpush1.bf16.xpose.msra.mxu0 0
        %1396 = vmatprep.subr.bf16.mxu0 0
        %1397 = vmatpush1.bf16.xpose.msra.mxu0 0
        %1398 = vmatprep.subr.bf16.mxu0 0
        %1399 = vmatpush1.bf16.xpose.msra.mxu0 0
        %1400 = vmatprep.subr.bf16.mxu0 0
        %1401 = vmatpush1.bf16.xpose.msra.mxu0 0
        %1402 = vmatprep.subr.bf16.mxu0 0
        %1403 = vmatpush1.bf16.xpose.msra.mxu0 0
        %1404 = vmatprep.subr.bf16.mxu0 0
        %1405 = vmatpush1.bf16.xpose.msra.mxu0 0
        %1406 = vmatprep.subr.bf16.mxu0 0
        %1407 = vmatpush1.bf16.xpose.msra.mxu0 0
        %1408 = vmatprep.subr.bf16.mxu0 0
        %1409 = vmatpush1.bf16.xpose.msra.mxu0 0
        %1410 = vmatprep.mubr.bf16.mxu0 0
        %1411 = vmatmul.mubr.bf16.gmra.mrb[0].mxu0 %v1373
        %v1412 = vpop.f32.mrb[0].mxu0
        %v1413 = vadd.f32 %v751, %v1412
        %v1414 = vpop.f32.mrb[0].mxu0
        %v1415 = vpop.f32.mrb[0].mxu0
        %v1416 = vpop.f32.mrb[0].mxu0
        %1417 = vdwg.mxu0
        %v1418 = vsel %vm1039, %v1413, -inf
        %1419 = vmax.xlane.f32.xlu0 %v1418
        %v1420 = vpop.xlane.xlu0 %1419
        %v1421 = vsub.f32 %v1413, %v1420
        %v1422 = vmul.f32 %v1421, 1.442695
        %v1423 = vpow.pop %v1422
        %v1424 = vsel %vm1039, %v1423, 0.0
        %1425 = vadd.xlane.f32.xlu0 %v1424
        %v1426 = vpop.xlane.xlu0 %1425
        %v1427 = vrcp.pop %v1426
        %v1428 = vmul.f32 %v1423, %v1427
        %v1429 = vpack.c.bf16 %v1428, %v1428
        %1430 = vrot.lane.b32.xlu0 %v1038, 104
        %v1431 = vpop.permute.xlu0 %1430
        %v1433 = vsel %vm1039, %v1429, 0
        %v1436 = vsel %vm1101, %v1431, 0
        %1438 = vmatprep.subr.bf16.mxu0 0
        %1439 = vmatpush1.bf16.msra.mxu0 %v1436
        %1440 = vmatprep.subr.bf16.mxu0 0
        %1441 = vmatpush1.bf16.msra.mxu0 0
        %1442 = vmatprep.subr.bf16.mxu0 0
        %1443 = vmatpush1.bf16.msra.mxu0 0
        %1444 = vmatprep.subr.bf16.mxu0 0
        %1445 = vmatpush1.bf16.msra.mxu0 0
        %1446 = vmatprep.subr.bf16.mxu0 0
        %1447 = vmatpush1.bf16.msra.mxu0 0
        %1448 = vmatprep.subr.bf16.mxu0 0
        %1449 = vmatpush1.bf16.msra.mxu0 0
        %1450 = vmatprep.subr.bf16.mxu0 0
        %1451 = vmatpush1.bf16.msra.mxu0 0
        %1452 = vmatprep.subr.bf16.mxu0 0
        %1453 = vmatpush1.bf16.msra.mxu0 0
        %1454 = vmatprep.subr.bf16.mxu0 0
        %1455 = vmatpush1.bf16.msra.mxu0 0
        %1456 = vmatprep.subr.bf16.mxu0 0
        %1457 = vmatpush1.bf16.msra.mxu0 0
        %1458 = vmatprep.subr.bf16.mxu0 0
        %1459 = vmatpush1.bf16.msra.mxu0 0
        %1460 = vmatprep.subr.bf16.mxu0 0
        %1461 = vmatpush1.bf16.msra.mxu0 0
        %1462 = vmatprep.subr.bf16.mxu0 0
        %1463 = vmatpush1.bf16.msra.mxu0 0
        %1464 = vmatprep.subr.bf16.mxu0 0
        %1465 = vmatpush1.bf16.msra.mxu0 0
        %1466 = vmatprep.subr.bf16.mxu0 0
        %1467 = vmatpush1.bf16.msra.mxu0 0
        %1468 = vmatprep.subr.bf16.mxu0 0
        %1469 = vmatpush1.bf16.msra.mxu0 0
        %1470 = vmatprep.mubr.bf16.mxu0 0
        %1471 = vmatmul.mubr.bf16.gmra.mrb[0].mxu0 %v1433
        %v1472 = vpop.f32.mrb[0].mxu0
        %v1473 = vadd.f32 0.0, %v1472
        %v1474 = vpop.f32.mrb[0].mxu0
        %v1475 = vpop.f32.mrb[0].mxu0
        %v1476 = vpop.f32.mrb[0].mxu0
        %1477 = vdwg.mxu0
        %1479 = vrot.lane.b32.xlu0 %v1253, 8
        %v1480 = vpop.permute.xlu0 %1479
        %1483 = vrot.lane.b32.xlu0 %v1363, 16
        %v1484 = vpop.permute.xlu0 %1483
        %1487 = vrot.lane.b32.xlu0 %v1473, 24
        %v1488 = vpop.permute.xlu0 %1487
        %v1490 = vsel %vm1039, %v1140, %v1480
        %vm1491 = vcmask 130048
        %v1492 = vsel %vm1491, %v1490, %v1484
        %vm1493 = vcmask 195584
        %v1494 = vsel %vm1493, %v1492, %v1488
        %v1495 = vpack.c.bf16 %v1494, %v1494
        %v1496 = vld [vmem:[%s7] sm:$0xf]
        %v1497 = vld [vmem:[%s7 + $0x4] sm:$0xf]
        %v1498 = vld [vmem:[%s7 + $0x8] sm:$0xf]
        %v1499 = vld [vmem:[%s7 + $0xc] sm:$0xf]
        %v1504 = vunpack.c.l.b16 %v1496
        %v1505 = vunpack.c.l.b16 %v1497
        %v1506 = vunpack.c.l.b16 %v1498
        %v1507 = vunpack.c.l.b16 %v1499
        %v1508 = vpack.c.b16 %v1505, %v1504
        %v1509 = vpack.c.b16 %v1507, %v1506
        %vm1512 = vcmask 261120
        %v1514 = vsel %vm1512, %v1495, 0
        %1516 = vmatprep.subr.bf16.mxu0 0
        %1517 = vmatpush1.bf16.msra.mxu0 %v1508
        %1518 = vmatprep.subr.bf16.mxu0 0
        %1519 = vmatpush1.bf16.msra.mxu0 %v1509
        %1520 = vmatprep.subr.bf16.mxu0 0
        %1521 = vmatpush1.bf16.msra.mxu0 0
        %1522 = vmatprep.subr.bf16.mxu0 0
        %1523 = vmatpush1.bf16.msra.mxu0 0
        %1524 = vmatprep.subr.bf16.mxu0 0
        %1525 = vmatpush1.bf16.msra.mxu0 0
        %1526 = vmatprep.subr.bf16.mxu0 0
        %1527 = vmatpush1.bf16.msra.mxu0 0
        %1528 = vmatprep.subr.bf16.mxu0 0
        %1529 = vmatpush1.bf16.msra.mxu0 0
        %1530 = vmatprep.subr.bf16.mxu0 0
        %1531 = vmatpush1.bf16.msra.mxu0 0
        %1532 = vmatprep.subr.bf16.mxu0 0
        %1533 = vmatpush1.bf16.msra.mxu0 0
        %1534 = vmatprep.subr.bf16.mxu0 0
        %1535 = vmatpush1.bf16.msra.mxu0 0
        %1536 = vmatprep.subr.bf16.mxu0 0
        %1537 = vmatpush1.bf16.msra.mxu0 0
        %1538 = vmatprep.subr.bf16.mxu0 0
        %1539 = vmatpush1.bf16.msra.mxu0 0
        %1540 = vmatprep.subr.bf16.mxu0 0
        %1541 = vmatpush1.bf16.msra.mxu0 0
        %1542 = vmatprep.subr.bf16.mxu0 0
        %1543 = vmatpush1.bf16.msra.mxu0 0
        %1544 = vmatprep.subr.bf16.mxu0 0
        %1545 = vmatpush1.bf16.msra.mxu0 0
        %1546 = vmatprep.subr.bf16.mxu0 0
        %1547 = vmatpush1.bf16.msra.mxu0 0
        %1548 = vmatprep.mubr.bf16.mxu0 0
        %1549 = vmatmul.mubr.bf16.gmra.mrb[0].mxu0 %v1514
        %v1550 = vpop.f32.mrb[0].mxu0
        %v1551 = vadd.f32 0.0, %v1550
        %v1552 = vpop.f32.mrb[0].mxu0
        %v1553 = vpop.f32.mrb[0].mxu0
        %v1554 = vpop.f32.mrb[0].mxu0
        %1555 = vdwg.mxu0
        %v1556 = vadd.f32 %v747, %v1551
        %v1557 = vld [vmem:[%s8] sm:$0x1]
        %v1558 = vlaneseq
        %v1559 = vshrl.u32 %v1558, 7
        %v1560 = vsub.s32 0, %v1559
        %v1561 = vrot.slane %v1557, %v1560
        %v1562 = vadd.f32 %v1556, %v1561
        %v1563 = vld [vmem:[#allocation2 + $0x1] sm:$0x1]
        %v1564 = vld [vmem:[#allocation4 + $0x1] sm:$0x1]
        %v1565 = vmul.f32 %v1562, %v633
        %1566 = vadd.xlane.f32.xlu0 %v1565
        %v1567 = vpop.xlane.xlu0 %1566
        %v1568 = vmul.f32 %v1567, 0.03125
        %v1569 = vsub.f32 %v1562, %v1568
        %v1570 = vmul.f32 %v1569, %v633
        %v1571 = vmul.f32 %v1570, %v1570
        %1572 = vadd.xlane.f32.xlu0 %v1571
        %v1573 = vpop.xlane.xlu0 %1572
        %v1574 = vmul.f32 %v1573, 0.03125
        %v1575 = vadd.f32 %v1574, 1e-05
        %v1576 = vrsqrt.pop %v1575
        %v1577 = vmul.f32 %v1570, %v1576
        %v1578 = vlaneseq
        %v1579 = vshrl.u32 %v1578, 7
        %v1580 = vsub.s32 0, %v1579
        %v1581 = vrot.slane %v1563, %v1580
        %v1582 = vmul.f32 %v1577, %v1581
        %v1583 = vlaneseq
        %v1584 = vshrl.u32 %v1583, 7
        %v1585 = vsub.s32 0, %v1584
        %v1586 = vrot.slane %v1564, %v1585
        %v1587 = vadd.f32 %v1582, %v1586
        %v1588 = vpack.c.bf16 %v1587, %v1587
        %v1589 = vld [vmem:[#allocation9] sm:$0xf]
        %v1590 = vld [vmem:[#allocation9 + $0x4] sm:$0xf]
        %v1591 = vld [vmem:[#allocation9 + $0x8] sm:$0xf]
        %v1592 = vld [vmem:[#allocation9 + $0xc] sm:$0xf]
        %v1593 = vld [vmem:[#allocation9 + $0x10] sm:$0xf]
        %v1594 = vld [vmem:[#allocation9 + $0x14] sm:$0xf]
        %v1595 = vld [vmem:[#allocation9 + $0x18] sm:$0xf]
        %v1596 = vld [vmem:[#allocation9 + $0x1c] sm:$0xf]
        %v1597 = vld [vmem:[#allocation9 + $0x20] sm:$0xf]
        %v1598 = vld [vmem:[#allocation9 + $0x24] sm:$0xf]
        %v1599 = vld [vmem:[#allocation9 + $0x28] sm:$0xf]
        %v1600 = vld [vmem:[#allocation9 + $0x2c] sm:$0xf]
        %v1601 = vld [vmem:[#allocation9 + $0x30] sm:$0xf]
        %v1602 = vld [vmem:[#allocation9 + $0x34] sm:$0xf]
        %v1603 = vld [vmem:[#allocation9 + $0x38] sm:$0xf]
        %v1604 = vld [vmem:[#allocation9 + $0x3c] sm:$0xf]
        %v1605 = vld [vmem:[#allocation10] sm:$0x1]
        %v1606 = vlaneseq
        %v1607 = vshrl.u32 %v1606, 7
        %v1608 = vsub.s32 0, %v1607
        %v1609 = vrot.slane %v1605, %v1608
        %v1626 = vunpack.c.l.b16 %v1589
        %v1627 = vunpack.c.l.b16 %v1590
        %v1628 = vunpack.c.l.b16 %v1591
        %v1629 = vunpack.c.l.b16 %v1592
        %v1630 = vunpack.c.l.b16 %v1593
        %v1631 = vunpack.c.l.b16 %v1594
        %v1632 = vunpack.c.l.b16 %v1595
        %v1633 = vunpack.c.l.b16 %v1596
        %v1634 = vunpack.c.l.b16 %v1597
        %v1635 = vunpack.c.l.b16 %v1598
        %v1636 = vunpack.c.l.b16 %v1599
        %v1637 = vunpack.c.l.b16 %v1600
        %v1638 = vunpack.c.l.b16 %v1601
        %v1639 = vunpack.c.l.b16 %v1602
        %v1640 = vunpack.c.l.b16 %v1603
        %v1641 = vunpack.c.l.b16 %v1604
        %v1642 = vpack.c.b16 %v1627, %v1626
        %v1643 = vpack.c.b16 %v1629, %v1628
        %v1644 = vpack.c.b16 %v1631, %v1630
        %v1645 = vpack.c.b16 %v1633, %v1632
        %v1646 = vpack.c.b16 %v1635, %v1634
        %v1647 = vpack.c.b16 %v1637, %v1636
        %v1648 = vpack.c.b16 %v1639, %v1638
        %v1649 = vpack.c.b16 %v1641, %v1640
        %1658 = vmatprep.subr.bf16.mxu0 0
        %1659 = vmatpush1.bf16.msra.mxu0 %v1642
        %1660 = vmatprep.subr.bf16.mxu0 0
        %1661 = vmatpush1.bf16.msra.mxu0 %v1643
        %1662 = vmatprep.subr.bf16.mxu0 0
        %1663 = vmatpush1.bf16.msra.mxu0 %v1644
        %1664 = vmatprep.subr.bf16.mxu0 0
        %1665 = vmatpush1.bf16.msra.mxu0 %v1645
        %1666 = vmatprep.subr.bf16.mxu0 0
        %1667 = vmatpush1.bf16.msra.mxu0 %v1646
        %1668 = vmatprep.subr.bf16.mxu0 0
        %1669 = vmatpush1.bf16.msra.mxu0 %v1647
        %1670 = vmatprep.subr.bf16.mxu0 0
        %1671 = vmatpush1.bf16.msra.mxu0 %v1648
        %1672 = vmatprep.subr.bf16.mxu0 0
        %1673 = vmatpush1.bf16.msra.mxu0 %v1649
        %1674 = vmatprep.subr.bf16.mxu0 0
        %1675 = vmatpush1.bf16.msra.mxu0 0
        %1676 = vmatprep.subr.bf16.mxu0 0
        %1677 = vmatpush1.bf16.msra.mxu0 0
        %1678 = vmatprep.subr.bf16.mxu0 0
        %1679 = vmatpush1.bf16.msra.mxu0 0
        %1680 = vmatprep.subr.bf16.mxu0 0
        %1681 = vmatpush1.bf16.msra.mxu0 0
        %1682 = vmatprep.subr.bf16.mxu0 0
        %1683 = vmatpush1.bf16.msra.mxu0 0
        %1684 = vmatprep.subr.bf16.mxu0 0
        %1685 = vmatpush1.bf16.msra.mxu0 0
        %1686 = vmatprep.subr.bf16.mxu0 0
        %1687 = vmatpush1.bf16.msra.mxu0 0
        %1688 = vmatprep.subr.bf16.mxu0 0
        %1689 = vmatpush1.bf16.msra.mxu0 0
        %1690 = vmatprep.mubr.bf16.mxu0 0
        %1691 = vmatmul.mubr.bf16.gmra.mrb[0].mxu0 %v1588
        %v1692 = vpop.f32.mrb[0].mxu0
        %v1693 = vadd.f32 %v1609, %v1692
        %v1694 = vpop.f32.mrb[0].mxu0
        %v1695 = vpop.f32.mrb[0].mxu0
        %v1696 = vpop.f32.mrb[0].mxu0
        %1697 = vdwg.mxu0
        %v1698 = vmax.f32 %v1693, 0.0
        %v1699 = vpack.c.bf16 %v1698, %v1698
        %v1700 = vld [vmem:[#allocation12] sm:$0xf]
        %v1701 = vld [vmem:[#allocation12 + $0x4] sm:$0xf]
        %v1702 = vld [vmem:[#allocation12 + $0x8] sm:$0xf]
        %v1703 = vld [vmem:[#allocation12 + $0xc] sm:$0xf]
        %v1704 = vld [vmem:[#allocation12 + $0x10] sm:$0xf]
        %v1705 = vld [vmem:[#allocation12 + $0x14] sm:$0xf]
        %v1706 = vld [vmem:[#allocation12 + $0x18] sm:$0xf]
        %v1707 = vld [vmem:[#allocation12 + $0x1c] sm:$0xf]
        %v1708 = vld [vmem:[#allocation12 + $0x20] sm:$0xf]
        %v1709 = vld [vmem:[#allocation12 + $0x24] sm:$0xf]
        %v1710 = vld [vmem:[#allocation12 + $0x28] sm:$0xf]
        %v1711 = vld [vmem:[#allocation12 + $0x2c] sm:$0xf]
        %v1712 = vld [vmem:[#allocation12 + $0x30] sm:$0xf]
        %v1713 = vld [vmem:[#allocation12 + $0x34] sm:$0xf]
        %v1714 = vld [vmem:[#allocation12 + $0x38] sm:$0xf]
        %v1715 = vld [vmem:[#allocation12 + $0x3c] sm:$0xf]
        %v1732 = vunpack.c.l.b16 %v1700
        %v1733 = vunpack.c.l.b16 %v1701
        %v1734 = vunpack.c.l.b16 %v1702
        %v1735 = vunpack.c.l.b16 %v1703
        %v1736 = vunpack.c.l.b16 %v1704
        %v1737 = vunpack.c.l.b16 %v1705
        %v1738 = vunpack.c.l.b16 %v1706
        %v1739 = vunpack.c.l.b16 %v1707
        %v1740 = vunpack.c.l.b16 %v1708
        %v1741 = vunpack.c.l.b16 %v1709
        %v1742 = vunpack.c.l.b16 %v1710
        %v1743 = vunpack.c.l.b16 %v1711
        %v1744 = vunpack.c.l.b16 %v1712
        %v1745 = vunpack.c.l.b16 %v1713
        %v1746 = vunpack.c.l.b16 %v1714
        %v1747 = vunpack.c.l.b16 %v1715
        %v1748 = vpack.c.b16 %v1733, %v1732
        %v1749 = vpack.c.b16 %v1735, %v1734
        %v1750 = vpack.c.b16 %v1737, %v1736
        %v1751 = vpack.c.b16 %v1739, %v1738
        %v1752 = vpack.c.b16 %v1741, %v1740
        %v1753 = vpack.c.b16 %v1743, %v1742
        %v1754 = vpack.c.b16 %v1745, %v1744
        %v1755 = vpack.c.b16 %v1747, %v1746
        %1764 = vmatprep.subr.bf16.mxu0 0
        %1765 = vmatpush1.bf16.msra.mxu0 %v1748
        %1766 = vmatprep.subr.bf16.mxu0 0
        %1767 = vmatpush1.bf16.msra.mxu0 %v1749
        %1768 = vmatprep.subr.bf16.mxu0 0
        %1769 = vmatpush1.bf16.msra.mxu0 %v1750
        %1770 = vmatprep.subr.bf16.mxu0 0
        %1771 = vmatpush1.bf16.msra.mxu0 %v1751
        %1772 = vmatprep.subr.bf16.mxu0 0
        %1773 = vmatpush1.bf16.msra.mxu0 %v1752
        %1774 = vmatprep.subr.bf16.mxu0 0
        %1775 = vmatpush1.bf16.msra.mxu0 %v1753
        %1776 = vmatprep.subr.bf16.mxu0 0
        %1777 = vmatpush1.bf16.msra.mxu0 %v1754
        %1778 = vmatprep.subr.bf16.mxu0 0
        %1779 = vmatpush1.bf16.msra.mxu0 %v1755
        %1780 = vmatprep.subr.bf16.mxu0 0
        %1781 = vmatpush1.bf16.msra.mxu0 0
        %1782 = vmatprep.subr.bf16.mxu0 0
        %1783 = vmatpush1.bf16.msra.mxu0 0
        %1784 = vmatprep.subr.bf16.mxu0 0
        %1785 = vmatpush1.bf16.msra.mxu0 0
        %1786 = vmatprep.subr.bf16.mxu0 0
        %1787 = vmatpush1.bf16.msra.mxu0 0
        %1788 = vmatprep.subr.bf16.mxu0 0
        %1789 = vmatpush1.bf16.msra.mxu0 0
        %1790 = vmatprep.subr.bf16.mxu0 0
        %1791 = vmatpush1.bf16.msra.mxu0 0
        %1792 = vmatprep.subr.bf16.mxu0 0
        %1793 = vmatpush1.bf16.msra.mxu0 0
        %1794 = vmatprep.subr.bf16.mxu0 0
        %1795 = vmatpush1.bf16.msra.mxu0 0
        %1796 = vmatprep.mubr.bf16.mxu0 0
        %1797 = vmatmul.mubr.bf16.gmra.mrb[0].mxu0 %v1699
        %v1798 = vpop.f32.mrb[0].mxu0
        %v1799 = vadd.f32 0.0, %v1798
        %v1800 = vpop.f32.mrb[0].mxu0
        %v1801 = vpop.f32.mrb[0].mxu0
        %v1802 = vpop.f32.mrb[0].mxu0
        %1803 = vdwg.mxu0
        %v1804 = vadd.f32 %v1562, %v1799
        %v1805 = vld [vmem:[#allocation13] sm:$0x1]
        %v1806 = vlaneseq
        %v1807 = vshrl.u32 %v1806, 7
        %v1808 = vsub.s32 0, %v1807
        %v1809 = vrot.slane %v1805, %v1808
        %v1810 = vadd.f32 %v1804, %v1809
        %v1811 = vld [vmem:[#allocation2 + $0x2] sm:$0x1]
        %v1812 = vld [vmem:[#allocation4 + $0x2] sm:$0x1]
        %v1813 = vmul.f32 %v1810, %v633
        %1814 = vadd.xlane.f32.xlu0 %v1813
        %v1815 = vpop.xlane.xlu0 %1814
        %v1816 = vmul.f32 %v1815, 0.03125
        %v1817 = vsub.f32 %v1810, %v1816
        %v1818 = vmul.f32 %v1817, %v633
        %v1819 = vmul.f32 %v1818, %v1818
        %1820 = vadd.xlane.f32.xlu0 %v1819
        %v1821 = vpop.xlane.xlu0 %1820
        %v1822 = vmul.f32 %v1821, 0.03125
        %v1823 = vadd.f32 %v1822, 1e-05
        %v1824 = vrsqrt.pop %v1823
        %v1825 = vmul.f32 %v1818, %v1824
        %v1826 = vlaneseq
        %v1827 = vshrl.u32 %v1826, 7
        %v1828 = vsub.s32 0, %v1827
        %v1829 = vrot.slane %v1811, %v1828
        %v1830 = vmul.f32 %v1825, %v1829
        %v1831 = vlaneseq
        %v1832 = vshrl.u32 %v1831, 7
        %v1833 = vsub.s32 0, %v1832
        %v1834 = vrot.slane %v1812, %v1833
        %v1835 = vadd.f32 %v1830, %v1834
        %v1836 = vpack.c.bf16 %v1835, %v1835
        %s1837 = scalar_lea.vmem [#allocation6], 192
        %v1838 = vld [vmem:[%s1837] sm:$0xff]
        %v1839 = vld [vmem:[%s1837 + $0x8] sm:$0xf]
        %v1840 = vld [vmem:[%s1837 + $0xc] sm:$0xff]
        %v1841 = vld [vmem:[%s1837 + $0x14] sm:$0xf]
        %v1842 = vld [vmem:[%s1837 + $0x18] sm:$0xff]
        %v1843 = vld [vmem:[%s1837 + $0x20] sm:$0xf]
        %v1844 = vld [vmem:[%s1837 + $0x24] sm:$0xff]
        %v1845 = vld [vmem:[%s1837 + $0x2c] sm:$0xf]
        %v1846 = vld [vmem:[%s1837 + $0x30] sm:$0xff]
        %v1847 = vld [vmem:[%s1837 + $0x38] sm:$0xf]
        %v1848 = vld [vmem:[%s1837 + $0x3c] sm:$0xff]
        %v1849 = vld [vmem:[%s1837 + $0x44] sm:$0xf]
        %v1850 = vld [vmem:[%s1837 + $0x48] sm:$0xff]
        %v1851 = vld [vmem:[%s1837 + $0x50] sm:$0xf]
        %v1852 = vld [vmem:[%s1837 + $0x54] sm:$0xff]
        %v1853 = vld [vmem:[%s1837 + $0x5c] sm:$0xf]
        %v1854 = vld [vmem:[%s1837 + $0x60] sm:$0xff]
        %v1855 = vld [vmem:[%s1837 + $0x68] sm:$0xf]
        %v1856 = vld [vmem:[%s1837 + $0x6c] sm:$0xff]
        %v1857 = vld [vmem:[%s1837 + $0x74] sm:$0xf]
        %v1858 = vld [vmem:[%s1837 + $0x78] sm:$0xff]
        %v1859 = vld [vmem:[%s1837 + $0x80] sm:$0xf]
        %v1860 = vld [vmem:[%s1837 + $0x84] sm:$0xff]
        %v1861 = vld [vmem:[%s1837 + $0x8c] sm:$0xf]
        %v1862 = vld [vmem:[%s1837 + $0x90] sm:$0xff]
        %v1863 = vld [vmem:[%s1837 + $0x98] sm:$0xf]
        %v1864 = vld [vmem:[%s1837 + $0x9c] sm:$0xff]
        %v1865 = vld [vmem:[%s1837 + $0xa4] sm:$0xf]
        %v1866 = vld [vmem:[%s1837 + $0xa8] sm:$0xff]
        %v1867 = vld [vmem:[%s1837 + $0xb0] sm:$0xf]
        %v1868 = vld [vmem:[%s1837 + $0xb4] sm:$0xff]
        %v1869 = vld [vmem:[%s1837 + $0xbc] sm:$0xf]
        %s1870 = scalar_lea.vmem [#allocation7], 1
        %v1871 = vld [vmem:[%s1870] ss:$2 sm:$0x7]
        %v1873 = vlaneseq
        %v1874 = vshrl.u32 %v1873, 7
        %v1875 = vsub.s32 0, %v1874
        %v1876 = vrot.slane %v1871, %v1875
        %v1877 = vlaneseq
        %v1878 = vshrl.u32 %v1877, 7
        %v1879 = vsub.s32 1, %v1878
        %v1880 = vrot.slane %v1871, %v1879
        %v1881 = vlaneseq
        %v1882 = vshrl.u32 %v1881, 7
        %v1883 = vsub.s32 2, %v1882
        %v1884 = vrot.slane %v1871, %v1883
        %v1920 = vunpack.c.l.b16 %v1838
        %v1921 = vunpack.c.h.b16 %v1838
        %v1922 = vunpack.c.l.b16 %v1839
        %v1923 = vunpack.c.l.b16 %v1840
        %v1924 = vunpack.c.h.b16 %v1840
        %v1925 = vunpack.c.l.b16 %v1841
        %v1926 = vunpack.c.l.b16 %v1842
        %v1927 = vunpack.c.h.b16 %v1842
        %v1928 = vunpack.c.l.b16 %v1843
        %v1929 = vunpack.c.l.b16 %v1844
        %v1930 = vunpack.c.h.b16 %v1844
        %v1931 = vunpack.c.l.b16 %v1845
        %v1932 = vunpack.c.l.b16 %v1846
        %v1933 = vunpack.c.h.b16 %v1846
        %v1934 = vunpack.c.l.b16 %v1847
        %v1935 = vunpack.c.l.b16 %v1848
        %v1936 = vunpack.c.h.b16 %v1848
        %v1937 = vunpack.c.l.b16 %v1849
        %v1938 = vunpack.c.l.b16 %v1850
        %v1939 = vunpack.c.h.b16 %v1850
        %v1940 = vunpack.c.l.b16 %v1851
        %v1941 = vunpack.c.l.b16 %v1852
        %v1942 = vunpack.c.h.b16 %v1852
        %v1943 = vunpack.c.l.b16 %v1853
        %v1944 = vunpack.c.l.b16 %v1854
        %v1945 = vunpack.c.h.b16 %v1854
        %v1946 = vunpack.c.l.b16 %v1855
        %v1947 = vunpack.c.l.b16 %v1856
        %v1948 = vunpack.c.h.b16 %v1856
        %v1949 = vunpack.c.l.b16 %v1857
        %v1950 = vunpack.c.l.b16 %v1858
        %v1951 = vunpack.c.h.b16 %v1858
        %v1952 = vunpack.c.l.b16 %v1859
        %v1953 = vunpack.c.l.b16 %v1860
        %v1954 = vunpack.c.h.b16 %v1860
        %v1955 = vunpack.c.l.b16 %v1861
        %v1956 = vunpack.c.l.b16 %v1862
        %v1957 = vunpack.c.h.b16 %v1862
        %v1958 = vunpack.c.l.b16 %v1863
        %v1959 = vunpack.c.l.b16 %v1864
        %v1960 = vunpack.c.h.b16 %v1864
        %v1961 = vunpack.c.l.b16 %v1865
        %v1962 = vunpack.c.l.b16 %v1866
        %v1963 = vunpack.c.h.b16 %v1866
        %v1964 = vunpack.c.l.b16 %v1867
        %v1965 = vunpack.c.l.b16 %v1868
        %v1966 = vunpack.c.h.b16 %v1868
        %v1967 = vunpack.c.l.b16 %v1869
        %v1968 = vpack.c.b16 %v1923, %v1920
        %v1969 = vpack.c.b16 %v1924, %v1921
        %v1970 = vpack.c.b16 %v1925, %v1922
        %v1971 = vpack.c.b16 %v1929, %v1926
        %v1972 = vpack.c.b16 %v1930, %v1927
        %v1973 = vpack.c.b16 %v1931, %v1928
        %v1974 = vpack.c.b16 %v1935, %v1932
        %v1975 = vpack.c.b16 %v1936, %v1933
        %v1976 = vpack.c.b16 %v1937, %v1934
        %v1977 = vpack.c.b16 %v1941, %v1938
        %v1978 = vpack.c.b16 %v1942, %v1939
        %v1979 = vpack.c.b16 %v1943, %v1940
        %v1980 = vpack.c.b16 %v1947, %v1944
        %v1981 = vpack.c.b16 %v1948, %v1945
        %v1982 = vpack.c.b16 %v1949, %v1946
        %v1983 = vpack.c.b16 %v1953, %v1950
        %v1984 = vpack.c.b16 %v1954, %v1951
        %v1985 = vpack.c.b16 %v1955, %v1952
        %v1986 = vpack.c.b16 %v1959, %v1956
        %v1987 = vpack.c.b16 %v1960, %v1957
        %v1988 = vpack.c.b16 %v1961, %v1958
        %v1989 = vpack.c.b16 %v1965, %v1962
        %v1990 = vpack.c.b16 %v1966, %v1963
        %v1991 = vpack.c.b16 %v1967, %v1964
        %2016 = vmatprep.subr.bf16.mxu0 %v1969
        %2017 = vmatpush1.bf16.msra.mxu0 %v1968
        %2018 = vmatprep.subr.bf16.mxu0 %v1972
        %2019 = vmatpush1.bf16.msra.mxu0 %v1971
        %2020 = vmatprep.subr.bf16.mxu0 %v1975
        %2021 = vmatpush1.bf16.msra.mxu0 %v1974
        %2022 = vmatprep.subr.bf16.mxu0 %v1978
        %2023 = vmatpush1.bf16.msra.mxu0 %v1977
        %2024 = vmatprep.subr.bf16.mxu0 %v1981
        %2025 = vmatpush1.bf16.msra.mxu0 %v1980
        %2026 = vmatprep.subr.bf16.mxu0 %v1984
        %2027 = vmatpush1.bf16.msra.mxu0 %v1983
        %2028 = vmatprep.subr.bf16.mxu0 %v1987
        %2029 = vmatpush1.bf16.msra.mxu0 %v1986
        %2030 = vmatprep.subr.bf16.mxu0 %v1990
        %2031 = vmatpush1.bf16.msra.mxu0 %v1989
        %2032 = vmatprep.subr.bf16.mxu0 0
        %2033 = vmatpush1.bf16.msra.mxu0 0
        %2034 = vmatprep.subr.bf16.mxu0 0
        %2035 = vmatpush1.bf16.msra.mxu0 0
        %2036 = vmatprep.subr.bf16.mxu0 0
        %2037 = vmatpush1.bf16.msra.mxu0 0
        %2038 = vmatprep.subr.bf16.mxu0 0
        %2039 = vmatpush1.bf16.msra.mxu0 0
        %2040 = vmatprep.subr.bf16.mxu0 0
        %2041 = vmatpush1.bf16.msra.mxu0 0
        %2042 = vmatprep.subr.bf16.mxu0 0
        %2043 = vmatpush1.bf16.msra.mxu0 0
        %2044 = vmatprep.subr.bf16.mxu0 0
        %2045 = vmatpush1.bf16.msra.mxu0 0
        %2046 = vmatprep.subr.bf16.mxu0 0
        %2047 = vmatpush1.bf16.msra.mxu0 0
        %2048 = vmatprep.mubr.bf16.mxu0 0
        %2049 = vmatmul.mubr.bf16.gmra.mrb[0].mxu0 %v1836
        %v2050 = vpop.f32.mrb[0].mxu0
        %v2051 = vadd.f32 %v1876, %v2050
        %v2052 = vpop.f32.mrb[0].mxu0
        %v2053 = vadd.f32 %v1880, %v2052
        %v2054 = vpop.f32.mrb[0].mxu0
        %v2055 = vpop.f32.mrb[0].mxu0
        %2056 = vdwg.mxu0
        %2057 = vmatprep.subr.bf16.mxu0 0
        %2058 = vmatpush1.bf16.msra.mxu0 %v1970
        %2059 = vmatprep.subr.bf16.mxu0 0
        %2060 = vmatpush1.bf16.msra.mxu0 %v1973
        %2061 = vmatprep.subr.bf16.mxu0 0
        %2062 = vmatpush1.bf16.msra.mxu0 %v1976
        %2063 = vmatprep.subr.bf16.mxu0 0
        %2064 = vmatpush1.bf16.msra.mxu0 %v1979
        %2065 = vmatprep.subr.bf16.mxu0 0
        %2066 = vmatpush1.bf16.msra.mxu0 %v1982
        %2067 = vmatprep.subr.bf16.mxu0 0
        %2068 = vmatpush1.bf16.msra.mxu0 %v1985
        %2069 = vmatprep.subr.bf16.mxu0 0
        %2070 = vmatpush1.bf16.msra.mxu0 %v1988
        %2071 = vmatprep.subr.bf16.mxu0 0
        %2072 = vmatpush1.bf16.msra.mxu0 %v1991
        %2073 = vmatprep.subr.bf16.mxu0 0
        %2074 = vmatpush1.bf16.msra.mxu0 0
        %2075 = vmatprep.subr.bf16.mxu0 0
        %2076 = vmatpush1.bf16.msra.mxu0 0
        %2077 = vmatprep.subr.bf16.mxu0 0
        %2078 = vmatpush1.bf16.msra.mxu0 0
        %2079 = vmatprep.subr.bf16.mxu0 0
        %2080 = vmatpush1.bf16.msra.mxu0 0
        %2081 = vmatprep.subr.bf16.mxu0 0
        %2082 = vmatpush1.bf16.msra.mxu0 0
        %2083 = vmatprep.subr.bf16.mxu0 0
        %2084 = vmatpush1.bf16.msra.mxu0 0
        %2085 = vmatprep.subr.bf16.mxu0 0
        %2086 = vmatpush1.bf16.msra.mxu0 0
        %2087 = vmatprep.subr.bf16.mxu0 0
        %2088 = vmatpush1.bf16.msra.mxu0 0
        %2089 = vmatprep.mubr.bf16.mxu0 0
        %2090 = vmatmul.mubr.bf16.gmra.mrb[0].mxu0 %v1836
        %v2091 = vpop.f32.mrb[0].mxu0
        %v2092 = vadd.f32 %v1884, %v2091
        %v2093 = vpop.f32.mrb[0].mxu0
        %v2094 = vpop.f32.mrb[0].mxu0
        %v2095 = vpop.f32.mrb[0].mxu0
        %2096 = vdwg.mxu0
        %v2097 = vpack.c.bf16 %v2051, %v2051
        %v2098 = vpack.c.bf16 %v2053, %v2053
        %v2099 = vpack.c.bf16 %v2092, %v2092
        %v2101 = vsel %vm1039, %v2097, 0
        %v2104 = vsel %vm1039, %v2098, 0
        %2106 = vmatprep.subr.bf16.mxu0 0
        %2107 = vmatpush1.bf16.xpose.msra.mxu0 %v2104
        %2108 = vmatprep.subr.bf16.mxu0 0
        %2109 = vmatpush1.bf16.xpose.msra.mxu0 0
        %2110 = vmatprep.subr.bf16.mxu0 0
        %2111 = vmatpush1.bf16.xpose.msra.mxu0 0
        %2112 = vmatprep.subr.bf16.mxu0 0
        %2113 = vmatpush1.bf16.xpose.msra.mxu0 0
        %2114 = vmatprep.subr.bf16.mxu0 0
        %2115 = vmatpush1.bf16.xpose.msra.mxu0 0
        %2116 = vmatprep.subr.bf16.mxu0 0
        %2117 = vmatpush1.bf16.xpose.msra.mxu0 0
        %2118 = vmatprep.subr.bf16.mxu0 0
        %2119 = vmatpush1.bf16.xpose.msra.mxu0 0
        %2120 = vmatprep.subr.bf16.mxu0 0
        %2121 = vmatpush1.bf16.xpose.msra.mxu0 0
        %2122 = vmatprep.subr.bf16.mxu0 0
        %2123 = vmatpush1.bf16.xpose.msra.mxu0 0
        %2124 = vmatprep.subr.bf16.mxu0 0
        %2125 = vmatpush1.bf16.xpose.msra.mxu0 0
        %2126 = vmatprep.subr.bf16.mxu0 0
        %2127 = vmatpush1.bf16.xpose.msra.mxu0 0
        %2128 = vmatprep.subr.bf16.mxu0 0
        %2129 = vmatpush1.bf16.xpose.msra.mxu0 0
        %2130 = vmatprep.subr.bf16.mxu0 0
        %2131 = vmatpush1.bf16.xpose.msra.mxu0 0
        %2132 = vmatprep.subr.bf16.mxu0 0
        %2133 = vmatpush1.bf16.xpose.msra.mxu0 0
        %2134 = vmatprep.subr.bf16.mxu0 0
        %2135 = vmatpush1.bf16.xpose.msra.mxu0 0
        %2136 = vmatprep.subr.bf16.mxu0 0
        %2137 = vmatpush1.bf16.xpose.msra.mxu0 0
        %2138 = vmatprep.mubr.bf16.mxu0 0
        %2139 = vmatmul.mubr.bf16.gmra.mrb[0].mxu0 %v2101
        %v2140 = vpop.f32.mrb[0].mxu0
        %v2141 = vadd.f32 %v751, %v2140
        %v2142 = vpop.f32.mrb[0].mxu0
        %v2143 = vpop.f32.mrb[0].mxu0
        %v2144 = vpop.f32.mrb[0].mxu0
        %2145 = vdwg.mxu0
        %v2146 = vsel %vm1039, %v2141, -inf
        %2147 = vmax.xlane.f32.xlu0 %v2146
        %v2148 = vpop.xlane.xlu0 %2147
        %v2149 = vsub.f32 %v2141, %v2148
        %v2150 = vmul.f32 %v2149, 1.442695
        %v2151 = vpow.pop %v2150
        %v2152 = vsel %vm1039, %v2151, 0.0
        %2153 = vadd.xlane.f32.xlu0 %v2152
        %v2154 = vpop.xlane.xlu0 %2153
        %v2155 = vrcp.pop %v2154
        %v2156 = vmul.f32 %v2151, %v2155
        %v2157 = vpack.c.bf16 %v2156, %v2156
        %v2159 = vsel %vm1039, %v2157, 0
        %v2162 = vsel %vm1101, %v2099, 0
        %2164 = vmatprep.subr.bf16.mxu0 0
        %2165 = vmatpush1.bf16.msra.mxu0 %v2162
        %2166 = vmatprep.subr.bf16.mxu0 0
        %2167 = vmatpush1.bf16.msra.mxu0 0
        %2168 = vmatprep.subr.bf16.mxu0 0
        %2169 = vmatpush1.bf16.msra.mxu0 0
        %2170 = vmatprep.subr.bf16.mxu0 0
        %2171 = vmatpush1.bf16.msra.mxu0 0
        %2172 = vmatprep.subr.bf16.mxu0 0
        %2173 = vmatpush1.bf16.msra.mxu0 0
        %2174 = vmatprep.subr.bf16.mxu0 0
        %2175 = vmatpush1.bf16.msra.mxu0 0
        %2176 = vmatprep.subr.bf16.mxu0 0
        %2177 = vmatpush1.bf16.msra.mxu0 0
        %2178 = vmatprep.subr.bf16.mxu0 0
        %2179 = vmatpush1.bf16.msra.mxu0 0
        %2180 = vmatprep.subr.bf16.mxu0 0
        %2181 = vmatpush1.bf16.msra.mxu0 0
        %2182 = vmatprep.subr.bf16.mxu0 0
        %2183 = vmatpush1.bf16.msra.mxu0 0
        %2184 = vmatprep.subr.bf16.mxu0 0
        %2185 = vmatpush1.bf16.msra.mxu0 0
        %2186 = vmatprep.subr.bf16.mxu0 0
        %2187 = vmatpush1.bf16.msra.mxu0 0
        %2188 = vmatprep.subr.bf16.mxu0 0
        %2189 = vmatpush1.bf16.msra.mxu0 0
        %2190 = vmatprep.subr.bf16.mxu0 0
        %2191 = vmatpush1.bf16.msra.mxu0 0
        %2192 = vmatprep.subr.bf16.mxu0 0
        %2193 = vmatpush1.bf16.msra.mxu0 0
        %2194 = vmatprep.subr.bf16.mxu0 0
        %2195 = vmatpush1.bf16.msra.mxu0 0
        %2196 = vmatprep.mubr.bf16.mxu0 0
        %2197 = vmatmul.mubr.bf16.gmra.mrb[0].mxu0 %v2159
        %v2198 = vpop.f32.mrb[0].mxu0
        %v2199 = vadd.f32 0.0, %v2198
        %v2200 = vpop.f32.mrb[0].mxu0
        %v2201 = vpop.f32.mrb[0].mxu0
        %v2202 = vpop.f32.mrb[0].mxu0
        %2203 = vdwg.mxu0
        %2205 = vrot.lane.b32.xlu0 %v2097, 120
        %v2206 = vpop.permute.xlu0 %2205
        %2208 = vrot.lane.b32.xlu0 %v2098, 120
        %v2209 = vpop.permute.xlu0 %2208
        %v2211 = vsel %vm1039, %v2206, 0
        %v2214 = vsel %vm1039, %v2209, 0
        %2216 = vmatprep.subr.bf16.mxu0 0
        %2217 = vmatpush1.bf16.xpose.msra.mxu0 %v2214
        %2218 = vmatprep.subr.bf16.mxu0 0
        %2219 = vmatpush1.bf16.xpose.msra.mxu0 0
        %2220 = vmatprep.subr.bf16.mxu0 0
        %2221 = vmatpush1.bf16.xpose.msra.mxu0 0
        %2222 = vmatprep.subr.bf16.mxu0 0
        %2223 = vmatpush1.bf16.xpose.msra.mxu0 0
        %2224 = vmatprep.subr.bf16.mxu0 0
        %2225 = vmatpush1.bf16.xpose.msra.mxu0 0
        %2226 = vmatprep.subr.bf16.mxu0 0
        %2227 = vmatpush1.bf16.xpose.msra.mxu0 0
        %2228 = vmatprep.subr.bf16.mxu0 0
        %2229 = vmatpush1.bf16.xpose.msra.mxu0 0
        %2230 = vmatprep.subr.bf16.mxu0 0
        %2231 = vmatpush1.bf16.xpose.msra.mxu0 0
        %2232 = vmatprep.subr.bf16.mxu0 0
        %2233 = vmatpush1.bf16.xpose.msra.mxu0 0
        %2234 = vmatprep.subr.bf16.mxu0 0
        %2235 = vmatpush1.bf16.xpose.msra.mxu0 0
        %2236 = vmatprep.subr.bf16.mxu0 0
        %2237 = vmatpush1.bf16.xpose.msra.mxu0 0
        %2238 = vmatprep.subr.bf16.mxu0 0
        %2239 = vmatpush1.bf16.xpose.msra.mxu0 0
        %2240 = vmatprep.subr.bf16.mxu0 0
        %2241 = vmatpush1.bf16.xpose.msra.mxu0 0
        %2242 = vmatprep.subr.bf16.mxu0 0
        %2243 = vmatpush1.bf16.xpose.msra.mxu0 0
        %2244 = vmatprep.subr.bf16.mxu0 0
        %2245 = vmatpush1.bf16.xpose.msra.mxu0 0
        %2246 = vmatprep.subr.bf16.mxu0 0
        %2247 = vmatpush1.bf16.xpose.msra.mxu0 0
        %2248 = vmatprep.mubr.bf16.mxu0 0
        %2249 = vmatmul.mubr.bf16.gmra.mrb[0].mxu0 %v2211
        %v2250 = vpop.f32.mrb[0].mxu0
        %v2251 = vadd.f32 %v751, %v2250
        %v2252 = vpop.f32.mrb[0].mxu0
        %v2253 = vpop.f32.mrb[0].mxu0
        %v2254 = vpop.f32.mrb[0].mxu0
        %2255 = vdwg.mxu0
        %v2256 = vsel %vm1039, %v2251, -inf
        %2257 = vmax.xlane.f32.xlu0 %v2256
        %v2258 = vpop.xlane.xlu0 %2257
        %v2259 = vsub.f32 %v2251, %v2258
        %v2260 = vmul.f32 %v2259, 1.442695
        %v2261 = vpow.pop %v2260
        %v2262 = vsel %vm1039, %v2261, 0.0
        %2263 = vadd.xlane.f32.xlu0 %v2262
        %v2264 = vpop.xlane.xlu0 %2263
        %v2265 = vrcp.pop %v2264
        %v2266 = vmul.f32 %v2261, %v2265
        %v2267 = vpack.c.bf16 %v2266, %v2266
        %2269 = vrot.lane.b32.xlu0 %v2099, 120
        %v2270 = vpop.permute.xlu0 %2269
        %v2272 = vsel %vm1039, %v2267, 0
        %v2275 = vsel %vm1101, %v2270, 0
        %2277 = vmatprep.subr.bf16.mxu0 0
        %2278 = vmatpush1.bf16.msra.mxu0 %v2275
        %2279 = vmatprep.subr.bf16.mxu0 0
        %2280 = vmatpush1.bf16.msra.mxu0 0
        %2281 = vmatprep.subr.bf16.mxu0 0
        %2282 = vmatpush1.bf16.msra.mxu0 0
        %2283 = vmatprep.subr.bf16.mxu0 0
        %2284 = vmatpush1.bf16.msra.mxu0 0
        %2285 = vmatprep.subr.bf16.mxu0 0
        %2286 = vmatpush1.bf16.msra.mxu0 0
        %2287 = vmatprep.subr.bf16.mxu0 0
        %2288 = vmatpush1.bf16.msra.mxu0 0
        %2289 = vmatprep.subr.bf16.mxu0 0
        %2290 = vmatpush1.bf16.msra.mxu0 0
        %2291 = vmatprep.subr.bf16.mxu0 0
        %2292 = vmatpush1.bf16.msra.mxu0 0
        %2293 = vmatprep.subr.bf16.mxu0 0
        %2294 = vmatpush1.bf16.msra.mxu0 0
        %2295 = vmatprep.subr.bf16.mxu0 0
        %2296 = vmatpush1.bf16.msra.mxu0 0
        %2297 = vmatprep.subr.bf16.mxu0 0
        %2298 = vmatpush1.bf16.msra.mxu0 0
        %2299 = vmatprep.subr.bf16.mxu0 0
        %2300 = vmatpush1.bf16.msra.mxu0 0
        %2301 = vmatprep.subr.bf16.mxu0 0
        %2302 = vmatpush1.bf16.msra.mxu0 0
        %2303 = vmatprep.subr.bf16.mxu0 0
        %2304 = vmatpush1.bf16.msra.mxu0 0
        %2305 = vmatprep.subr.bf16.mxu0 0
        %2306 = vmatpush1.bf16.msra.mxu0 0
        %2307 = vmatprep.subr.bf16.mxu0 0
        %2308 = vmatpush1.bf16.msra.mxu0 0
        %2309 = vmatprep.mubr.bf16.mxu0 0
        %2310 = vmatmul.mubr.bf16.gmra.mrb[0].mxu0 %v2272
        %v2311 = vpop.f32.mrb[0].mxu0
        %v2312 = vadd.f32 0.0, %v2311
        %v2313 = vpop.f32.mrb[0].mxu0
        %v2314 = vpop.f32.mrb[0].mxu0
        %v2315 = vpop.f32.mrb[0].mxu0
        %2316 = vdwg.mxu0
        %2317 = vrot.lane.b32.xlu0 %v2097, 112
        %v2318 = vpop.permute.xlu0 %2317
        %2319 = vrot.lane.b32.xlu0 %v2098, 112
        %v2320 = vpop.permute.xlu0 %2319
        %v2322 = vsel %vm1039, %v2318, 0
        %v2325 = vsel %vm1039, %v2320, 0
        %2327 = vmatprep.subr.bf16.mxu0 0
        %2328 = vmatpush1.bf16.xpose.msra.mxu0 %v2325
        %2329 = vmatprep.subr.bf16.mxu0 0
        %2330 = vmatpush1.bf16.xpose.msra.mxu0 0
        %2331 = vmatprep.subr.bf16.mxu0 0
        %2332 = vmatpush1.bf16.xpose.msra.mxu0 0
        %2333 = vmatprep.subr.bf16.mxu0 0
        %2334 = vmatpush1.bf16.xpose.msra.mxu0 0
        %2335 = vmatprep.subr.bf16.mxu0 0
        %2336 = vmatpush1.bf16.xpose.msra.mxu0 0
        %2337 = vmatprep.subr.bf16.mxu0 0
        %2338 = vmatpush1.bf16.xpose.msra.mxu0 0
        %2339 = vmatprep.subr.bf16.mxu0 0
        %2340 = vmatpush1.bf16.xpose.msra.mxu0 0
        %2341 = vmatprep.subr.bf16.mxu0 0
        %2342 = vmatpush1.bf16.xpose.msra.mxu0 0
        %2343 = vmatprep.subr.bf16.mxu0 0
        %2344 = vmatpush1.bf16.xpose.msra.mxu0 0
        %2345 = vmatprep.subr.bf16.mxu0 0
        %2346 = vmatpush1.bf16.xpose.msra.mxu0 0
        %2347 = vmatprep.subr.bf16.mxu0 0
        %2348 = vmatpush1.bf16.xpose.msra.mxu0 0
        %2349 = vmatprep.subr.bf16.mxu0 0
        %2350 = vmatpush1.bf16.xpose.msra.mxu0 0
        %2351 = vmatprep.subr.bf16.mxu0 0
        %2352 = vmatpush1.bf16.xpose.msra.mxu0 0
        %2353 = vmatprep.subr.bf16.mxu0 0
        %2354 = vmatpush1.bf16.xpose.msra.mxu0 0
        %2355 = vmatprep.subr.bf16.mxu0 0
        %2356 = vmatpush1.bf16.xpose.msra.mxu0 0
        %2357 = vmatprep.subr.bf16.mxu0 0
        %2358 = vmatpush1.bf16.xpose.msra.mxu0 0
        %2359 = vmatprep.mubr.bf16.mxu0 0
        %2360 = vmatmul.mubr.bf16.gmra.mrb[0].mxu0 %v2322
        %v2361 = vpop.f32.mrb[0].mxu0
        %v2362 = vadd.f32 %v751, %v2361
        %v2363 = vpop.f32.mrb[0].mxu0
        %v2364 = vpop.f32.mrb[0].mxu0
        %v2365 = vpop.f32.mrb[0].mxu0
        %2366 = vdwg.mxu0
        %v2367 = vsel %vm1039, %v2362, -inf
        %2368 = vmax.xlane.f32.xlu0 %v2367
        %v2369 = vpop.xlane.xlu0 %2368
        %v2370 = vsub.f32 %v2362, %v2369
        %v2371 = vmul.f32 %v2370, 1.442695
        %v2372 = vpow.pop %v2371
        %v2373 = vsel %vm1039, %v2372, 0.0
        %2374 = vadd.xlane.f32.xlu0 %v2373
        %v2375 = vpop.xlane.xlu0 %2374
        %v2376 = vrcp.pop %v2375
        %v2377 = vmul.f32 %v2372, %v2376
        %v2378 = vpack.c.bf16 %v2377, %v2377
        %2379 = vrot.lane.b32.xlu0 %v2099, 112
        %v2380 = vpop.permute.xlu0 %2379
        %v2382 = vsel %vm1039, %v2378, 0
        %v2385 = vsel %vm1101, %v2380, 0
        %2387 = vmatprep.subr.bf16.mxu0 0
        %2388 = vmatpush1.bf16.msra.mxu0 %v2385
        %2389 = vmatprep.subr.bf16.mxu0 0
        %2390 = vmatpush1.bf16.msra.mxu0 0
        %2391 = vmatprep.subr.bf16.mxu0 0
        %2392 = vmatpush1.bf16.msra.mxu0 0
        %2393 = vmatprep.subr.bf16.mxu0 0
        %2394 = vmatpush1.bf16.msra.mxu0 0
        %2395 = vmatprep.subr.bf16.mxu0 0
        %2396 = vmatpush1.bf16.msra.mxu0 0
        %2397 = vmatprep.subr.bf16.mxu0 0
        %2398 = vmatpush1.bf16.msra.mxu0 0
        %2399 = vmatprep.subr.bf16.mxu0 0
        %2400 = vmatpush1.bf16.msra.mxu0 0
        %2401 = vmatprep.subr.bf16.mxu0 0
        %2402 = vmatpush1.bf16.msra.mxu0 0
        %2403 = vmatprep.subr.bf16.mxu0 0
        %2404 = vmatpush1.bf16.msra.mxu0 0
        %2405 = vmatprep.subr.bf16.mxu0 0
        %2406 = vmatpush1.bf16.msra.mxu0 0
        %2407 = vmatprep.subr.bf16.mxu0 0
        %2408 = vmatpush1.bf16.msra.mxu0 0
        %2409 = vmatprep.subr.bf16.mxu0 0
        %2410 = vmatpush1.bf16.msra.mxu0 0
        %2411 = vmatprep.subr.bf16.mxu0 0
        %2412 = vmatpush1.bf16.msra.mxu0 0
        %2413 = vmatprep.subr.bf16.mxu0 0
        %2414 = vmatpush1.bf16.msra.mxu0 0
        %2415 = vmatprep.subr.bf16.mxu0 0
        %2416 = vmatpush1.bf16.msra.mxu0 0
        %2417 = vmatprep.subr.bf16.mxu0 0
        %2418 = vmatpush1.bf16.msra.mxu0 0
        %2419 = vmatprep.mubr.bf16.mxu0 0
        %2420 = vmatmul.mubr.bf16.gmra.mrb[0].mxu0 %v2382
        %v2421 = vpop.f32.mrb[0].mxu0
        %v2422 = vadd.f32 0.0, %v2421
        %v2423 = vpop.f32.mrb[0].mxu0
        %v2424 = vpop.f32.mrb[0].mxu0
        %v2425 = vpop.f32.mrb[0].mxu0
        %2426 = vdwg.mxu0
        %2427 = vrot.lane.b32.xlu0 %v2097, 104
        %v2428 = vpop.permute.xlu0 %2427
        %2429 = vrot.lane.b32.xlu0 %v2098, 104
        %v2430 = vpop.permute.xlu0 %2429
        %v2432 = vsel %vm1039, %v2428, 0
        %v2435 = vsel %vm1039, %v2430, 0
        %2437 = vmatprep.subr.bf16.mxu0 0
        %2438 = vmatpush1.bf16.xpose.msra.mxu0 %v2435
        %2439 = vmatprep.subr.bf16.mxu0 0
        %2440 = vmatpush1.bf16.xpose.msra.mxu0 0
        %2441 = vmatprep.subr.bf16.mxu0 0
        %2442 = vmatpush1.bf16.xpose.msra.mxu0 0
        %2443 = vmatprep.subr.bf16.mxu0 0
        %2444 = vmatpush1.bf16.xpose.msra.mxu0 0
        %2445 = vmatprep.subr.bf16.mxu0 0
        %2446 = vmatpush1.bf16.xpose.msra.mxu0 0
        %2447 = vmatprep.subr.bf16.mxu0 0
        %2448 = vmatpush1.bf16.xpose.msra.mxu0 0
        %2449 = vmatprep.subr.bf16.mxu0 0
        %2450 = vmatpush1.bf16.xpose.msra.mxu0 0
        %2451 = vmatprep.subr.bf16.mxu0 0
        %2452 = vmatpush1.bf16.xpose.msra.mxu0 0
        %2453 = vmatprep.subr.bf16.mxu0 0
        %2454 = vmatpush1.bf16.xpose.msra.mxu0 0
        %2455 = vmatprep.subr.bf16.mxu0 0
        %2456 = vmatpush1.bf16.xpose.msra.mxu0 0
        %2457 = vmatprep.subr.bf16.mxu0 0
        %2458 = vmatpush1.bf16.xpose.msra.mxu0 0
        %2459 = vmatprep.subr.bf16.mxu0 0
        %2460 = vmatpush1.bf16.xpose.msra.mxu0 0
        %2461 = vmatprep.subr.bf16.mxu0 0
        %2462 = vmatpush1.bf16.xpose.msra.mxu0 0
        %2463 = vmatprep.subr.bf16.mxu0 0
        %2464 = vmatpush1.bf16.xpose.msra.mxu0 0
        %2465 = vmatprep.subr.bf16.mxu0 0
        %2466 = vmatpush1.bf16.xpose.msra.mxu0 0
        %2467 = vmatprep.subr.bf16.mxu0 0
        %2468 = vmatpush1.bf16.xpose.msra.mxu0 0
        %2469 = vmatprep.mubr.bf16.mxu0 0
        %2470 = vmatmul.mubr.bf16.gmra.mrb[0].mxu0 %v2432
        %v2471 = vpop.f32.mrb[0].mxu0
        %v2472 = vadd.f32 %v751, %v2471
        %v2473 = vpop.f32.mrb[0].mxu0
        %v2474 = vpop.f32.mrb[0].mxu0
        %v2475 = vpop.f32.mrb[0].mxu0
        %2476 = vdwg.mxu0
        %v2477 = vsel %vm1039, %v2472, -inf
        %2478 = vmax.xlane.f32.xlu0 %v2477
        %v2479 = vpop.xlane.xlu0 %2478
        %v2480 = vsub.f32 %v2472, %v2479
        %v2481 = vmul.f32 %v2480, 1.442695
        %v2482 = vpow.pop %v2481
        %v2483 = vsel %vm1039, %v2482, 0.0
        %2484 = vadd.xlane.f32.xlu0 %v2483
        %v2485 = vpop.xlane.xlu0 %2484
        %v2486 = vrcp.pop %v2485
        %v2487 = vmul.f32 %v2482, %v2486
        %v2488 = vpack.c.bf16 %v2487, %v2487
        %2489 = vrot.lane.b32.xlu0 %v2099, 104
        %v2490 = vpop.permute.xlu0 %2489
        %v2492 = vsel %vm1039, %v2488, 0
        %v2495 = vsel %vm1101, %v2490, 0
        %2497 = vmatprep.subr.bf16.mxu0 0
        %2498 = vmatpush1.bf16.msra.mxu0 %v2495
        %2499 = vmatprep.subr.bf16.mxu0 0
        %2500 = vmatpush1.bf16.msra.mxu0 0
        %2501 = vmatprep.subr.bf16.mxu0 0
        %2502 = vmatpush1.bf16.msra.mxu0 0
        %2503 = vmatprep.subr.bf16.mxu0 0
        %2504 = vmatpush1.bf16.msra.mxu0 0
        %2505 = vmatprep.subr.bf16.mxu0 0
        %2506 = vmatpush1.bf16.msra.mxu0 0
        %2507 = vmatprep.subr.bf16.mxu0 0
        %2508 = vmatpush1.bf16.msra.mxu0 0
        %2509 = vmatprep.subr.bf16.mxu0 0
        %2510 = vmatpush1.bf16.msra.mxu0 0
        %2511 = vmatprep.subr.bf16.mxu0 0
        %2512 = vmatpush1.bf16.msra.mxu0 0
        %2513 = vmatprep.subr.bf16.mxu0 0
        %2514 = vmatpush1.bf16.msra.mxu0 0
        %2515 = vmatprep.subr.bf16.mxu0 0
        %2516 = vmatpush1.bf16.msra.mxu0 0
        %2517 = vmatprep.subr.bf16.mxu0 0
        %2518 = vmatpush1.bf16.msra.mxu0 0
        %2519 = vmatprep.subr.bf16.mxu0 0
        %2520 = vmatpush1.bf16.msra.mxu0 0
        %2521 = vmatprep.subr.bf16.mxu0 0
        %2522 = vmatpush1.bf16.msra.mxu0 0
        %2523 = vmatprep.subr.bf16.mxu0 0
        %2524 = vmatpush1.bf16.msra.mxu0 0
        %2525 = vmatprep.subr.bf16.mxu0 0
        %2526 = vmatpush1.bf16.msra.mxu0 0
        %2527 = vmatprep.subr.bf16.mxu0 0
        %2528 = vmatpush1.bf16.msra.mxu0 0
        %2529 = vmatprep.mubr.bf16.mxu0 0
        %2530 = vmatmul.mubr.bf16.gmra.mrb[0].mxu0 %v2492
        %v2531 = vpop.f32.mrb[0].mxu0
        %v2532 = vadd.f32 0.0, %v2531
        %v2533 = vpop.f32.mrb[0].mxu0
        %v2534 = vpop.f32.mrb[0].mxu0
        %v2535 = vpop.f32.mrb[0].mxu0
        %2536 = vdwg.mxu0
        %2538 = vrot.lane.b32.xlu0 %v2312, 8
        %v2539 = vpop.permute.xlu0 %2538
        %2542 = vrot.lane.b32.xlu0 %v2422, 16
        %v2543 = vpop.permute.xlu0 %2542
        %2546 = vrot.lane.b32.xlu0 %v2532, 24
        %v2547 = vpop.permute.xlu0 %2546
        %v2549 = vsel %vm1039, %v2199, %v2539
        %v2550 = vsel %vm1491, %v2549, %v2543
        %v2551 = vsel %vm1493, %v2550, %v2547
        %v2552 = vpack.c.bf16 %v2551, %v2551
        %s2553 = scalar_lea.vmem %s7, 16
        %v2554 = vld [vmem:[%s2553] sm:$0xf]
        %v2555 = vld [vmem:[%s2553 + $0x4] sm:$0xf]
        %v2556 = vld [vmem:[%s2553 + $0x8] sm:$0xf]
        %v2557 = vld [vmem:[%s2553 + $0xc] sm:$0xf]
        %v2562 = vunpack.c.l.b16 %v2554
        %v2563 = vunpack.c.l.b16 %v2555
        %v2564 = vunpack.c.l.b16 %v2556
        %v2565 = vunpack.c.l.b16 %v2557
        %v2566 = vpack.c.b16 %v2563, %v2562
        %v2567 = vpack.c.b16 %v2565, %v2564
        %v2571 = vsel %vm1512, %v2552, 0
        %2573 = vmatprep.subr.bf16.mxu0 0
        %2574 = vmatpush1.bf16.msra.mxu0 %v2566
        %2575 = vmatprep.subr.bf16.mxu0 0
        %2576 = vmatpush1.bf16.msra.mxu0 %v2567
        %2577 = vmatprep.subr.bf16.mxu0 0
        %2578 = vmatpush1.bf16.msra.mxu0 0
        %2579 = vmatprep.subr.bf16.mxu0 0
        %2580 = vmatpush1.bf16.msra.mxu0 0
        %2581 = vmatprep.subr.bf16.mxu0 0
        %2582 = vmatpush1.bf16.msra.mxu0 0
        %2583 = vmatprep.subr.bf16.mxu0 0
        %2584 = vmatpush1.bf16.msra.mxu0 0
        %2585 = vmatprep.subr.bf16.mxu0 0
        %2586 = vmatpush1.bf16.msra.mxu0 0
        %2587 = vmatprep.subr.bf16.mxu0 0
        %2588 = vmatpush1.bf16.msra.mxu0 0
        %2589 = vmatprep.subr.bf16.mxu0 0
        %2590 = vmatpush1.bf16.msra.mxu0 0
        %2591 = vmatprep.subr.bf16.mxu0 0
        %2592 = vmatpush1.bf16.msra.mxu0 0
        %2593 = vmatprep.subr.bf16.mxu0 0
        %2594 = vmatpush1.bf16.msra.mxu0 0
        %2595 = vmatprep.subr.bf16.mxu0 0
        %2596 = vmatpush1.bf16.msra.mxu0 0
        %2597 = vmatprep.subr.bf16.mxu0 0
        %2598 = vmatpush1.bf16.msra.mxu0 0
        %2599 = vmatprep.subr.bf16.mxu0 0
        %2600 = vmatpush1.bf16.msra.mxu0 0
        %2601 = vmatprep.subr.bf16.mxu0 0
        %2602 = vmatpush1.bf16.msra.mxu0 0
        %2603 = vmatprep.subr.bf16.mxu0 0
        %2604 = vmatpush1.bf16.msra.mxu0 0
        %2605 = vmatprep.mubr.bf16.mxu0 0
        %2606 = vmatmul.mubr.bf16.gmra.mrb[0].mxu0 %v2571
        %v2607 = vpop.f32.mrb[0].mxu0
        %v2608 = vadd.f32 0.0, %v2607
        %v2609 = vpop.f32.mrb[0].mxu0
        %v2610 = vpop.f32.mrb[0].mxu0
        %v2611 = vpop.f32.mrb[0].mxu0
        %2612 = vdwg.mxu0
        %v2613 = vadd.f32 %v1810, %v2608
        %v2614 = vld [vmem:[%s8 + $0x1] sm:$0x1]
        %v2615 = vlaneseq
        %v2616 = vshrl.u32 %v2615, 7
        %v2617 = vsub.s32 0, %v2616
        %v2618 = vrot.slane %v2614, %v2617
        %v2619 = vadd.f32 %v2613, %v2618
        %v2620 = vld [vmem:[#allocation2 + $0x3] sm:$0x1]
        %v2621 = vld [vmem:[#allocation4 + $0x3] sm:$0x1]
        %v2622 = vmul.f32 %v2619, %v633
        %2623 = vadd.xlane.f32.xlu0 %v2622
        %v2624 = vpop.xlane.xlu0 %2623
        %v2625 = vmul.f32 %v2624, 0.03125
        %v2626 = vsub.f32 %v2619, %v2625
        %v2627 = vmul.f32 %v2626, %v633
        %v2628 = vmul.f32 %v2627, %v2627
        %2629 = vadd.xlane.f32.xlu0 %v2628
        %v2630 = vpop.xlane.xlu0 %2629
        %v2631 = vmul.f32 %v2630, 0.03125
        %v2632 = vadd.f32 %v2631, 1e-05
        %v2633 = vrsqrt.pop %v2632
        %v2634 = vmul.f32 %v2627, %v2633
        %v2635 = vlaneseq
        %v2636 = vshrl.u32 %v2635, 7
        %v2637 = vsub.s32 0, %v2636
        %v2638 = vrot.slane %v2620, %v2637
        %v2639 = vmul.f32 %v2634, %v2638
        %v2640 = vlaneseq
        %v2641 = vshrl.u32 %v2640, 7
        %v2642 = vsub.s32 0, %v2641
        %v2643 = vrot.slane %v2621, %v2642
        %v2644 = vadd.f32 %v2639, %v2643
        %v2645 = vpack.c.bf16 %v2644, %v2644
        %s2646 = scalar_lea.vmem [#allocation9], 64
        %v2647 = vld [vmem:[%s2646] sm:$0xf]
        %v2648 = vld [vmem:[%s2646 + $0x4] sm:$0xf]
        %v2649 = vld [vmem:[%s2646 + $0x8] sm:$0xf]
        %v2650 = vld [vmem:[%s2646 + $0xc] sm:$0xf]
        %v2651 = vld [vmem:[%s2646 + $0x10] sm:$0xf]
        %v2652 = vld [vmem:[%s2646 + $0x14] sm:$0xf]
        %v2653 = vld [vmem:[%s2646 + $0x18] sm:$0xf]
        %v2654 = vld [vmem:[%s2646 + $0x1c] sm:$0xf]
        %v2655 = vld [vmem:[%s2646 + $0x20] sm:$0xf]
        %v2656 = vld [vmem:[%s2646 + $0x24] sm:$0xf]
        %v2657 = vld [vmem:[%s2646 + $0x28] sm:$0xf]
        %v2658 = vld [vmem:[%s2646 + $0x2c] sm:$0xf]
        %v2659 = vld [vmem:[%s2646 + $0x30] sm:$0xf]
        %v2660 = vld [vmem:[%s2646 + $0x34] sm:$0xf]
        %v2661 = vld [vmem:[%s2646 + $0x38] sm:$0xf]
        %v2662 = vld [vmem:[%s2646 + $0x3c] sm:$0xf]
        %v2663 = vld [vmem:[#allocation10 + $0x1] sm:$0x1]
        %v2664 = vlaneseq
        %v2665 = vshrl.u32 %v2664, 7
        %v2666 = vsub.s32 0, %v2665
        %v2667 = vrot.slane %v2663, %v2666
        %v2684 = vunpack.c.l.b16 %v2647
        %v2685 = vunpack.c.l.b16 %v2648
        %v2686 = vunpack.c.l.b16 %v2649
        %v2687 = vunpack.c.l.b16 %v2650
        %v2688 = vunpack.c.l.b16 %v2651
        %v2689 = vunpack.c.l.b16 %v2652
        %v2690 = vunpack.c.l.b16 %v2653
        %v2691 = vunpack.c.l.b16 %v2654
        %v2692 = vunpack.c.l.b16 %v2655
        %v2693 = vunpack.c.l.b16 %v2656
        %v2694 = vunpack.c.l.b16 %v2657
        %v2695 = vunpack.c.l.b16 %v2658
        %v2696 = vunpack.c.l.b16 %v2659
        %v2697 = vunpack.c.l.b16 %v2660
        %v2698 = vunpack.c.l.b16 %v2661
        %v2699 = vunpack.c.l.b16 %v2662
        %v2700 = vpack.c.b16 %v2685, %v2684
        %v2701 = vpack.c.b16 %v2687, %v2686
        %v2702 = vpack.c.b16 %v2689, %v2688
        %v2703 = vpack.c.b16 %v2691, %v2690
        %v2704 = vpack.c.b16 %v2693, %v2692
        %v2705 = vpack.c.b16 %v2695, %v2694
        %v2706 = vpack.c.b16 %v2697, %v2696
        %v2707 = vpack.c.b16 %v2699, %v2698
        %2716 = vmatprep.subr.bf16.mxu0 0
        %2717 = vmatpush1.bf16.msra.mxu0 %v2700
        %2718 = vmatprep.subr.bf16.mxu0 0
        %2719 = vmatpush1.bf16.msra.mxu0 %v2701
        %2720 = vmatprep.subr.bf16.mxu0 0
        %2721 = vmatpush1.bf16.msra.mxu0 %v2702
        %2722 = vmatprep.subr.bf16.mxu0 0
        %2723 = vmatpush1.bf16.msra.mxu0 %v2703
        %2724 = vmatprep.subr.bf16.mxu0 0
        %2725 = vmatpush1.bf16.msra.mxu0 %v2704
        %2726 = vmatprep.subr.bf16.mxu0 0
        %2727 = vmatpush1.bf16.msra.mxu0 %v2705
        %2728 = vmatprep.subr.bf16.mxu0 0
        %2729 = vmatpush1.bf16.msra.mxu0 %v2706
        %2730 = vmatprep.subr.bf16.mxu0 0
        %2731 = vmatpush1.bf16.msra.mxu0 %v2707
        %2732 = vmatprep.subr.bf16.mxu0 0
        %2733 = vmatpush1.bf16.msra.mxu0 0
        %2734 = vmatprep.subr.bf16.mxu0 0
        %2735 = vmatpush1.bf16.msra.mxu0 0
        %2736 = vmatprep.subr.bf16.mxu0 0
        %2737 = vmatpush1.bf16.msra.mxu0 0
        %2738 = vmatprep.subr.bf16.mxu0 0
        %2739 = vmatpush1.bf16.msra.mxu0 0
        %2740 = vmatprep.subr.bf16.mxu0 0
        %2741 = vmatpush1.bf16.msra.mxu0 0
        %2742 = vmatprep.subr.bf16.mxu0 0
        %2743 = vmatpush1.bf16.msra.mxu0 0
        %2744 = vmatprep.subr.bf16.mxu0 0
        %2745 = vmatpush1.bf16.msra.mxu0 0
        %2746 = vmatprep.subr.bf16.mxu0 0
        %2747 = vmatpush1.bf16.msra.mxu0 0
        %2748 = vmatprep.mubr.bf16.mxu0 0
        %2749 = vmatmul.mubr.bf16.gmra.mrb[0].mxu0 %v2645
        %v2750 = vpop.f32.mrb[0].mxu0
        %v2751 = vadd.f32 %v2667, %v2750
        %v2752 = vpop.f32.mrb[0].mxu0
        %v2753 = vpop.f32.mrb[0].mxu0
        %v2754 = vpop.f32.mrb[0].mxu0
        %2755 = vdwg.mxu0
        %v2756 = vmax.f32 %v2751, 0.0
        %v2757 = vpack.c.bf16 %v2756, %v2756
        %s2758 = scalar_lea.vmem [#allocation12], 64
        %v2759 = vld [vmem:[%s2758] sm:$0xf]
        %v2760 = vld [vmem:[%s2758 + $0x4] sm:$0xf]
        %v2761 = vld [vmem:[%s2758 + $0x8] sm:$0xf]
        %v2762 = vld [vmem:[%s2758 + $0xc] sm:$0xf]
        %v2763 = vld [vmem:[%s2758 + $0x10] sm:$0xf]
        %v2764 = vld [vmem:[%s2758 + $0x14] sm:$0xf]
        %v2765 = vld [vmem:[%s2758 + $0x18] sm:$0xf]
        %v2766 = vld [vmem:[%s2758 + $0x1c] sm:$0xf]
        %v2767 = vld [vmem:[%s2758 + $0x20] sm:$0xf]
        %v2768 = vld [vmem:[%s2758 + $0x24] sm:$0xf]
        %v2769 = vld [vmem:[%s2758 + $0x28] sm:$0xf]
        %v2770 = vld [vmem:[%s2758 + $0x2c] sm:$0xf]
        %v2771 = vld [vmem:[%s2758 + $0x30] sm:$0xf]
        %v2772 = vld [vmem:[%s2758 + $0x34] sm:$0xf]
        %v2773 = vld [vmem:[%s2758 + $0x38] sm:$0xf]
        %v2774 = vld [vmem:[%s2758 + $0x3c] sm:$0xf]
        %v2791 = vunpack.c.l.b16 %v2759
        %v2792 = vunpack.c.l.b16 %v2760
        %v2793 = vunpack.c.l.b16 %v2761
        %v2794 = vunpack.c.l.b16 %v2762
        %v2795 = vunpack.c.l.b16 %v2763
        %v2796 = vunpack.c.l.b16 %v2764
        %v2797 = vunpack.c.l.b16 %v2765
        %v2798 = vunpack.c.l.b16 %v2766
        %v2799 = vunpack.c.l.b16 %v2767
        %v2800 = vunpack.c.l.b16 %v2768
        %v2801 = vunpack.c.l.b16 %v2769
        %v2802 = vunpack.c.l.b16 %v2770
        %v2803 = vunpack.c.l.b16 %v2771
        %v2804 = vunpack.c.l.b16 %v2772
        %v2805 = vunpack.c.l.b16 %v2773
        %v2806 = vunpack.c.l.b16 %v2774
        %v2807 = vpack.c.b16 %v2792, %v2791
        %v2808 = vpack.c.b16 %v2794, %v2793
        %v2809 = vpack.c.b16 %v2796, %v2795
        %v2810 = vpack.c.b16 %v2798, %v2797
        %v2811 = vpack.c.b16 %v2800, %v2799
        %v2812 = vpack.c.b16 %v2802, %v2801
        %v2813 = vpack.c.b16 %v2804, %v2803
        %v2814 = vpack.c.b16 %v2806, %v2805
        %2823 = vmatprep.subr.bf16.mxu0 0
        %2824 = vmatpush1.bf16.msra.mxu0 %v2807
        %2825 = vmatprep.subr.bf16.mxu0 0
        %2826 = vmatpush1.bf16.msra.mxu0 %v2808
        %2827 = vmatprep.subr.bf16.mxu0 0
        %2828 = vmatpush1.bf16.msra.mxu0 %v2809
        %2829 = vmatprep.subr.bf16.mxu0 0
        %2830 = vmatpush1.bf16.msra.mxu0 %v2810
        %2831 = vmatprep.subr.bf16.mxu0 0
        %2832 = vmatpush1.bf16.msra.mxu0 %v2811
        %2833 = vmatprep.subr.bf16.mxu0 0
        %2834 = vmatpush1.bf16.msra.mxu0 %v2812
        %2835 = vmatprep.subr.bf16.mxu0 0
        %2836 = vmatpush1.bf16.msra.mxu0 %v2813
        %2837 = vmatprep.subr.bf16.mxu0 0
        %2838 = vmatpush1.bf16.msra.mxu0 %v2814
        %2839 = vmatprep.subr.bf16.mxu0 0
        %2840 = vmatpush1.bf16.msra.mxu0 0
        %2841 = vmatprep.subr.bf16.mxu0 0
        %2842 = vmatpush1.bf16.msra.mxu0 0
        %2843 = vmatprep.subr.bf16.mxu0 0
        %2844 = vmatpush1.bf16.msra.mxu0 0
        %2845 = vmatprep.subr.bf16.mxu0 0
        %2846 = vmatpush1.bf16.msra.mxu0 0
        %2847 = vmatprep.subr.bf16.mxu0 0
        %2848 = vmatpush1.bf16.msra.mxu0 0
        %2849 = vmatprep.subr.bf16.mxu0 0
        %2850 = vmatpush1.bf16.msra.mxu0 0
        %2851 = vmatprep.subr.bf16.mxu0 0
        %2852 = vmatpush1.bf16.msra.mxu0 0
        %2853 = vmatprep.subr.bf16.mxu0 0
        %2854 = vmatpush1.bf16.msra.mxu0 0
        %2855 = vmatprep.mubr.bf16.mxu0 0
        %2856 = vmatmul.mubr.bf16.gmra.mrb[0].mxu0 %v2757
        %v2857 = vpop.f32.mrb[0].mxu0
        %v2858 = vadd.f32 0.0, %v2857
        %v2859 = vpop.f32.mrb[0].mxu0
        %v2860 = vpop.f32.mrb[0].mxu0
        %v2861 = vpop.f32.mrb[0].mxu0
        %2862 = vdwg.mxu0
        %v2863 = vadd.f32 %v2619, %v2858
        %v2864 = vld [vmem:[#allocation13 + $0x1] sm:$0x1]
        %v2865 = vlaneseq
        %v2866 = vshrl.u32 %v2865, 7
        %v2867 = vsub.s32 0, %v2866
        %v2868 = vrot.slane %v2864, %v2867
        %v2869 = vadd.f32 %v2863, %v2868
        %v2870 = vld [vmem:[#allocation2 + $0x4] sm:$0x1]
        %v2871 = vld [vmem:[#allocation4 + $0x4] sm:$0x1]
        %v2872 = vmul.f32 %v2869, %v633
        %2873 = vadd.xlane.f32.xlu0 %v2872
        %v2874 = vpop.xlane.xlu0 %2873
        %v2875 = vmul.f32 %v2874, 0.03125
        %v2876 = vsub.f32 %v2869, %v2875
        %v2877 = vmul.f32 %v2876, %v633
        %v2878 = vmul.f32 %v2877, %v2877
        %2879 = vadd.xlane.f32.xlu0 %v2878
        %v2880 = vpop.xlane.xlu0 %2879
        %v2881 = vmul.f32 %v2880, 0.03125
        %v2882 = vadd.f32 %v2881, 1e-05
        %v2883 = vrsqrt.pop %v2882
        %v2884 = vmul.f32 %v2877, %v2883
        %v2885 = vlaneseq
        %v2886 = vshrl.u32 %v2885, 7
        %v2887 = vsub.s32 0, %v2886
        %v2888 = vrot.slane %v2870, %v2887
        %v2889 = vmul.f32 %v2884, %v2888
        %v2890 = vlaneseq
        %v2891 = vshrl.u32 %v2890, 7
        %v2892 = vsub.s32 0, %v2891
        %v2893 = vrot.slane %v2871, %v2892
        %v2894 = vadd.f32 %v2889, %v2893
        %v2895 = vpack.c.bf16 %v2894, %v2894
        %v2896 = vld [vmem:[#allocation15] sm:$0xf]
        %v2897 = vld [vmem:[#allocation15 + $0x4] sm:$0xf]
        %v2898 = vld [vmem:[#allocation15 + $0x8] sm:$0xf]
        %v2899 = vld [vmem:[#allocation15 + $0xc] sm:$0xf]
        %v2900 = vld [vmem:[#allocation15 + $0x10] sm:$0xf]
        %v2901 = vld [vmem:[#allocation15 + $0x14] sm:$0xf]
        %v2902 = vld [vmem:[#allocation15 + $0x18] sm:$0xf]
        %v2903 = vld [vmem:[#allocation15 + $0x1c] sm:$0xf]
        %v2904 = vld [vmem:[#allocation15 + $0x20] sm:$0xf]
        %v2905 = vld [vmem:[#allocation15 + $0x24] sm:$0xf]
        %v2906 = vld [vmem:[#allocation15 + $0x28] sm:$0xf]
        %v2907 = vld [vmem:[#allocation15 + $0x2c] sm:$0xf]
        %v2908 = vld [vmem:[#allocation15 + $0x30] sm:$0xf]
        %v2909 = vld [vmem:[#allocation15 + $0x34] sm:$0xf]
        %v2910 = vld [vmem:[#allocation15 + $0x38] sm:$0xf]
        %v2911 = vld [vmem:[#allocation15 + $0x3c] sm:$0xf]
        %v2912 = vld [vmem:[%s14] sm:$0x1]
        %v2914 = vlaneseq
        %v2915 = vshrl.u32 %v2914, 7
        %v2916 = vsub.s32 0, %v2915
        %v2917 = vrot.slane %v2912, %v2916
        %v2935 = vunpack.c.l.b16 %v2896
        %v2936 = vunpack.c.l.b16 %v2897
        %v2937 = vunpack.c.l.b16 %v2898
        %v2938 = vunpack.c.l.b16 %v2899
        %v2939 = vunpack.c.l.b16 %v2900
        %v2940 = vunpack.c.l.b16 %v2901
        %v2941 = vunpack.c.l.b16 %v2902
        %v2942 = vunpack.c.l.b16 %v2903
        %v2943 = vunpack.c.l.b16 %v2904
        %v2944 = vunpack.c.l.b16 %v2905
        %v2945 = vunpack.c.l.b16 %v2906
        %v2946 = vunpack.c.l.b16 %v2907
        %v2947 = vunpack.c.l.b16 %v2908
        %v2948 = vunpack.c.l.b16 %v2909
        %v2949 = vunpack.c.l.b16 %v2910
        %v2950 = vunpack.c.l.b16 %v2911
        %v2951 = vpack.c.b16 %v2936, %v2935
        %v2952 = vpack.c.b16 %v2938, %v2937
        %v2953 = vpack.c.b16 %v2940, %v2939
        %v2954 = vpack.c.b16 %v2942, %v2941
        %v2955 = vpack.c.b16 %v2944, %v2943
        %v2956 = vpack.c.b16 %v2946, %v2945
        %v2957 = vpack.c.b16 %v2948, %v2947
        %v2958 = vpack.c.b16 %v2950, %v2949
        %2967 = vmatprep.subr.bf16.mxu0 0
        %2968 = vmatpush1.bf16.msra.mxu0 %v2951
        %2969 = vmatprep.subr.bf16.mxu0 0
        %2970 = vmatpush1.bf16.msra.mxu0 %v2952
        %2971 = vmatprep.subr.bf16.mxu0 0
        %2972 = vmatpush1.bf16.msra.mxu0 %v2953
        %2973 = vmatprep.subr.bf16.mxu0 0
        %2974 = vmatpush1.bf16.msra.mxu0 %v2954
        %2975 = vmatprep.subr.bf16.mxu0 0
        %2976 = vmatpush1.bf16.msra.mxu0 %v2955
        %2977 = vmatprep.subr.bf16.mxu0 0
        %2978 = vmatpush1.bf16.msra.mxu0 %v2956
        %2979 = vmatprep.subr.bf16.mxu0 0
        %2980 = vmatpush1.bf16.msra.mxu0 %v2957
        %2981 = vmatprep.subr.bf16.mxu0 0
        %2982 = vmatpush1.bf16.msra.mxu0 %v2958
        %2983 = vmatprep.subr.bf16.mxu0 0
        %2984 = vmatpush1.bf16.msra.mxu0 0
        %2985 = vmatprep.subr.bf16.mxu0 0
        %2986 = vmatpush1.bf16.msra.mxu0 0
        %2987 = vmatprep.subr.bf16.mxu0 0
        %2988 = vmatpush1.bf16.msra.mxu0 0
        %2989 = vmatprep.subr.bf16.mxu0 0
        %2990 = vmatpush1.bf16.msra.mxu0 0
        %2991 = vmatprep.subr.bf16.mxu0 0
        %2992 = vmatpush1.bf16.msra.mxu0 0
        %2993 = vmatprep.subr.bf16.mxu0 0
        %2994 = vmatpush1.bf16.msra.mxu0 0
        %2995 = vmatprep.subr.bf16.mxu0 0
        %2996 = vmatpush1.bf16.msra.mxu0 0
        %2997 = vmatprep.subr.bf16.mxu0 0
        %2998 = vmatpush1.bf16.msra.mxu0 0
        %2999 = vmatprep.mubr.bf16.mxu0 0
        %3000 = vmatmul.mubr.bf16.gmra.mrb[0].mxu0 %v2895
        %v3001 = vpop.f32.mrb[0].mxu0
        %v3002 = vadd.f32 %v2917, %v3001
        %v3003 = vpop.f32.mrb[0].mxu0
        %v3004 = vpop.f32.mrb[0].mxu0
        %v3005 = vpop.f32.mrb[0].mxu0
        %3006 = vdwg.mxu0
        %3007 = vst [vmem:[%s627] sm:$0xff] %v3002
        %p3008 = scmp.lt.s32.totalorder %s31, 1
        %s3009 = scalar_select %p3008, %s31, 1
        %s3010 = smul.addr %s3009, 8
        %s3011 = scalar_lea.vmem %s15, %s3010
        // Predicated region
        $region117: #{transformer_forward.1} parent=79 // pred_check
          %p3012 = pneg %p374
        $region118: #{transformer_forward.1} parent=79 // pred_check_branch
          %3014 = sbr.rel (%p3012) target = $region120
        $region119: #{transformer_forward.1} parent=79 // pred_region
          _
        $region120: #{transformer_forward.1} parent=79 // pred_fallthru
          _
      $region80: #{transformer_forward.1} parent=5 // pred_fallthru
        _
      %p3015 = scmp.le.s32.totalorder 2, %s26
      // Predicated region
      $region121: #{transformer_forward.1} parent=5 // pred_check
        %p3016 = pneg %p3015
      $region122: #{transformer_forward.1} parent=5 // pred_check_branch
        %3018 = sbr.rel (%p3016) target = $region124
      $region123: #{transformer_forward.1} parent=5 // pred_region
        %s3019 = ssub.s32 %s26, 2
        // Predicated region
        $region125: #{transformer_forward.1} parent=123 // pred_check
          %p3020 = pneg %p380
        $region126: #{transformer_forward.1} parent=123 // pred_check_branch
          %3022 = sbr.rel (%p3020) target = $region128
        $region127: #{transformer_forward.1} parent=123 // pred_region
          %p3023 = scmp.lt.s32.totalorder %s32, 1
          %s3024 = scalar_select %p3023, %s32, 1
          %s3025 = smul.addr %s3024, 8
          %s3026 = scalar_lea.vmem %s15, %s3025
        $region128: #{transformer_forward.1} parent=123 // pred_fallthru
          _
      $region124: #{transformer_forward.1} parent=5 // pred_fallthru
        _
    $region6: #{transformer_forward.1} parent=1 // loop_footer
      %s30 = sadd.s32 1, %s26
    $region7: #{transformer_forward.1} parent=1 // loop_footer_branch
      %25 = sbr.rel target = $region3
    $region8: #{transformer_forward.1} parent=1 // loop_exit
      _
    %3027 = vsyncpa [#allocation3], 1
    %s3028 = scalar_lea.sflag [#allocation3], 1
    %3029 = vsyncpa %s3028, 1
    %3030 = vsyncpa [#allocation5], 1
    %3031 = vsyncpa [#allocation8], 1
    %3032 = vsyncpa [#allocation11], 1
    %3033 = vsyncpa [#allocation14], 1

</llo_original>
